<compile_context>
chip_gen: v7x
topology: tpu7x:2x2x1
jax: 0.10.0
libtpu: 0.0.40
codegen_flags: <defaults>
</compile_context>

<pallas_src>
import math
import numpy as np
import jax
import jax.numpy as jnp
from jax import lax
from jax.experimental import pallas as pl
from jax.experimental.pallas import tpu as pltpu

HID = 32      # hidden_size
FEAT = 5      # input_size (features per electrode)
FPAD = 8      # per-region feature slot (5 valid + 3 zero pad)
N_ELEC = 62   # electrode count
T_MAX = 6     # longest region (Fr1 / Fr2)
NBLK1 = 8     # first-layer packed blocks
NBLK2 = 4     # second-layer packed blocks
H1 = NBLK1 * HID   # 256
H2 = NBLK2 * HID   # 128

REGIONS = {
    'Fr1': [0, 3, 8, 7, 6, 5],
    'Fr2': [2, 4, 10, 11, 12, 13],
    'Tp1': [14, 23, 32, 41, 50],
    'Pr1': [42, 43, 44, 52, 51],
    'Pr2': [48, 47, 46, 54, 55],
    'Oc1': [58, 57],
    'Oc2': [60, 61],
}

# first-layer block order: the 4 "left" RNNs then the 4 "right" RNNs, so that
# (right - left) is a single lane-aligned 128-wide slice pair.
BLOCK_REGIONS = ['Fr1', 'Tp1', 'Pr1', 'Oc1', 'Fr2', 'Tp1', 'Pr2', 'Oc2']
# second-layer / FC block lengths (= region length of each left/right pair)
T_LEN2 = [6, 5, 5, 2]

# static gather table: electrode index + validity per (timestep, block)
ELEC_IDX = np.zeros((T_MAX, NBLK1), np.int32)
VALID = np.zeros((T_MAX, NBLK1), np.float32)
for _k, _r in enumerate(BLOCK_REGIONS):
    for _t, _e in enumerate(REGIONS[_r]):
        ELEC_IDX[_t, _k] = _e
        VALID[_t, _k] = 1.0

# 0/1 matrix replicating the 8 per-feature BN coefficients to the 8 packed blocks
REP = np.zeros((FPAD, NBLK1 * FPAD), np.float32)
for _k in range(NBLK1):
    for _f in range(FPAD):
        REP[_f, _k * FPAD + _f] = 1.0

VMEM_SPEC = pl.BlockSpec(memory_space=pltpu.MemorySpace.VMEM)


# ------------------------------ fused kernel ------------------------------

def _fused_kernel(xT_ref, packed_ref, rep_ref, wih1_ref, whh1L_ref, whh1R_ref,
                  b1_ref, wih2_ref, whh2_ref, b2_ref, wfc_ref, bfc_ref,
                  g1_ref, be1_ref, g2_ref, be2_ref, out_ref):
    T = wfc_ref.shape[0]              # 6
    Bp = packed_ref.shape[0] // T     # padded batch (multiple of 8)
    B = out_ref.shape[0]              # real batch

    # ---- BatchNorm2d(FEAT), training mode, lane-dense layout ----
    # xT: (8, B*62) -> features on sublanes, samples on lanes; reductions are a
    # cheap lane-axis reduce over ~2 vregs (was a lane-sparse axis=0 reduce).
    xT = xT_ref[...]
    mu1 = jnp.mean(xT, axis=1, keepdims=True)                        # (8, 1)
    cen = xT - mu1
    var1 = jnp.mean(cen * cen, axis=1, keepdims=True)                # biased var
    scale8 = g1_ref[...] * lax.rsqrt(var1 + 1e-5)                    # (8, 1)
    shift8 = be1_ref[...] - mu1 * scale8                             # (8, 1)
    # replicate the per-feature affine to the 8 packed region blocks: (8,1)->(1,64)
    scale = jnp.sum(rep_ref[...] * scale8, axis=0, keepdims=True)
    shift = jnp.sum(rep_ref[...] * shift8, axis=0, keepdims=True)

    # ---- hoisted layer-1 input projection (off the serial chain) ----
    u = packed_ref[...] * scale + shift                              # (T*Bp, 64)
    pre1 = jnp.dot(u, wih1_ref[...],
                   preferred_element_type=jnp.float32) + b1_ref[...]  # (T*Bp, 256)

    whh1L = whh1L_ref[...]            # (128, 128) left-block recurrence
    whh1R = whh1R_ref[...]            # (128, 128) right-block recurrence
    wih2 = wih2_ref[...]              # (128, 128)
    whh2 = whh2_ref[...]              # (128, 128)
    b2 = b2_ref[...]                  # (1, 128)

    h1L = jnp.zeros((Bp, H2), jnp.float32)
    h1R = jnp.zeros((Bp, H2), jnp.float32)
    h2 = jnp.zeros((Bp, H2), jnp.float32)
    feats = jnp.zeros((Bp, 64), jnp.float32) + bfc_ref[...]          # fused FC bias

    # One fused, fully-unrolled loop: two independent 128-wide layer-1 chains,
    # the per-step diff + layer-2 projection, the 128-wide layer-2 chain, and
    # the fused FC accumulation.  h2_t depends only on h1_t and h2_{t-1}, so
    # the dependency DAG is ~T+1 deep and h2_t overlaps with h1_{t+1}.
    for t in range(T):                                               # static unroll
        lo = t * Bp                                                  # static, 8-aligned
        hi = lo + Bp
        h1L = jnp.tanh(pre1[lo:hi, :H2]
                       + jnp.dot(h1L, whh1L, preferred_element_type=jnp.float32))
        h1R = jnp.tanh(pre1[lo:hi, H2:]
                       + jnp.dot(h1R, whh1R, preferred_element_type=jnp.float32))
        # (right - left) diff folded straight into the layer-2 projection
        pre2_t = jnp.dot(h1R - h1L, wih2, preferred_element_type=jnp.float32) + b2
        h2 = jnp.tanh(pre2_t + jnp.dot(h2, whh2, preferred_element_type=jnp.float32))
        # fused fc_f/fc_t/fc_p/fc_o contribution of timestep t (zero blocks mask
        # garbage hidden states of padded timesteps)
        feats = feats + jnp.dot(h2, wfc_ref[t], preferred_element_type=jnp.float32)

    feats = jnp.maximum(feats, 0.0)                                  # the four ReLUs

    # ---- BatchNorm1d(64), training mode, over the real batch rows only ----
    fv = feats[:B]
    mu2 = jnp.mean(fv, axis=0, keepdims=True)
    c2 = fv - mu2
    var2 = jnp.mean(c2 * c2, axis=0, keepdims=True)
    out_ref[...] = c2 * lax.rsqrt(var2 + 1e-5) * g2_ref[...] + be2_ref[...]


# ------------------------------ parameters ------------------------------

def init_params(key):
    """Deterministic synthetic init (PyTorch-style U(-1/sqrt(fan), 1/sqrt(fan)) bounds)."""
    keys = iter(jax.random.split(key, 64))

    def u(shape, bound):
        return jax.random.uniform(next(keys), shape, jnp.float32, -bound, bound)

    rb = 1.0 / math.sqrt(HID)

    def rnn_p(in_size):
        return dict(
            w_ih=u((in_size, HID), rb),
            w_hh=u((HID, HID), rb),
            b=u((1, HID), rb) + u((1, HID), rb),   # b_ih + b_hh combined
        )

    def fc_p(in_size, out_size=16):
        fb = 1.0 / math.sqrt(in_size)
        return dict(w=u((in_size, out_size), fb), b=u((1, out_size), fb))

    return dict(
        fL=rnn_p(FEAT), fR=rnn_p(FEAT),
        tL=rnn_p(FEAT), tR=rnn_p(FEAT),
        oL=rnn_p(FEAT), oR=rnn_p(FEAT),
        f2=rnn_p(HID), p2=rnn_p(HID), o2=rnn_p(HID),
        fc_f=fc_p(6 * HID), fc_t=fc_p(5 * HID),
        fc_p=fc_p(5 * HID), fc_o=fc_p(2 * HID),
        bn1_g=jnp.ones((FEAT,), jnp.float32), bn1_b=jnp.zeros((FEAT,), jnp.float32),
        bn2_g=jnp.ones((64,), jnp.float32), bn2_b=jnp.zeros((64,), jnp.float32),
    )


def pack_params(p):
    """Build the block-diagonal packed weights once (identical math to per-RNN form)."""
    def block_diag(blocks, bs_in, bs_out):
        n = len(blocks)
        W = jnp.zeros((n * bs_in, n * bs_out), jnp.float32)
        for k, w in enumerate(blocks):
            W = W.at[k * bs_in:k * bs_in + w.shape[0],
                     k * bs_out:k * bs_out + w.shape[1]].set(w)
        return W

    # layer-1 blocks (quirk: RNN_tL / RNN_tR also drive the parietal slices)
    l1 = [p['fL'], p['tL'], p['tL'], p['oL'], p['fR'], p['tR'], p['tR'], p['oR']]
    wih1 = block_diag([q['w_ih'] for q in l1], FPAD, HID)      # (64, 256)
    # split recurrence: left blocks (cols 0..127) and right blocks (cols 128..255)
    whh1L = block_diag([q['w_hh'] for q in l1[:4]], HID, HID)  # (128, 128)
    whh1R = block_diag([q['w_hh'] for q in l1[4:]], HID, HID)  # (128, 128)
    b1 = jnp.concatenate([q['b'] for q in l1], axis=1)         # (1, 256)

    # layer-2 blocks (quirk: RNN_f reused for the temporal path)
    l2 = [p['f2'], p['f2'], p['p2'], p['o2']]
    wih2 = block_diag([q['w_ih'] for q in l2], HID, HID)       # (128, 128)
    whh2 = block_diag([q['w_hh'] for q in l2], HID, HID)       # (128, 128)
    b2 = jnp.concatenate([q['b'] for q in l2], axis=1)         # (1, 128)

    # fused per-timestep FC weight; zero blocks for t >= region length
    fcs = [p['fc_f'], p['fc_t'], p['fc_p'], p['fc_o']]
    wfc = jnp.zeros((T_MAX, H2, 64), jnp.float32)
    for j, (fc, tl) in enumerate(zip(fcs, T_LEN2)):
        for t in range(tl):
            wfc = wfc.at[t, j * HID:(j + 1) * HID, j * 16:(j + 1) * 16].set(
                fc['w'][t * HID:(t + 1) * HID, :])
    bfc = jnp.concatenate([fc['b'] for fc in fcs], axis=1)     # (1, 64)

    return dict(
        wih1=wih1, whh1L=whh1L, whh1R=whh1R, b1=b1,
        wih2=wih2, whh2=whh2, b2=b2,
        wfc=wfc, bfc=bfc, rep=jnp.asarray(REP),
        g1=jnp.pad(p['bn1_g'], (0, FPAD - FEAT)).reshape(FPAD, 1),
        be1=jnp.pad(p['bn1_b'], (0, FPAD - FEAT)).reshape(FPAD, 1),
        g2=p['bn2_g'].reshape(1, 64), be2=p['bn2_b'].reshape(1, 64),
    )


# ------------------------------ forward ------------------------------

def frontal_rnn_forward(x, pk):
    """x: (B, 62, 5) float32 -> (B, 64) float32, matching FrontalRnn.forward (train-mode BN)."""
    B = x.shape[0]
    Bp = max(((B + 7) // 8) * 8, 8)  # pad batch to whole sublane tiles

    # lane-dense BatchNorm2d stats input: (8 feats on sublanes, B*62 samples on lanes)
    xT = jnp.transpose(x, (2, 0, 1)).reshape(FEAT, B * N_ELEC)
    xT = jnp.pad(xT, ((0, FPAD - FEAT), (0, 0)))

    # one static gather packs all 8 region slices into (T*Bp, 8 blocks * 8 feats);
    # padded timesteps / features / batch rows are zero (harmless: their hidden
    # states are block-isolated and masked out by zero FC weight blocks).
    g = x[:, ELEC_IDX, :] * VALID[None, :, :, None]          # (B, T, 8, 5)
    g = jnp.pad(g, ((0, Bp - B), (0, 0), (0, 0), (0, FPAD - FEAT)))
    packed = jnp.transpose(g, (1, 0, 2, 3)).reshape(T_MAX * Bp, NBLK1 * FPAD)

    # Single fused kernel: no grid, everything VMEM-resident (<0.5 MiB at B=4).
    # At large batches, raise vmem_limit_bytes and (on v7x) add a batch grid
    # axis with core-parallel semantics; irrelevant at this footprint.
    return pl.pallas_call(
        _fused_kernel,
        out_shape=jax.ShapeDtypeStruct((B, 64), jnp.float32),
        in_specs=[VMEM_SPEC] * 16,
        out_specs=VMEM_SPEC,
    )(xT, packed, pk['rep'], pk['wih1'], pk['whh1L'], pk['whh1R'], pk['b1'],
      pk['wih2'], pk['whh2'], pk['b2'], pk['wfc'], pk['bfc'],
      pk['g1'], pk['be1'], pk['g2'], pk['be2'])


if __name__ == "__main__":
    key = jax.random.PRNGKey(0)
    kp, kx = jax.random.split(key)
    params = init_params(kp)
    packed_params = pack_params(params)

    B = 4
    x = jax.random.normal(kx, (B, N_ELEC, FEAT), jnp.float32)

    out = jax.jit(frontal_rnn_forward)(x, packed_params)
    out = jax.block_until_ready(out)
    assert out.shape == (B, 64) and out.dtype == jnp.float32
    assert bool(jnp.all(jnp.isfinite(out)))
    print("KERNEL_OK")
</pallas_src>

<mosaic_0001>
module attributes {stable_mosaic.version = 11 : i64} {
  func.func @_fused_kernel(%arg0: memref<8x248xf32, #tpu.memory_space<vmem>>, %arg1: memref<48x64xf32, #tpu.memory_space<vmem>>, %arg2: memref<8x64xf32, #tpu.memory_space<vmem>>, %arg3: memref<64x256xf32, #tpu.memory_space<vmem>>, %arg4: memref<128x128xf32, #tpu.memory_space<vmem>>, %arg5: memref<128x128xf32, #tpu.memory_space<vmem>>, %arg6: memref<1x256xf32, #tpu.memory_space<vmem>>, %arg7: memref<128x128xf32, #tpu.memory_space<vmem>>, %arg8: memref<128x128xf32, #tpu.memory_space<vmem>>, %arg9: memref<1x128xf32, #tpu.memory_space<vmem>>, %arg10: memref<6x128x64xf32, #tpu.memory_space<vmem>>, %arg11: memref<1x64xf32, #tpu.memory_space<vmem>>, %arg12: memref<8x1xf32, #tpu.memory_space<vmem>>, %arg13: memref<8x1xf32, #tpu.memory_space<vmem>>, %arg14: memref<1x64xf32, #tpu.memory_space<vmem>>, %arg15: memref<1x64xf32, #tpu.memory_space<vmem>>, %arg16: memref<4x64xf32, #tpu.memory_space<vmem>>) attributes {dimension_semantics = [], scalar_prefetch = 0 : i64, scratch_operands = 0 : i64, tpu.core_type = #tpu.core_type<tc>} {
    %c0 = arith.constant 0 : index
    %c0_0 = arith.constant 0 : index
    %0 = vector.load %arg0[%c0, %c0_0] : memref<8x248xf32, #tpu.memory_space<vmem>>, vector<8x248xf32>
    %cst = arith.constant dense<0.000000e+00> : vector<8xf32>
    %1 = vector.multi_reduction <add>, %0, %cst [1] : vector<8x248xf32> to vector<8xf32>
    %2 = vector.shape_cast %1 : vector<8xf32> to vector<8x1xf32>
    %cst_1 = arith.constant 2.480000e+02 : f32
    %3 = vector.broadcast %cst_1 : f32 to vector<8x1xf32>
    %4 = arith.divf %2, %3 : vector<8x1xf32>
    %5 = vector.broadcast %4 : vector<8x1xf32> to vector<8x248xf32>
    %6 = arith.subf %0, %5 : vector<8x248xf32>
    %7 = arith.mulf %6, %6 : vector<8x248xf32>
    %cst_2 = arith.constant dense<0.000000e+00> : vector<8xf32>
    %8 = vector.multi_reduction <add>, %7, %cst_2 [1] : vector<8x248xf32> to vector<8xf32>
    %9 = vector.shape_cast %8 : vector<8xf32> to vector<8x1xf32>
    %cst_3 = arith.constant 2.480000e+02 : f32
    %10 = vector.broadcast %cst_3 : f32 to vector<8x1xf32>
    %11 = arith.divf %9, %10 : vector<8x1xf32>
    %c0_4 = arith.constant 0 : index
    %c0_5 = arith.constant 0 : index
    %12 = vector.load %arg12[%c0_4, %c0_5] : memref<8x1xf32, #tpu.memory_space<vmem>>, vector<8x1xf32>
    %cst_6 = arith.constant 9.99999974E-6 : f32
    %13 = vector.broadcast %cst_6 : f32 to vector<8x1xf32>
    %14 = arith.addf %11, %13 : vector<8x1xf32>
    %15 = math.rsqrt %14 : vector<8x1xf32>
    %16 = arith.mulf %12, %15 : vector<8x1xf32>
    %c0_7 = arith.constant 0 : index
    %c0_8 = arith.constant 0 : index
    %17 = vector.load %arg13[%c0_7, %c0_8] : memref<8x1xf32, #tpu.memory_space<vmem>>, vector<8x1xf32>
    %18 = arith.mulf %4, %16 : vector<8x1xf32>
    %19 = arith.subf %17, %18 : vector<8x1xf32>
    %c0_9 = arith.constant 0 : index
    %c0_10 = arith.constant 0 : index
    %20 = vector.load %arg2[%c0_9, %c0_10] : memref<8x64xf32, #tpu.memory_space<vmem>>, vector<8x64xf32>
    %21 = vector.broadcast %16 : vector<8x1xf32> to vector<8x64xf32>
    %22 = arith.mulf %20, %21 : vector<8x64xf32>
    %cst_11 = arith.constant dense<0.000000e+00> : vector<64xf32>
    %23 = vector.multi_reduction <add>, %22, %cst_11 [0] : vector<8x64xf32> to vector<64xf32>
    %24 = vector.shape_cast %23 : vector<64xf32> to vector<1x64xf32>
    %c0_12 = arith.constant 0 : index
    %c0_13 = arith.constant 0 : index
    %25 = vector.load %arg2[%c0_12, %c0_13] : memref<8x64xf32, #tpu.memory_space<vmem>>, vector<8x64xf32>
    %26 = vector.broadcast %19 : vector<8x1xf32> to vector<8x64xf32>
    %27 = arith.mulf %25, %26 : vector<8x64xf32>
    %cst_14 = arith.constant dense<0.000000e+00> : vector<64xf32>
    %28 = vector.multi_reduction <add>, %27, %cst_14 [0] : vector<8x64xf32> to vector<64xf32>
    %29 = vector.shape_cast %28 : vector<64xf32> to vector<1x64xf32>
    %c0_15 = arith.constant 0 : index
    %c0_16 = arith.constant 0 : index
    %30 = vector.load %arg1[%c0_15, %c0_16] : memref<48x64xf32, #tpu.memory_space<vmem>>, vector<48x64xf32>
    %31 = vector.broadcast %24 : vector<1x64xf32> to vector<48x64xf32>
    %32 = arith.mulf %30, %31 : vector<48x64xf32>
    %33 = vector.broadcast %29 : vector<1x64xf32> to vector<48x64xf32>
    %34 = arith.addf %32, %33 : vector<48x64xf32>
    %c0_17 = arith.constant 0 : index
    %c0_18 = arith.constant 0 : index
    %35 = vector.load %arg3[%c0_17, %c0_18] : memref<64x256xf32, #tpu.memory_space<vmem>>, vector<64x256xf32>
    %cst_19 = arith.constant dense<0.000000e+00> : vector<48x256xf32>
    %36 = tpu.matmul %34, %35, %cst_19 {dimension_numbers = #tpu.dot_dimension_numbers<[1], [0], [0], [1], [0, 0, 1, 1], [], []>} : vector<48x64xf32>, vector<64x256xf32>, vector<48x256xf32> -> vector<48x256xf32>
    %c0_20 = arith.constant 0 : index
    %c0_21 = arith.constant 0 : index
    %37 = vector.load %arg6[%c0_20, %c0_21] : memref<1x256xf32, #tpu.memory_space<vmem>>, vector<1x256xf32>
    %38 = vector.broadcast %37 : vector<1x256xf32> to vector<48x256xf32>
    %39 = arith.addf %36, %38 : vector<48x256xf32>
    %c0_22 = arith.constant 0 : index
    %c0_23 = arith.constant 0 : index
    %40 = vector.load %arg4[%c0_22, %c0_23] : memref<128x128xf32, #tpu.memory_space<vmem>>, vector<128x128xf32>
    %c0_24 = arith.constant 0 : index
    %c0_25 = arith.constant 0 : index
    %41 = vector.load %arg5[%c0_24, %c0_25] : memref<128x128xf32, #tpu.memory_space<vmem>>, vector<128x128xf32>
    %c0_26 = arith.constant 0 : index
    %c0_27 = arith.constant 0 : index
    %42 = vector.load %arg7[%c0_26, %c0_27] : memref<128x128xf32, #tpu.memory_space<vmem>>, vector<128x128xf32>
    %c0_28 = arith.constant 0 : index
    %c0_29 = arith.constant 0 : index
    %43 = vector.load %arg8[%c0_28, %c0_29] : memref<128x128xf32, #tpu.memory_space<vmem>>, vector<128x128xf32>
    %c0_30 = arith.constant 0 : index
    %c0_31 = arith.constant 0 : index
    %44 = vector.load %arg9[%c0_30, %c0_31] : memref<1x128xf32, #tpu.memory_space<vmem>>, vector<1x128xf32>
    %cst_32 = arith.constant 0.000000e+00 : f32
    %45 = vector.broadcast %cst_32 : f32 to vector<8x128xf32>
    %cst_33 = arith.constant 0.000000e+00 : f32
    %46 = vector.broadcast %cst_33 : f32 to vector<8x128xf32>
    %cst_34 = arith.constant 0.000000e+00 : f32
    %47 = vector.broadcast %cst_34 : f32 to vector<8x128xf32>
    %cst_35 = arith.constant 0.000000e+00 : f32
    %48 = vector.broadcast %cst_35 : f32 to vector<8x64xf32>
    %c0_36 = arith.constant 0 : index
    %c0_37 = arith.constant 0 : index
    %49 = vector.load %arg11[%c0_36, %c0_37] : memref<1x64xf32, #tpu.memory_space<vmem>>, vector<1x64xf32>
    %50 = vector.broadcast %49 : vector<1x64xf32> to vector<8x64xf32>
    %51 = arith.addf %48, %50 : vector<8x64xf32>
    %52 = vector.extract_strided_slice %39 {offsets = [0, 0], sizes = [8, 128], strides = [1, 1]} : vector<48x256xf32> to vector<8x128xf32>
    %cst_38 = arith.constant dense<0.000000e+00> : vector<8x128xf32>
    %53 = tpu.matmul %45, %40, %cst_38 {dimension_numbers = #tpu.dot_dimension_numbers<[1], [0], [0], [1], [0, 0, 1, 1], [], []>} : vector<8x128xf32>, vector<128x128xf32>, vector<8x128xf32> -> vector<8x128xf32>
    %54 = arith.addf %52, %53 : vector<8x128xf32>
    %55 = math.tanh %54 : vector<8x128xf32>
    %56 = vector.extract_strided_slice %39 {offsets = [0, 128], sizes = [8, 128], strides = [1, 1]} : vector<48x256xf32> to vector<8x128xf32>
    %cst_39 = arith.constant dense<0.000000e+00> : vector<8x128xf32>
    %57 = tpu.matmul %46, %41, %cst_39 {dimension_numbers = #tpu.dot_dimension_numbers<[1], [0], [0], [1], [0, 0, 1, 1], [], []>} : vector<8x128xf32>, vector<128x128xf32>, vector<8x128xf32> -> vector<8x128xf32>
    %58 = arith.addf %56, %57 : vector<8x128xf32>
    %59 = math.tanh %58 : vector<8x128xf32>
    %60 = arith.subf %59, %55 : vector<8x128xf32>
    %cst_40 = arith.constant dense<0.000000e+00> : vector<8x128xf32>
    %61 = tpu.matmul %60, %42, %cst_40 {dimension_numbers = #tpu.dot_dimension_numbers<[1], [0], [0], [1], [0, 0, 1, 1], [], []>} : vector<8x128xf32>, vector<128x128xf32>, vector<8x128xf32> -> vector<8x128xf32>
    %62 = vector.broadcast %44 : vector<1x128xf32> to vector<8x128xf32>
    %63 = arith.addf %61, %62 : vector<8x128xf32>
    %cst_41 = arith.constant dense<0.000000e+00> : vector<8x128xf32>
    %64 = tpu.matmul %47, %43, %cst_41 {dimension_numbers = #tpu.dot_dimension_numbers<[1], [0], [0], [1], [0, 0, 1, 1], [], []>} : vector<8x128xf32>, vector<128x128xf32>, vector<8x128xf32> -> vector<8x128xf32>
    %65 = arith.addf %63, %64 : vector<8x128xf32>
    %66 = math.tanh %65 : vector<8x128xf32>
    %c0_42 = arith.constant 0 : index
    %c0_43 = arith.constant 0 : index
    %c0_44 = arith.constant 0 : index
    %67 = vector.load %arg10[%c0_42, %c0_43, %c0_44] : memref<6x128x64xf32, #tpu.memory_space<vmem>>, vector<1x128x64xf32>
    %68 = vector.shape_cast %67 : vector<1x128x64xf32> to vector<128x64xf32>
    %cst_45 = arith.constant dense<0.000000e+00> : vector<8x64xf32>
    %69 = tpu.matmul %66, %68, %cst_45 {dimension_numbers = #tpu.dot_dimension_numbers<[1], [0], [0], [1], [0, 0, 1, 1], [], []>} : vector<8x128xf32>, vector<128x64xf32>, vector<8x64xf32> -> vector<8x64xf32>
    %70 = arith.addf %51, %69 : vector<8x64xf32>
    %71 = vector.extract_strided_slice %39 {offsets = [8, 0], sizes = [8, 128], strides = [1, 1]} : vector<48x256xf32> to vector<8x128xf32>
    %cst_46 = arith.constant dense<0.000000e+00> : vector<8x128xf32>
    %72 = tpu.matmul %55, %40, %cst_46 {dimension_numbers = #tpu.dot_dimension_numbers<[1], [0], [0], [1], [0, 0, 1, 1], [], []>} : vector<8x128xf32>, vector<128x128xf32>, vector<8x128xf32> -> vector<8x128xf32>
    %73 = arith.addf %71, %72 : vector<8x128xf32>
    %74 = math.tanh %73 : vector<8x128xf32>
    %75 = vector.extract_strided_slice %39 {offsets = [8, 128], sizes = [8, 128], strides = [1, 1]} : vector<48x256xf32> to vector<8x128xf32>
    %cst_47 = arith.constant dense<0.000000e+00> : vector<8x128xf32>
    %76 = tpu.matmul %59, %41, %cst_47 {dimension_numbers = #tpu.dot_dimension_numbers<[1], [0], [0], [1], [0, 0, 1, 1], [], []>} : vector<8x128xf32>, vector<128x128xf32>, vector<8x128xf32> -> vector<8x128xf32>
    %77 = arith.addf %75, %76 : vector<8x128xf32>
    %78 = math.tanh %77 : vector<8x128xf32>
    %79 = arith.subf %78, %74 : vector<8x128xf32>
    %cst_48 = arith.constant dense<0.000000e+00> : vector<8x128xf32>
    %80 = tpu.matmul %79, %42, %cst_48 {dimension_numbers = #tpu.dot_dimension_numbers<[1], [0], [0], [1], [0, 0, 1, 1], [], []>} : vector<8x128xf32>, vector<128x128xf32>, vector<8x128xf32> -> vector<8x128xf32>
    %81 = vector.broadcast %44 : vector<1x128xf32> to vector<8x128xf32>
    %82 = arith.addf %80, %81 : vector<8x128xf32>
    %cst_49 = arith.constant dense<0.000000e+00> : vector<8x128xf32>
    %83 = tpu.matmul %66, %43, %cst_49 {dimension_numbers = #tpu.dot_dimension_numbers<[1], [0], [0], [1], [0, 0, 1, 1], [], []>} : vector<8x128xf32>, vector<128x128xf32>, vector<8x128xf32> -> vector<8x128xf32>
    %84 = arith.addf %82, %83 : vector<8x128xf32>
    %85 = math.tanh %84 : vector<8x128xf32>
    %c1 = arith.constant 1 : index
    %c0_50 = arith.constant 0 : index
    %c0_51 = arith.constant 0 : index
    %86 = vector.load %arg10[%c1, %c0_50, %c0_51] : memref<6x128x64xf32, #tpu.memory_space<vmem>>, vector<1x128x64xf32>
    %87 = vector.shape_cast %86 : vector<1x128x64xf32> to vector<128x64xf32>
    %cst_52 = arith.constant dense<0.000000e+00> : vector<8x64xf32>
    %88 = tpu.matmul %85, %87, %cst_52 {dimension_numbers = #tpu.dot_dimension_numbers<[1], [0], [0], [1], [0, 0, 1, 1], [], []>} : vector<8x128xf32>, vector<128x64xf32>, vector<8x64xf32> -> vector<8x64xf32>
    %89 = arith.addf %70, %88 : vector<8x64xf32>
    %90 = vector.extract_strided_slice %39 {offsets = [16, 0], sizes = [8, 128], strides = [1, 1]} : vector<48x256xf32> to vector<8x128xf32>
    %cst_53 = arith.constant dense<0.000000e+00> : vector<8x128xf32>
    %91 = tpu.matmul %74, %40, %cst_53 {dimension_numbers = #tpu.dot_dimension_numbers<[1], [0], [0], [1], [0, 0, 1, 1], [], []>} : vector<8x128xf32>, vector<128x128xf32>, vector<8x128xf32> -> vector<8x128xf32>
    %92 = arith.addf %90, %91 : vector<8x128xf32>
    %93 = math.tanh %92 : vector<8x128xf32>
    %94 = vector.extract_strided_slice %39 {offsets = [16, 128], sizes = [8, 128], strides = [1, 1]} : vector<48x256xf32> to vector<8x128xf32>
    %cst_54 = arith.constant dense<0.000000e+00> : vector<8x128xf32>
    %95 = tpu.matmul %78, %41, %cst_54 {dimension_numbers = #tpu.dot_dimension_numbers<[1], [0], [0], [1], [0, 0, 1, 1], [], []>} : vector<8x128xf32>, vector<128x128xf32>, vector<8x128xf32> -> vector<8x128xf32>
    %96 = arith.addf %94, %95 : vector<8x128xf32>
    %97 = math.tanh %96 : vector<8x128xf32>
    %98 = arith.subf %97, %93 : vector<8x128xf32>
    %cst_55 = arith.constant dense<0.000000e+00> : vector<8x128xf32>
    %99 = tpu.matmul %98, %42, %cst_55 {dimension_numbers = #tpu.dot_dimension_numbers<[1], [0], [0], [1], [0, 0, 1, 1], [], []>} : vector<8x128xf32>, vector<128x128xf32>, vector<8x128xf32> -> vector<8x128xf32>
    %100 = vector.broadcast %44 : vector<1x128xf32> to vector<8x128xf32>
    %101 = arith.addf %99, %100 : vector<8x128xf32>
    %cst_56 = arith.constant dense<0.000000e+00> : vector<8x128xf32>
    %102 = tpu.matmul %85, %43, %cst_56 {dimension_numbers = #tpu.dot_dimension_numbers<[1], [0], [0], [1], [0, 0, 1, 1], [], []>} : vector<8x128xf32>, vector<128x128xf32>, vector<8x128xf32> -> vector<8x128xf32>
    %103 = arith.addf %101, %102 : vector<8x128xf32>
    %104 = math.tanh %103 : vector<8x128xf32>
    %c2 = arith.constant 2 : index
    %c0_57 = arith.constant 0 : index
    %c0_58 = arith.constant 0 : index
    %105 = vector.load %arg10[%c2, %c0_57, %c0_58] : memref<6x128x64xf32, #tpu.memory_space<vmem>>, vector<1x128x64xf32>
    %106 = vector.shape_cast %105 : vector<1x128x64xf32> to vector<128x64xf32>
    %cst_59 = arith.constant dense<0.000000e+00> : vector<8x64xf32>
    %107 = tpu.matmul %104, %106, %cst_59 {dimension_numbers = #tpu.dot_dimension_numbers<[1], [0], [0], [1], [0, 0, 1, 1], [], []>} : vector<8x128xf32>, vector<128x64xf32>, vector<8x64xf32> -> vector<8x64xf32>
    %108 = arith.addf %89, %107 : vector<8x64xf32>
    %109 = vector.extract_strided_slice %39 {offsets = [24, 0], sizes = [8, 128], strides = [1, 1]} : vector<48x256xf32> to vector<8x128xf32>
    %cst_60 = arith.constant dense<0.000000e+00> : vector<8x128xf32>
    %110 = tpu.matmul %93, %40, %cst_60 {dimension_numbers = #tpu.dot_dimension_numbers<[1], [0], [0], [1], [0, 0, 1, 1], [], []>} : vector<8x128xf32>, vector<128x128xf32>, vector<8x128xf32> -> vector<8x128xf32>
    %111 = arith.addf %109, %110 : vector<8x128xf32>
    %112 = math.tanh %111 : vector<8x128xf32>
    %113 = vector.extract_strided_slice %39 {offsets = [24, 128], sizes = [8, 128], strides = [1, 1]} : vector<48x256xf32> to vector<8x128xf32>
    %cst_61 = arith.constant dense<0.000000e+00> : vector<8x128xf32>
    %114 = tpu.matmul %97, %41, %cst_61 {dimension_numbers = #tpu.dot_dimension_numbers<[1], [0], [0], [1], [0, 0, 1, 1], [], []>} : vector<8x128xf32>, vector<128x128xf32>, vector<8x128xf32> -> vector<8x128xf32>
    %115 = arith.addf %113, %114 : vector<8x128xf32>
    %116 = math.tanh %115 : vector<8x128xf32>
    %117 = arith.subf %116, %112 : vector<8x128xf32>
    %cst_62 = arith.constant dense<0.000000e+00> : vector<8x128xf32>
    %118 = tpu.matmul %117, %42, %cst_62 {dimension_numbers = #tpu.dot_dimension_numbers<[1], [0], [0], [1], [0, 0, 1, 1], [], []>} : vector<8x128xf32>, vector<128x128xf32>, vector<8x128xf32> -> vector<8x128xf32>
    %119 = vector.broadcast %44 : vector<1x128xf32> to vector<8x128xf32>
    %120 = arith.addf %118, %119 : vector<8x128xf32>
    %cst_63 = arith.constant dense<0.000000e+00> : vector<8x128xf32>
    %121 = tpu.matmul %104, %43, %cst_63 {dimension_numbers = #tpu.dot_dimension_numbers<[1], [0], [0], [1], [0, 0, 1, 1], [], []>} : vector<8x128xf32>, vector<128x128xf32>, vector<8x128xf32> -> vector<8x128xf32>
    %122 = arith.addf %120, %121 : vector<8x128xf32>
    %123 = math.tanh %122 : vector<8x128xf32>
    %c3 = arith.constant 3 : index
    %c0_64 = arith.constant 0 : index
    %c0_65 = arith.constant 0 : index
    %124 = vector.load %arg10[%c3, %c0_64, %c0_65] : memref<6x128x64xf32, #tpu.memory_space<vmem>>, vector<1x128x64xf32>
    %125 = vector.shape_cast %124 : vector<1x128x64xf32> to vector<128x64xf32>
    %cst_66 = arith.constant dense<0.000000e+00> : vector<8x64xf32>
    %126 = tpu.matmul %123, %125, %cst_66 {dimension_numbers = #tpu.dot_dimension_numbers<[1], [0], [0], [1], [0, 0, 1, 1], [], []>} : vector<8x128xf32>, vector<128x64xf32>, vector<8x64xf32> -> vector<8x64xf32>
    %127 = arith.addf %108, %126 : vector<8x64xf32>
    %128 = vector.extract_strided_slice %39 {offsets = [32, 0], sizes = [8, 128], strides = [1, 1]} : vector<48x256xf32> to vector<8x128xf32>
    %cst_67 = arith.constant dense<0.000000e+00> : vector<8x128xf32>
    %129 = tpu.matmul %112, %40, %cst_67 {dimension_numbers = #tpu.dot_dimension_numbers<[1], [0], [0], [1], [0, 0, 1, 1], [], []>} : vector<8x128xf32>, vector<128x128xf32>, vector<8x128xf32> -> vector<8x128xf32>
    %130 = arith.addf %128, %129 : vector<8x128xf32>
    %131 = math.tanh %130 : vector<8x128xf32>
    %132 = vector.extract_strided_slice %39 {offsets = [32, 128], sizes = [8, 128], strides = [1, 1]} : vector<48x256xf32> to vector<8x128xf32>
    %cst_68 = arith.constant dense<0.000000e+00> : vector<8x128xf32>
    %133 = tpu.matmul %116, %41, %cst_68 {dimension_numbers = #tpu.dot_dimension_numbers<[1], [0], [0], [1], [0, 0, 1, 1], [], []>} : vector<8x128xf32>, vector<128x128xf32>, vector<8x128xf32> -> vector<8x128xf32>
    %134 = arith.addf %132, %133 : vector<8x128xf32>
    %135 = math.tanh %134 : vector<8x128xf32>
    %136 = arith.subf %135, %131 : vector<8x128xf32>
    %cst_69 = arith.constant dense<0.000000e+00> : vector<8x128xf32>
    %137 = tpu.matmul %136, %42, %cst_69 {dimension_numbers = #tpu.dot_dimension_numbers<[1], [0], [0], [1], [0, 0, 1, 1], [], []>} : vector<8x128xf32>, vector<128x128xf32>, vector<8x128xf32> -> vector<8x128xf32>
    %138 = vector.broadcast %44 : vector<1x128xf32> to vector<8x128xf32>
    %139 = arith.addf %137, %138 : vector<8x128xf32>
    %cst_70 = arith.constant dense<0.000000e+00> : vector<8x128xf32>
    %140 = tpu.matmul %123, %43, %cst_70 {dimension_numbers = #tpu.dot_dimension_numbers<[1], [0], [0], [1], [0, 0, 1, 1], [], []>} : vector<8x128xf32>, vector<128x128xf32>, vector<8x128xf32> -> vector<8x128xf32>
    %141 = arith.addf %139, %140 : vector<8x128xf32>
    %142 = math.tanh %141 : vector<8x128xf32>
    %c4 = arith.constant 4 : index
    %c0_71 = arith.constant 0 : index
    %c0_72 = arith.constant 0 : index
    %143 = vector.load %arg10[%c4, %c0_71, %c0_72] : memref<6x128x64xf32, #tpu.memory_space<vmem>>, vector<1x128x64xf32>
    %144 = vector.shape_cast %143 : vector<1x128x64xf32> to vector<128x64xf32>
    %cst_73 = arith.constant dense<0.000000e+00> : vector<8x64xf32>
    %145 = tpu.matmul %142, %144, %cst_73 {dimension_numbers = #tpu.dot_dimension_numbers<[1], [0], [0], [1], [0, 0, 1, 1], [], []>} : vector<8x128xf32>, vector<128x64xf32>, vector<8x64xf32> -> vector<8x64xf32>
    %146 = arith.addf %127, %145 : vector<8x64xf32>
    %147 = vector.extract_strided_slice %39 {offsets = [40, 0], sizes = [8, 128], strides = [1, 1]} : vector<48x256xf32> to vector<8x128xf32>
    %cst_74 = arith.constant dense<0.000000e+00> : vector<8x128xf32>
    %148 = tpu.matmul %131, %40, %cst_74 {dimension_numbers = #tpu.dot_dimension_numbers<[1], [0], [0], [1], [0, 0, 1, 1], [], []>} : vector<8x128xf32>, vector<128x128xf32>, vector<8x128xf32> -> vector<8x128xf32>
    %149 = arith.addf %147, %148 : vector<8x128xf32>
    %150 = math.tanh %149 : vector<8x128xf32>
    %151 = vector.extract_strided_slice %39 {offsets = [40, 128], sizes = [8, 128], strides = [1, 1]} : vector<48x256xf32> to vector<8x128xf32>
    %cst_75 = arith.constant dense<0.000000e+00> : vector<8x128xf32>
    %152 = tpu.matmul %135, %41, %cst_75 {dimension_numbers = #tpu.dot_dimension_numbers<[1], [0], [0], [1], [0, 0, 1, 1], [], []>} : vector<8x128xf32>, vector<128x128xf32>, vector<8x128xf32> -> vector<8x128xf32>
    %153 = arith.addf %151, %152 : vector<8x128xf32>
    %154 = math.tanh %153 : vector<8x128xf32>
    %155 = arith.subf %154, %150 : vector<8x128xf32>
    %cst_76 = arith.constant dense<0.000000e+00> : vector<8x128xf32>
    %156 = tpu.matmul %155, %42, %cst_76 {dimension_numbers = #tpu.dot_dimension_numbers<[1], [0], [0], [1], [0, 0, 1, 1], [], []>} : vector<8x128xf32>, vector<128x128xf32>, vector<8x128xf32> -> vector<8x128xf32>
    %157 = vector.broadcast %44 : vector<1x128xf32> to vector<8x128xf32>
    %158 = arith.addf %156, %157 : vector<8x128xf32>
    %cst_77 = arith.constant dense<0.000000e+00> : vector<8x128xf32>
    %159 = tpu.matmul %142, %43, %cst_77 {dimension_numbers = #tpu.dot_dimension_numbers<[1], [0], [0], [1], [0, 0, 1, 1], [], []>} : vector<8x128xf32>, vector<128x128xf32>, vector<8x128xf32> -> vector<8x128xf32>
    %160 = arith.addf %158, %159 : vector<8x128xf32>
    %161 = math.tanh %160 : vector<8x128xf32>
    %c5 = arith.constant 5 : index
    %c0_78 = arith.constant 0 : index
    %c0_79 = arith.constant 0 : index
    %162 = vector.load %arg10[%c5, %c0_78, %c0_79] : memref<6x128x64xf32, #tpu.memory_space<vmem>>, vector<1x128x64xf32>
    %163 = vector.shape_cast %162 : vector<1x128x64xf32> to vector<128x64xf32>
    %cst_80 = arith.constant dense<0.000000e+00> : vector<8x64xf32>
    %164 = tpu.matmul %161, %163, %cst_80 {dimension_numbers = #tpu.dot_dimension_numbers<[1], [0], [0], [1], [0, 0, 1, 1], [], []>} : vector<8x128xf32>, vector<128x64xf32>, vector<8x64xf32> -> vector<8x64xf32>
    %165 = arith.addf %146, %164 : vector<8x64xf32>
    %cst_81 = arith.constant 0.000000e+00 : f32
    %166 = vector.broadcast %cst_81 : f32 to vector<8x64xf32>
    %167 = arith.maximumf %165, %166 : vector<8x64xf32>
    %168 = vector.extract_strided_slice %167 {offsets = [0, 0], sizes = [4, 64], strides = [1, 1]} : vector<8x64xf32> to vector<4x64xf32>
    %cst_82 = arith.constant dense<0.000000e+00> : vector<64xf32>
    %169 = vector.multi_reduction <add>, %168, %cst_82 [0] : vector<4x64xf32> to vector<64xf32>
    %170 = vector.shape_cast %169 : vector<64xf32> to vector<1x64xf32>
    %cst_83 = arith.constant 4.000000e+00 : f32
    %171 = vector.broadcast %cst_83 : f32 to vector<1x64xf32>
    %172 = arith.divf %170, %171 : vector<1x64xf32>
    %173 = vector.broadcast %172 : vector<1x64xf32> to vector<4x64xf32>
    %174 = arith.subf %168, %173 : vector<4x64xf32>
    %175 = arith.mulf %174, %174 : vector<4x64xf32>
    %cst_84 = arith.constant dense<0.000000e+00> : vector<64xf32>
    %176 = vector.multi_reduction <add>, %175, %cst_84 [0] : vector<4x64xf32> to vector<64xf32>
    %177 = vector.shape_cast %176 : vector<64xf32> to vector<1x64xf32>
    %cst_85 = arith.constant 4.000000e+00 : f32
    %178 = vector.broadcast %cst_85 : f32 to vector<1x64xf32>
    %179 = arith.divf %177, %178 : vector<1x64xf32>
    %cst_86 = arith.constant 9.99999974E-6 : f32
    %180 = vector.broadcast %cst_86 : f32 to vector<1x64xf32>
    %181 = arith.addf %179, %180 : vector<1x64xf32>
    %182 = math.rsqrt %181 : vector<1x64xf32>
    %183 = vector.broadcast %182 : vector<1x64xf32> to vector<4x64xf32>
    %184 = arith.mulf %174, %183 : vector<4x64xf32>
    %c0_87 = arith.constant 0 : index
    %c0_88 = arith.constant 0 : index
    %185 = vector.load %arg14[%c0_87, %c0_88] : memref<1x64xf32, #tpu.memory_space<vmem>>, vector<1x64xf32>
    %186 = vector.broadcast %185 : vector<1x64xf32> to vector<4x64xf32>
    %187 = arith.mulf %184, %186 : vector<4x64xf32>
    %c0_89 = arith.constant 0 : index
    %c0_90 = arith.constant 0 : index
    %188 = vector.load %arg15[%c0_89, %c0_90] : memref<1x64xf32, #tpu.memory_space<vmem>>, vector<1x64xf32>
    %189 = vector.broadcast %188 : vector<1x64xf32> to vector<4x64xf32>
    %190 = arith.addf %187, %189 : vector<4x64xf32>
    %c0_91 = arith.constant 0 : index
    %c0_92 = arith.constant 0 : index
    %191 = vector.load %arg16[%c0_91, %c0_92] : memref<4x64xf32, #tpu.memory_space<vmem>>, vector<4x64xf32>
    tpu.vector_store %arg16[%c0_91, %c0_92], %190 {strides = array<i32>} : memref<4x64xf32, #tpu.memory_space<vmem>>, vector<4x64xf32>,
    return
  }
}

</mosaic_0001>

<llo_original>
// kernel: frontal_rnn_forward.1
$region0: #{frontal_rnn_forward.1}
  #allocation0 [shape = 'u32[]', space=smem, size = 0x4, offset = 0x4, fixed_abs, tag = 'smem constant byte address 0x4 - core index']
  #allocation1 [shape = 'u32[144,128]{1,0:T(1,128)}', space=vmem, size = 0x12000, scoped, tag = 'internal scratch']
  %s0 = inlined_call_operand.vmem [shape: f32[8,248], index: 0, kind: input, shape index: {}]
  %s1 = inlined_call_operand.vmem [shape: f32[48,64], index: 1, kind: input, shape index: {}]
  %s2 = inlined_call_operand.vmem [shape: f32[8,64], index: 2, kind: input, shape index: {}]
  %s3 = inlined_call_operand.vmem [shape: f32[64,256], index: 3, kind: input, shape index: {}]
  %s4 = inlined_call_operand.vmem [shape: f32[128,128], index: 4, kind: input, shape index: {}]
  %s5 = inlined_call_operand.vmem [shape: f32[128,128], index: 5, kind: input, shape index: {}]
  %s6 = inlined_call_operand.vmem [shape: f32[1,256], index: 6, kind: input, shape index: {}]
  %s7 = inlined_call_operand.vmem [shape: f32[128,128], index: 7, kind: input, shape index: {}]
  %s8 = inlined_call_operand.vmem [shape: f32[128,128], index: 8, kind: input, shape index: {}]
  %s9 = inlined_call_operand.vmem [shape: f32[1,128], index: 9, kind: input, shape index: {}]
  %s10 = inlined_call_operand.vmem [shape: f32[6,128,64], index: 10, kind: input, shape index: {}]
  %s11 = inlined_call_operand.vmem [shape: f32[1,64], index: 11, kind: input, shape index: {}]
  %s12 = inlined_call_operand.vmem [shape: f32[8,1], index: 12, kind: input, shape index: {}]
  %s13 = inlined_call_operand.vmem [shape: f32[8,1], index: 13, kind: input, shape index: {}]
  %s14 = inlined_call_operand.vmem [shape: f32[1,64], index: 14, kind: input, shape index: {}]
  %s15 = inlined_call_operand.vmem [shape: f32[1,64], index: 15, kind: input, shape index: {}]
  %s16 = inlined_call_operand.hbm [shape: f32[4,64], index: 16, kind: output, shape index: {}]
  %s17 = sld [smem:[#allocation0]]
  $region74: #{frontal_rnn_forward.1} parent=0
    _
  %s19 = ssub.s32 1, %s17
  %s20 = scalar_select 0, %s19, %s17
  $region1: #{frontal_rnn_forward.1} parent=0
    #allocation2 [shape = 'u8[2048]{0}', space=vmem, size = 0x800, scoped, tag = 'output window, operand 0, single buffered']
    #allocation3 [shape = 's32[1]{0}', space=sflag, size = 0x4, scoped, tag = 'scoped memory for frontal_rnn_forward.1']
    %21 = vsyncpa [#allocation3], 0
    // Predicated region
    $region2: #{frontal_rnn_forward.1} parent=1 // pred_check
      _
    $region3: #{frontal_rnn_forward.1} parent=1 // pred_check_branch
      %23 = sbr.rel (0) target = $region5
    $region4: #{frontal_rnn_forward.1} parent=1 // pred_region
      _
    $region5: #{frontal_rnn_forward.1} parent=1 // pred_fallthru
      _
    // Predicated region
    $region6: #{frontal_rnn_forward.1} parent=1 // pred_check
      _
    $region7: #{frontal_rnn_forward.1} parent=1 // pred_check_branch
      %25 = sbr.rel (0) target = $region9
    $region8: #{frontal_rnn_forward.1} parent=1 // pred_region
      _
    $region9: #{frontal_rnn_forward.1} parent=1 // pred_fallthru
      _
    // Predicated region
    $region10: #{frontal_rnn_forward.1} parent=1 // pred_check
      _
    $region11: #{frontal_rnn_forward.1} parent=1 // pred_check_branch
      %27 = sbr.rel (0) target = $region13
    $region12: #{frontal_rnn_forward.1} parent=1 // pred_region
      _
    $region13: #{frontal_rnn_forward.1} parent=1 // pred_fallthru
      _
    // Predicated region
    $region14: #{frontal_rnn_forward.1} parent=1 // pred_check
      _
    $region15: #{frontal_rnn_forward.1} parent=1 // pred_check_branch
      %29 = sbr.rel (0) target = $region17
    $region16: #{frontal_rnn_forward.1} parent=1 // pred_region
      _
    $region17: #{frontal_rnn_forward.1} parent=1 // pred_fallthru
      _
    // Predicated region
    $region18: #{frontal_rnn_forward.1} parent=1 // pred_check
      _
    $region19: #{frontal_rnn_forward.1} parent=1 // pred_check_branch
      %31 = sbr.rel (0) target = $region21
    $region20: #{frontal_rnn_forward.1} parent=1 // pred_region
      _
    $region21: #{frontal_rnn_forward.1} parent=1 // pred_fallthru
      _
    // Predicated region
    $region22: #{frontal_rnn_forward.1} parent=1 // pred_check
      _
    $region23: #{frontal_rnn_forward.1} parent=1 // pred_check_branch
      %33 = sbr.rel (0) target = $region25
    $region24: #{frontal_rnn_forward.1} parent=1 // pred_region
      _
    $region25: #{frontal_rnn_forward.1} parent=1 // pred_fallthru
      _
    // Predicated region
    $region26: #{frontal_rnn_forward.1} parent=1 // pred_check
      _
    $region27: #{frontal_rnn_forward.1} parent=1 // pred_check_branch
      %35 = sbr.rel (0) target = $region29
    $region28: #{frontal_rnn_forward.1} parent=1 // pred_region
      _
    $region29: #{frontal_rnn_forward.1} parent=1 // pred_fallthru
      _
    // Predicated region
    $region30: #{frontal_rnn_forward.1} parent=1 // pred_check
      _
    $region31: #{frontal_rnn_forward.1} parent=1 // pred_check_branch
      %37 = sbr.rel (0) target = $region33
    $region32: #{frontal_rnn_forward.1} parent=1 // pred_region
      _
    $region33: #{frontal_rnn_forward.1} parent=1 // pred_fallthru
      _
    // Predicated region
    $region34: #{frontal_rnn_forward.1} parent=1 // pred_check
      _
    $region35: #{frontal_rnn_forward.1} parent=1 // pred_check_branch
      %39 = sbr.rel (0) target = $region37
    $region36: #{frontal_rnn_forward.1} parent=1 // pred_region
      _
    $region37: #{frontal_rnn_forward.1} parent=1 // pred_fallthru
      _
    // Predicated region
    $region38: #{frontal_rnn_forward.1} parent=1 // pred_check
      _
    $region39: #{frontal_rnn_forward.1} parent=1 // pred_check_branch
      %41 = sbr.rel (0) target = $region41
    $region40: #{frontal_rnn_forward.1} parent=1 // pred_region
      _
    $region41: #{frontal_rnn_forward.1} parent=1 // pred_fallthru
      _
    // Predicated region
    $region42: #{frontal_rnn_forward.1} parent=1 // pred_check
      _
    $region43: #{frontal_rnn_forward.1} parent=1 // pred_check_branch
      %43 = sbr.rel (0) target = $region45
    $region44: #{frontal_rnn_forward.1} parent=1 // pred_region
      _
    $region45: #{frontal_rnn_forward.1} parent=1 // pred_fallthru
      _
    // Predicated region
    $region46: #{frontal_rnn_forward.1} parent=1 // pred_check
      _
    $region47: #{frontal_rnn_forward.1} parent=1 // pred_check_branch
      %45 = sbr.rel (0) target = $region49
    $region48: #{frontal_rnn_forward.1} parent=1 // pred_region
      _
    $region49: #{frontal_rnn_forward.1} parent=1 // pred_fallthru
      _
    // Predicated region
    $region50: #{frontal_rnn_forward.1} parent=1 // pred_check
      _
    $region51: #{frontal_rnn_forward.1} parent=1 // pred_check_branch
      %47 = sbr.rel (0) target = $region53
    $region52: #{frontal_rnn_forward.1} parent=1 // pred_region
      _
    $region53: #{frontal_rnn_forward.1} parent=1 // pred_fallthru
      _
    // Predicated region
    $region54: #{frontal_rnn_forward.1} parent=1 // pred_check
      _
    $region55: #{frontal_rnn_forward.1} parent=1 // pred_check_branch
      %49 = sbr.rel (0) target = $region57
    $region56: #{frontal_rnn_forward.1} parent=1 // pred_region
      _
    $region57: #{frontal_rnn_forward.1} parent=1 // pred_fallthru
      _
    // Predicated region
    $region58: #{frontal_rnn_forward.1} parent=1 // pred_check
      _
    $region59: #{frontal_rnn_forward.1} parent=1 // pred_check_branch
      %51 = sbr.rel (0) target = $region61
    $region60: #{frontal_rnn_forward.1} parent=1 // pred_region
      _
    $region61: #{frontal_rnn_forward.1} parent=1 // pred_fallthru
      _
    // Predicated region
    $region62: #{frontal_rnn_forward.1} parent=1 // pred_check
      _
    $region63: #{frontal_rnn_forward.1} parent=1 // pred_check_branch
      %53 = sbr.rel (0) target = $region65
    $region64: #{frontal_rnn_forward.1} parent=1 // pred_region
      _
    $region65: #{frontal_rnn_forward.1} parent=1 // pred_fallthru
      _
    %v54 = vld [vmem:[%s0] sm:$0xff]
    %v55 = vld [vmem:[%s0 + $0x8] sm:$0xff]
    %vm56 = vcmask 982016
    %v57 = vsel %vm56, %v55, 0.0
    %v58 = vadd.f32 %v54, %v57
    %59 = vadd.xlane.f32.xlu0 %v58
    %v60 = vpop.xlane.xlu0 %59
    %v61 = vrcp.pop 248.0
    %v62 = vmul.f32 %v60, %v61
    %v63 = vsub.f32 %v54, %v62
    %v64 = vsub.f32 %v55, %v62
    %v65 = vmul.f32 %v63, %v63
    %v66 = vmul.f32 %v64, %v64
    %v67 = vsel %vm56, %v66, 0.0
    %v68 = vadd.f32 %v65, %v67
    %69 = vadd.xlane.f32.xlu0 %v68
    %v70 = vpop.xlane.xlu0 %69
    %v71 = vmul.f32 %v70, %v61
    %v72 = vld [vmem:[%s12] sm:$0xff]
    %v73 = vadd.f32 %v71, 1e-05
    %v74 = vrsqrt.pop %v73
    %v75 = vmul.f32 %v72, %v74
    %v76 = vld [vmem:[%s13] sm:$0xff]
    %v77 = vmul.f32 %v62, %v75
    %v78 = vsub.f32 %v76, %v77
    %v79 = vld [vmem:[%s2] sm:$0xff]
    %81 = vset.pattern.permute.xlu0 0
    %82 = vperm.xlu0 %81, %v75
    %v83 = vpop.permute.xlu0 %82
    %v85 = vmul.f32 %v79, %v83
    %vm86 = vcmask 523264
    %v87 = vsel %vm86, %v85, 0.0
    %v88 = vrot.slane %v87, 4
    %v89 = vadd.f32 %v87, %v88
    %v90 = vrot.slane %v89, 2
    %v91 = vadd.f32 %v89, %v90
    %v92 = vrot.slane %v91, 1
    %v93 = vadd.f32 %v91, %v92
    %95 = vset.pattern.permute.xlu0 0
    %96 = vperm.xlu0 %95, %v78
    %v97 = vpop.permute.xlu0 %96
    %v99 = vmul.f32 %v79, %v97
    %v100 = vsel %vm86, %v99, 0.0
    %v101 = vrot.slane %v100, 4
    %v102 = vadd.f32 %v100, %v101
    %v103 = vrot.slane %v102, 2
    %v104 = vadd.f32 %v102, %v103
    %v105 = vrot.slane %v104, 1
    %v106 = vadd.f32 %v104, %v105
    %v107 = vld [vmem:[%s1] sm:$0xff]
    %v108 = vld [vmem:[%s1 + $0x8] sm:$0xff]
    %v109 = vld [vmem:[%s1 + $0x10] sm:$0xff]
    %v110 = vld [vmem:[%s1 + $0x18] sm:$0xff]
    %v111 = vld [vmem:[%s1 + $0x20] sm:$0xff]
    %v112 = vld [vmem:[%s1 + $0x28] sm:$0xff]
    %v113 = vmul.f32 %v107, %v93
    %v114 = vmul.f32 %v108, %v93
    %v115 = vmul.f32 %v109, %v93
    %v116 = vmul.f32 %v110, %v93
    %v117 = vmul.f32 %v111, %v93
    %v118 = vmul.f32 %v112, %v93
    %v119 = vadd.f32 %v113, %v106
    %v120 = vadd.f32 %v114, %v106
    %v121 = vadd.f32 %v115, %v106
    %v122 = vadd.f32 %v116, %v106
    %v123 = vadd.f32 %v117, %v106
    %v124 = vadd.f32 %v118, %v106
    %v125 = vld [vmem:[%s3] sm:$0xff]
    %v126 = vld [vmem:[%s3 + $0x8] sm:$0xff]
    %v127 = vld [vmem:[%s3 + $0x10] sm:$0xff]
    %v128 = vld [vmem:[%s3 + $0x18] sm:$0xff]
    %v129 = vld [vmem:[%s3 + $0x20] sm:$0xff]
    %v130 = vld [vmem:[%s3 + $0x28] sm:$0xff]
    %v131 = vld [vmem:[%s3 + $0x30] sm:$0xff]
    %v132 = vld [vmem:[%s3 + $0x38] sm:$0xff]
    %v133 = vld [vmem:[%s3 + $0x40] sm:$0xff]
    %v134 = vld [vmem:[%s3 + $0x48] sm:$0xff]
    %v135 = vld [vmem:[%s3 + $0x50] sm:$0xff]
    %v136 = vld [vmem:[%s3 + $0x58] sm:$0xff]
    %v137 = vld [vmem:[%s3 + $0x60] sm:$0xff]
    %v138 = vld [vmem:[%s3 + $0x68] sm:$0xff]
    %v139 = vld [vmem:[%s3 + $0x70] sm:$0xff]
    %v140 = vld [vmem:[%s3 + $0x78] sm:$0xff]
    %v141 = vld [vmem:[%s6] sm:$0x3]
    %v143 = vlaneseq
    %v144 = vshrl.u32 %v143, 7
    %v145 = vsub.s32 0, %v144
    %v146 = vrot.slane %v141, %v145
    %v147 = vlaneseq
    %v148 = vshrl.u32 %v147, 7
    %v149 = vsub.s32 1, %v148
    %v150 = vrot.slane %v141, %v149
    %v154 = vsel %vm86, %v119, 0
    %v157 = vsel %vm86, %v120, 0
    %v160 = vsel %vm86, %v121, 0
    %v163 = vsel %vm86, %v122, 0
    %v166 = vsel %vm86, %v123, 0
    %v169 = vsel %vm86, %v124, 0
    %171 = vmatprep.subr.mxu0 %v126
    %172 = vmatpush1.msra.mxu0 %v125
    %173 = vmatprep.subr.mxu0 %v128
    %174 = vmatpush1.msra.mxu0 %v127
    %175 = vmatprep.subr.mxu0 %v130
    %176 = vmatpush1.msra.mxu0 %v129
    %177 = vmatprep.subr.mxu0 %v132
    %178 = vmatpush1.msra.mxu0 %v131
    %179 = vmatprep.subr.mxu0 %v134
    %180 = vmatpush1.msra.mxu0 %v133
    %181 = vmatprep.subr.mxu0 %v136
    %182 = vmatpush1.msra.mxu0 %v135
    %183 = vmatprep.subr.mxu0 %v138
    %184 = vmatpush1.msra.mxu0 %v137
    %185 = vmatprep.subr.mxu0 %v140
    %186 = vmatpush1.msra.mxu0 %v139
    %187 = vmatprep.subr.mxu0 0.0
    %188 = vmatpush1.msra.mxu0 0.0
    %189 = vmatprep.subr.mxu0 0.0
    %190 = vmatpush1.msra.mxu0 0.0
    %191 = vmatprep.subr.mxu0 0.0
    %192 = vmatpush1.msra.mxu0 0.0
    %193 = vmatprep.subr.mxu0 0.0
    %194 = vmatpush1.msra.mxu0 0.0
    %195 = vmatprep.subr.mxu0 0.0
    %196 = vmatpush1.msra.mxu0 0.0
    %197 = vmatprep.subr.mxu0 0.0
    %198 = vmatpush1.msra.mxu0 0.0
    %199 = vmatprep.subr.mxu0 0.0
    %200 = vmatpush1.msra.mxu0 0.0
    %201 = vmatprep.subr.mxu0 0.0
    %202 = vmatpush1.msra.mxu0 0.0
    %203 = vmatprep.subr.mxu0 0.0
    %204 = vmatpush1.msra.mxu0 0.0
    %205 = vmatprep.subr.mxu0 0.0
    %206 = vmatpush1.msra.mxu0 0.0
    %207 = vmatprep.subr.mxu0 0.0
    %208 = vmatpush1.msra.mxu0 0.0
    %209 = vmatprep.subr.mxu0 0.0
    %210 = vmatpush1.msra.mxu0 0.0
    %211 = vmatprep.subr.mxu0 0.0
    %212 = vmatpush1.msra.mxu0 0.0
    %213 = vmatprep.subr.mxu0 0.0
    %214 = vmatpush1.msra.mxu0 0.0
    %215 = vmatprep.subr.mxu0 0.0
    %216 = vmatpush1.msra.mxu0 0.0
    %217 = vmatprep.subr.mxu0 0.0
    %218 = vmatpush1.msra.mxu0 0.0
    %219 = vmatprep.subr.mxu0 0.0
    %220 = vmatpush1.msra.mxu0 0.0
    %221 = vmatprep.subr.mxu0 0.0
    %222 = vmatpush1.msra.mxu0 0.0
    %223 = vmatprep.subr.mxu0 0.0
    %224 = vmatpush1.msra.mxu0 0.0
    %225 = vmatprep.subr.mxu0 0.0
    %226 = vmatpush1.msra.mxu0 0.0
    %227 = vmatprep.subr.mxu0 0.0
    %228 = vmatpush1.msra.mxu0 0.0
    %229 = vmatprep.subr.mxu0 0.0
    %230 = vmatpush1.msra.mxu0 0.0
    %231 = vmatprep.subr.mxu0 0.0
    %232 = vmatpush1.msra.mxu0 0.0
    %233 = vmatprep.subr.mxu0 0.0
    %234 = vmatpush1.msra.mxu0 0.0
    %235 = vmatprep.mubr.f32.mxu0 0.0
    %236 = vmatmul.mubr.f32.gmra.mrb[0].mxu0 %v154
    %v237 = vpop.f32.mrb[0].mxu0
    %v238 = vadd.f32 %v146, %v237
    %v239 = vpop.f32.mrb[0].mxu0
    %v240 = vadd.f32 %v150, %v239
    %241 = vmatprep.mubr.f32.mxu0 0.0
    %242 = vmatmul.mubr.f32.gmra.mrb[0].mxu0 %v157
    %v243 = vpop.f32.mrb[0].mxu0
    %v244 = vadd.f32 %v146, %v243
    %v245 = vpop.f32.mrb[0].mxu0
    %v246 = vadd.f32 %v150, %v245
    %247 = vmatprep.mubr.f32.mxu0 0.0
    %248 = vmatmul.mubr.f32.gmra.mrb[0].mxu0 %v160
    %v249 = vpop.f32.mrb[0].mxu0
    %v250 = vadd.f32 %v146, %v249
    %v251 = vpop.f32.mrb[0].mxu0
    %v252 = vadd.f32 %v150, %v251
    %253 = vmatprep.mubr.f32.mxu0 0.0
    %254 = vmatmul.mubr.f32.gmra.mrb[0].mxu0 %v163
    %v255 = vpop.f32.mrb[0].mxu0
    %v256 = vadd.f32 %v146, %v255
    %v257 = vpop.f32.mrb[0].mxu0
    %v258 = vadd.f32 %v150, %v257
    %259 = vmatprep.mubr.f32.mxu0 0.0
    %260 = vmatmul.mubr.f32.gmra.mrb[0].mxu0 %v166
    %v261 = vpop.f32.mrb[0].mxu0
    %v262 = vadd.f32 %v146, %v261
    %v263 = vpop.f32.mrb[0].mxu0
    %v264 = vadd.f32 %v150, %v263
    %265 = vmatprep.mubr.f32.mxu0 0.0
    %266 = vmatmul.mubr.f32.gmra.mrb[0].mxu0 %v169
    %v267 = vpop.f32.mrb[0].mxu0
    %v268 = vadd.f32 %v146, %v267
    %v269 = vpop.f32.mrb[0].mxu0
    %v270 = vadd.f32 %v150, %v269
    %271 = vdwg.mxu0
    %v272 = vld [vmem:[%s4] sm:$0xff]
    %v273 = vld [vmem:[%s4 + $0x8] sm:$0xff]
    %v274 = vld [vmem:[%s4 + $0x10] sm:$0xff]
    %v275 = vld [vmem:[%s4 + $0x18] sm:$0xff]
    %v276 = vld [vmem:[%s4 + $0x20] sm:$0xff]
    %v277 = vld [vmem:[%s4 + $0x28] sm:$0xff]
    %v278 = vld [vmem:[%s4 + $0x30] sm:$0xff]
    %v279 = vld [vmem:[%s4 + $0x38] sm:$0xff]
    %v280 = vld [vmem:[%s4 + $0x40] sm:$0xff]
    %v281 = vld [vmem:[%s4 + $0x48] sm:$0xff]
    %v282 = vld [vmem:[%s4 + $0x50] sm:$0xff]
    %v283 = vld [vmem:[%s4 + $0x58] sm:$0xff]
    %v284 = vld [vmem:[%s4 + $0x60] sm:$0xff]
    %v285 = vld [vmem:[%s4 + $0x68] sm:$0xff]
    %v286 = vld [vmem:[%s4 + $0x70] sm:$0xff]
    %v287 = vld [vmem:[%s4 + $0x78] sm:$0xff]
    %v288 = vld [vmem:[%s5] sm:$0xff]
    %v289 = vld [vmem:[%s5 + $0x8] sm:$0xff]
    %v290 = vld [vmem:[%s5 + $0x10] sm:$0xff]
    %v291 = vld [vmem:[%s5 + $0x18] sm:$0xff]
    %v292 = vld [vmem:[%s5 + $0x20] sm:$0xff]
    %v293 = vld [vmem:[%s5 + $0x28] sm:$0xff]
    %v294 = vld [vmem:[%s5 + $0x30] sm:$0xff]
    %v295 = vld [vmem:[%s5 + $0x38] sm:$0xff]
    %v296 = vld [vmem:[%s5 + $0x40] sm:$0xff]
    %v297 = vld [vmem:[%s5 + $0x48] sm:$0xff]
    %v298 = vld [vmem:[%s5 + $0x50] sm:$0xff]
    %v299 = vld [vmem:[%s5 + $0x58] sm:$0xff]
    %v300 = vld [vmem:[%s5 + $0x60] sm:$0xff]
    %v301 = vld [vmem:[%s5 + $0x68] sm:$0xff]
    %v302 = vld [vmem:[%s5 + $0x70] sm:$0xff]
    %v303 = vld [vmem:[%s5 + $0x78] sm:$0xff]
    %v304 = vld [vmem:[%s7] sm:$0xff]
    %v305 = vld [vmem:[%s7 + $0x8] sm:$0xff]
    %v306 = vld [vmem:[%s7 + $0x10] sm:$0xff]
    %v307 = vld [vmem:[%s7 + $0x18] sm:$0xff]
    %v308 = vld [vmem:[%s7 + $0x20] sm:$0xff]
    %v309 = vld [vmem:[%s7 + $0x28] sm:$0xff]
    %v310 = vld [vmem:[%s7 + $0x30] sm:$0xff]
    %v311 = vld [vmem:[%s7 + $0x38] sm:$0xff]
    %v312 = vld [vmem:[%s7 + $0x40] sm:$0xff]
    %v313 = vld [vmem:[%s7 + $0x48] sm:$0xff]
    %v314 = vld [vmem:[%s7 + $0x50] sm:$0xff]
    %v315 = vld [vmem:[%s7 + $0x58] sm:$0xff]
    %v316 = vld [vmem:[%s7 + $0x60] sm:$0xff]
    %v317 = vld [vmem:[%s7 + $0x68] sm:$0xff]
    %v318 = vld [vmem:[%s7 + $0x70] sm:$0xff]
    %v319 = vld [vmem:[%s7 + $0x78] sm:$0xff]
    %v320 = vld [vmem:[%s8] sm:$0xff]
    %v321 = vld [vmem:[%s8 + $0x8] sm:$0xff]
    %v322 = vld [vmem:[%s8 + $0x10] sm:$0xff]
    %v323 = vld [vmem:[%s8 + $0x18] sm:$0xff]
    %v324 = vld [vmem:[%s8 + $0x20] sm:$0xff]
    %v325 = vld [vmem:[%s8 + $0x28] sm:$0xff]
    %v326 = vld [vmem:[%s8 + $0x30] sm:$0xff]
    %v327 = vld [vmem:[%s8 + $0x38] sm:$0xff]
    %v328 = vld [vmem:[%s8 + $0x40] sm:$0xff]
    %v329 = vld [vmem:[%s8 + $0x48] sm:$0xff]
    %v330 = vld [vmem:[%s8 + $0x50] sm:$0xff]
    %v331 = vld [vmem:[%s8 + $0x58] sm:$0xff]
    %v332 = vld [vmem:[%s8 + $0x60] sm:$0xff]
    %v333 = vld [vmem:[%s8 + $0x68] sm:$0xff]
    %v334 = vld [vmem:[%s8 + $0x70] sm:$0xff]
    %v335 = vld [vmem:[%s8 + $0x78] sm:$0xff]
    %v336 = vld [vmem:[%s9] sm:$0x1]
    %v337 = vld [vmem:[%s11] sm:$0x1]
    %v339 = vlaneseq
    %v340 = vshrl.u32 %v339, 7
    %v341 = vsub.s32 0, %v340
    %v342 = vrot.slane %v337, %v341
    %v344 = vadd.f32 %v342, 0.0
    %345 = vmatprep.subr.mxu0 0.0
    %346 = vmatpush1.msra.mxu0 %v272
    %347 = vmatprep.subr.mxu0 0.0
    %348 = vmatpush1.msra.mxu0 %v273
    %349 = vmatprep.subr.mxu0 0.0
    %350 = vmatpush1.msra.mxu0 %v274
    %351 = vmatprep.subr.mxu0 0.0
    %352 = vmatpush1.msra.mxu0 %v275
    %353 = vmatprep.subr.mxu0 0.0
    %354 = vmatpush1.msra.mxu0 %v276
    %355 = vmatprep.subr.mxu0 0.0
    %356 = vmatpush1.msra.mxu0 %v277
    %357 = vmatprep.subr.mxu0 0.0
    %358 = vmatpush1.msra.mxu0 %v278
    %359 = vmatprep.subr.mxu0 0.0
    %360 = vmatpush1.msra.mxu0 %v279
    %361 = vmatprep.subr.mxu0 0.0
    %362 = vmatpush1.msra.mxu0 %v280
    %363 = vmatprep.subr.mxu0 0.0
    %364 = vmatpush1.msra.mxu0 %v281
    %365 = vmatprep.subr.mxu0 0.0
    %366 = vmatpush1.msra.mxu0 %v282
    %367 = vmatprep.subr.mxu0 0.0
    %368 = vmatpush1.msra.mxu0 %v283
    %369 = vmatprep.subr.mxu0 0.0
    %370 = vmatpush1.msra.mxu0 %v284
    %371 = vmatprep.subr.mxu0 0.0
    %372 = vmatpush1.msra.mxu0 %v285
    %373 = vmatprep.subr.mxu0 0.0
    %374 = vmatpush1.msra.mxu0 %v286
    %375 = vmatprep.subr.mxu0 0.0
    %376 = vmatpush1.msra.mxu0 %v287
    %377 = vmatprep.subr.mxu0 0.0
    %378 = vmatpush1.msra.mxu0 0.0
    %379 = vmatprep.subr.mxu0 0.0
    %380 = vmatpush1.msra.mxu0 0.0
    %381 = vmatprep.subr.mxu0 0.0
    %382 = vmatpush1.msra.mxu0 0.0
    %383 = vmatprep.subr.mxu0 0.0
    %384 = vmatpush1.msra.mxu0 0.0
    %385 = vmatprep.subr.mxu0 0.0
    %386 = vmatpush1.msra.mxu0 0.0
    %387 = vmatprep.subr.mxu0 0.0
    %388 = vmatpush1.msra.mxu0 0.0
    %389 = vmatprep.subr.mxu0 0.0
    %390 = vmatpush1.msra.mxu0 0.0
    %391 = vmatprep.subr.mxu0 0.0
    %392 = vmatpush1.msra.mxu0 0.0
    %393 = vmatprep.subr.mxu0 0.0
    %394 = vmatpush1.msra.mxu0 0.0
    %395 = vmatprep.subr.mxu0 0.0
    %396 = vmatpush1.msra.mxu0 0.0
    %397 = vmatprep.subr.mxu0 0.0
    %398 = vmatpush1.msra.mxu0 0.0
    %399 = vmatprep.subr.mxu0 0.0
    %400 = vmatpush1.msra.mxu0 0.0
    %401 = vmatprep.subr.mxu0 0.0
    %402 = vmatpush1.msra.mxu0 0.0
    %403 = vmatprep.subr.mxu0 0.0
    %404 = vmatpush1.msra.mxu0 0.0
    %405 = vmatprep.subr.mxu0 0.0
    %406 = vmatpush1.msra.mxu0 0.0
    %407 = vmatprep.subr.mxu0 0.0
    %408 = vmatpush1.msra.mxu0 0.0
    %409 = vmatprep.mubr.f32.mxu0 0.0
    %410 = vmatmul.mubr.f32.gmra.mrb[0].mxu0 0.0
    %v411 = vpop.f32.mrb[0].mxu0
    %v412 = vadd.f32 0.0, %v411
    %v413 = vpop.f32.mrb[0].mxu0
    %414 = vdwg.mxu0
    %v415 = vadd.f32 %v238, %v412
    %v416 = vtanh.pop %v415
    %417 = vmatprep.subr.mxu0 0.0
    %418 = vmatpush1.msra.mxu0 %v288
    %419 = vmatprep.subr.mxu0 0.0
    %420 = vmatpush1.msra.mxu0 %v289
    %421 = vmatprep.subr.mxu0 0.0
    %422 = vmatpush1.msra.mxu0 %v290
    %423 = vmatprep.subr.mxu0 0.0
    %424 = vmatpush1.msra.mxu0 %v291
    %425 = vmatprep.subr.mxu0 0.0
    %426 = vmatpush1.msra.mxu0 %v292
    %427 = vmatprep.subr.mxu0 0.0
    %428 = vmatpush1.msra.mxu0 %v293
    %429 = vmatprep.subr.mxu0 0.0
    %430 = vmatpush1.msra.mxu0 %v294
    %431 = vmatprep.subr.mxu0 0.0
    %432 = vmatpush1.msra.mxu0 %v295
    %433 = vmatprep.subr.mxu0 0.0
    %434 = vmatpush1.msra.mxu0 %v296
    %435 = vmatprep.subr.mxu0 0.0
    %436 = vmatpush1.msra.mxu0 %v297
    %437 = vmatprep.subr.mxu0 0.0
    %438 = vmatpush1.msra.mxu0 %v298
    %439 = vmatprep.subr.mxu0 0.0
    %440 = vmatpush1.msra.mxu0 %v299
    %441 = vmatprep.subr.mxu0 0.0
    %442 = vmatpush1.msra.mxu0 %v300
    %443 = vmatprep.subr.mxu0 0.0
    %444 = vmatpush1.msra.mxu0 %v301
    %445 = vmatprep.subr.mxu0 0.0
    %446 = vmatpush1.msra.mxu0 %v302
    %447 = vmatprep.subr.mxu0 0.0
    %448 = vmatpush1.msra.mxu0 %v303
    %449 = vmatprep.subr.mxu0 0.0
    %450 = vmatpush1.msra.mxu0 0.0
    %451 = vmatprep.subr.mxu0 0.0
    %452 = vmatpush1.msra.mxu0 0.0
    %453 = vmatprep.subr.mxu0 0.0
    %454 = vmatpush1.msra.mxu0 0.0
    %455 = vmatprep.subr.mxu0 0.0
    %456 = vmatpush1.msra.mxu0 0.0
    %457 = vmatprep.subr.mxu0 0.0
    %458 = vmatpush1.msra.mxu0 0.0
    %459 = vmatprep.subr.mxu0 0.0
    %460 = vmatpush1.msra.mxu0 0.0
    %461 = vmatprep.subr.mxu0 0.0
    %462 = vmatpush1.msra.mxu0 0.0
    %463 = vmatprep.subr.mxu0 0.0
    %464 = vmatpush1.msra.mxu0 0.0
    %465 = vmatprep.subr.mxu0 0.0
    %466 = vmatpush1.msra.mxu0 0.0
    %467 = vmatprep.subr.mxu0 0.0
    %468 = vmatpush1.msra.mxu0 0.0
    %469 = vmatprep.subr.mxu0 0.0
    %470 = vmatpush1.msra.mxu0 0.0
    %471 = vmatprep.subr.mxu0 0.0
    %472 = vmatpush1.msra.mxu0 0.0
    %473 = vmatprep.subr.mxu0 0.0
    %474 = vmatpush1.msra.mxu0 0.0
    %475 = vmatprep.subr.mxu0 0.0
    %476 = vmatpush1.msra.mxu0 0.0
    %477 = vmatprep.subr.mxu0 0.0
    %478 = vmatpush1.msra.mxu0 0.0
    %479 = vmatprep.subr.mxu0 0.0
    %480 = vmatpush1.msra.mxu0 0.0
    %481 = vmatprep.mubr.f32.mxu0 0.0
    %482 = vmatmul.mubr.f32.gmra.mrb[0].mxu0 0.0
    %v483 = vpop.f32.mrb[0].mxu0
    %v484 = vadd.f32 0.0, %v483
    %v485 = vpop.f32.mrb[0].mxu0
    %486 = vdwg.mxu0
    %v487 = vadd.f32 %v240, %v484
    %v488 = vtanh.pop %v487
    %v489 = vsub.f32 %v488, %v416
    %v491 = vlaneseq
    %v492 = vshrl.u32 %v491, 7
    %v493 = vsub.s32 0, %v492
    %v494 = vrot.slane %v336, %v493
    %496 = vmatprep.subr.mxu0 0.0
    %497 = vmatpush1.msra.mxu0 %v304
    %498 = vmatprep.subr.mxu0 0.0
    %499 = vmatpush1.msra.mxu0 %v305
    %500 = vmatprep.subr.mxu0 0.0
    %501 = vmatpush1.msra.mxu0 %v306
    %502 = vmatprep.subr.mxu0 0.0
    %503 = vmatpush1.msra.mxu0 %v307
    %504 = vmatprep.subr.mxu0 0.0
    %505 = vmatpush1.msra.mxu0 %v308
    %506 = vmatprep.subr.mxu0 0.0
    %507 = vmatpush1.msra.mxu0 %v309
    %508 = vmatprep.subr.mxu0 0.0
    %509 = vmatpush1.msra.mxu0 %v310
    %510 = vmatprep.subr.mxu0 0.0
    %511 = vmatpush1.msra.mxu0 %v311
    %512 = vmatprep.subr.mxu0 0.0
    %513 = vmatpush1.msra.mxu0 %v312
    %514 = vmatprep.subr.mxu0 0.0
    %515 = vmatpush1.msra.mxu0 %v313
    %516 = vmatprep.subr.mxu0 0.0
    %517 = vmatpush1.msra.mxu0 %v314
    %518 = vmatprep.subr.mxu0 0.0
    %519 = vmatpush1.msra.mxu0 %v315
    %520 = vmatprep.subr.mxu0 0.0
    %521 = vmatpush1.msra.mxu0 %v316
    %522 = vmatprep.subr.mxu0 0.0
    %523 = vmatpush1.msra.mxu0 %v317
    %524 = vmatprep.subr.mxu0 0.0
    %525 = vmatpush1.msra.mxu0 %v318
    %526 = vmatprep.subr.mxu0 0.0
    %527 = vmatpush1.msra.mxu0 %v319
    %528 = vmatprep.subr.mxu0 0.0
    %529 = vmatpush1.msra.mxu0 0.0
    %530 = vmatprep.subr.mxu0 0.0
    %531 = vmatpush1.msra.mxu0 0.0
    %532 = vmatprep.subr.mxu0 0.0
    %533 = vmatpush1.msra.mxu0 0.0
    %534 = vmatprep.subr.mxu0 0.0
    %535 = vmatpush1.msra.mxu0 0.0
    %536 = vmatprep.subr.mxu0 0.0
    %537 = vmatpush1.msra.mxu0 0.0
    %538 = vmatprep.subr.mxu0 0.0
    %539 = vmatpush1.msra.mxu0 0.0
    %540 = vmatprep.subr.mxu0 0.0
    %541 = vmatpush1.msra.mxu0 0.0
    %542 = vmatprep.subr.mxu0 0.0
    %543 = vmatpush1.msra.mxu0 0.0
    %544 = vmatprep.subr.mxu0 0.0
    %545 = vmatpush1.msra.mxu0 0.0
    %546 = vmatprep.subr.mxu0 0.0
    %547 = vmatpush1.msra.mxu0 0.0
    %548 = vmatprep.subr.mxu0 0.0
    %549 = vmatpush1.msra.mxu0 0.0
    %550 = vmatprep.subr.mxu0 0.0
    %551 = vmatpush1.msra.mxu0 0.0
    %552 = vmatprep.subr.mxu0 0.0
    %553 = vmatpush1.msra.mxu0 0.0
    %554 = vmatprep.subr.mxu0 0.0
    %555 = vmatpush1.msra.mxu0 0.0
    %556 = vmatprep.subr.mxu0 0.0
    %557 = vmatpush1.msra.mxu0 0.0
    %558 = vmatprep.subr.mxu0 0.0
    %559 = vmatpush1.msra.mxu0 0.0
    %560 = vmatprep.mubr.f32.mxu0 0.0
    %561 = vmatmul.mubr.f32.gmra.mrb[0].mxu0 %v489
    %v562 = vpop.f32.mrb[0].mxu0
    %v563 = vadd.f32 %v494, %v562
    %v564 = vpop.f32.mrb[0].mxu0
    %565 = vdwg.mxu0
    %566 = vmatprep.subr.mxu0 0.0
    %567 = vmatpush1.msra.mxu0 %v320
    %568 = vmatprep.subr.mxu0 0.0
    %569 = vmatpush1.msra.mxu0 %v321
    %570 = vmatprep.subr.mxu0 0.0
    %571 = vmatpush1.msra.mxu0 %v322
    %572 = vmatprep.subr.mxu0 0.0
    %573 = vmatpush1.msra.mxu0 %v323
    %574 = vmatprep.subr.mxu0 0.0
    %575 = vmatpush1.msra.mxu0 %v324
    %576 = vmatprep.subr.mxu0 0.0
    %577 = vmatpush1.msra.mxu0 %v325
    %578 = vmatprep.subr.mxu0 0.0
    %579 = vmatpush1.msra.mxu0 %v326
    %580 = vmatprep.subr.mxu0 0.0
    %581 = vmatpush1.msra.mxu0 %v327
    %582 = vmatprep.subr.mxu0 0.0
    %583 = vmatpush1.msra.mxu0 %v328
    %584 = vmatprep.subr.mxu0 0.0
    %585 = vmatpush1.msra.mxu0 %v329
    %586 = vmatprep.subr.mxu0 0.0
    %587 = vmatpush1.msra.mxu0 %v330
    %588 = vmatprep.subr.mxu0 0.0
    %589 = vmatpush1.msra.mxu0 %v331
    %590 = vmatprep.subr.mxu0 0.0
    %591 = vmatpush1.msra.mxu0 %v332
    %592 = vmatprep.subr.mxu0 0.0
    %593 = vmatpush1.msra.mxu0 %v333
    %594 = vmatprep.subr.mxu0 0.0
    %595 = vmatpush1.msra.mxu0 %v334
    %596 = vmatprep.subr.mxu0 0.0
    %597 = vmatpush1.msra.mxu0 %v335
    %598 = vmatprep.subr.mxu0 0.0
    %599 = vmatpush1.msra.mxu0 0.0
    %600 = vmatprep.subr.mxu0 0.0
    %601 = vmatpush1.msra.mxu0 0.0
    %602 = vmatprep.subr.mxu0 0.0
    %603 = vmatpush1.msra.mxu0 0.0
    %604 = vmatprep.subr.mxu0 0.0
    %605 = vmatpush1.msra.mxu0 0.0
    %606 = vmatprep.subr.mxu0 0.0
    %607 = vmatpush1.msra.mxu0 0.0
    %608 = vmatprep.subr.mxu0 0.0
    %609 = vmatpush1.msra.mxu0 0.0
    %610 = vmatprep.subr.mxu0 0.0
    %611 = vmatpush1.msra.mxu0 0.0
    %612 = vmatprep.subr.mxu0 0.0
    %613 = vmatpush1.msra.mxu0 0.0
    %614 = vmatprep.subr.mxu0 0.0
    %615 = vmatpush1.msra.mxu0 0.0
    %616 = vmatprep.subr.mxu0 0.0
    %617 = vmatpush1.msra.mxu0 0.0
    %618 = vmatprep.subr.mxu0 0.0
    %619 = vmatpush1.msra.mxu0 0.0
    %620 = vmatprep.subr.mxu0 0.0
    %621 = vmatpush1.msra.mxu0 0.0
    %622 = vmatprep.subr.mxu0 0.0
    %623 = vmatpush1.msra.mxu0 0.0
    %624 = vmatprep.subr.mxu0 0.0
    %625 = vmatpush1.msra.mxu0 0.0
    %626 = vmatprep.subr.mxu0 0.0
    %627 = vmatpush1.msra.mxu0 0.0
    %628 = vmatprep.subr.mxu0 0.0
    %629 = vmatpush1.msra.mxu0 0.0
    %630 = vmatprep.mubr.f32.mxu0 0.0
    %631 = vmatmul.mubr.f32.gmra.mrb[0].mxu0 0.0
    %v632 = vpop.f32.mrb[0].mxu0
    %v633 = vadd.f32 0.0, %v632
    %v634 = vpop.f32.mrb[0].mxu0
    %635 = vdwg.mxu0
    %v636 = vadd.f32 %v563, %v633
    %v637 = vtanh.pop %v636
    %v638 = vld [vmem:[%s10] sm:$0xff]
    %v639 = vld [vmem:[%s10 + $0x8] sm:$0xff]
    %v640 = vld [vmem:[%s10 + $0x10] sm:$0xff]
    %v641 = vld [vmem:[%s10 + $0x18] sm:$0xff]
    %v642 = vld [vmem:[%s10 + $0x20] sm:$0xff]
    %v643 = vld [vmem:[%s10 + $0x28] sm:$0xff]
    %v644 = vld [vmem:[%s10 + $0x30] sm:$0xff]
    %v645 = vld [vmem:[%s10 + $0x38] sm:$0xff]
    %v646 = vld [vmem:[%s10 + $0x40] sm:$0xff]
    %v647 = vld [vmem:[%s10 + $0x48] sm:$0xff]
    %v648 = vld [vmem:[%s10 + $0x50] sm:$0xff]
    %v649 = vld [vmem:[%s10 + $0x58] sm:$0xff]
    %v650 = vld [vmem:[%s10 + $0x60] sm:$0xff]
    %v651 = vld [vmem:[%s10 + $0x68] sm:$0xff]
    %v652 = vld [vmem:[%s10 + $0x70] sm:$0xff]
    %v653 = vld [vmem:[%s10 + $0x78] sm:$0xff]
    %654 = vmatprep.subr.mxu0 0.0
    %655 = vmatpush1.msra.mxu0 %v638
    %656 = vmatprep.subr.mxu0 0.0
    %657 = vmatpush1.msra.mxu0 %v639
    %658 = vmatprep.subr.mxu0 0.0
    %659 = vmatpush1.msra.mxu0 %v640
    %660 = vmatprep.subr.mxu0 0.0
    %661 = vmatpush1.msra.mxu0 %v641
    %662 = vmatprep.subr.mxu0 0.0
    %663 = vmatpush1.msra.mxu0 %v642
    %664 = vmatprep.subr.mxu0 0.0
    %665 = vmatpush1.msra.mxu0 %v643
    %666 = vmatprep.subr.mxu0 0.0
    %667 = vmatpush1.msra.mxu0 %v644
    %668 = vmatprep.subr.mxu0 0.0
    %669 = vmatpush1.msra.mxu0 %v645
    %670 = vmatprep.subr.mxu0 0.0
    %671 = vmatpush1.msra.mxu0 %v646
    %672 = vmatprep.subr.mxu0 0.0
    %673 = vmatpush1.msra.mxu0 %v647
    %674 = vmatprep.subr.mxu0 0.0
    %675 = vmatpush1.msra.mxu0 %v648
    %676 = vmatprep.subr.mxu0 0.0
    %677 = vmatpush1.msra.mxu0 %v649
    %678 = vmatprep.subr.mxu0 0.0
    %679 = vmatpush1.msra.mxu0 %v650
    %680 = vmatprep.subr.mxu0 0.0
    %681 = vmatpush1.msra.mxu0 %v651
    %682 = vmatprep.subr.mxu0 0.0
    %683 = vmatpush1.msra.mxu0 %v652
    %684 = vmatprep.subr.mxu0 0.0
    %685 = vmatpush1.msra.mxu0 %v653
    %686 = vmatprep.subr.mxu0 0.0
    %687 = vmatpush1.msra.mxu0 0.0
    %688 = vmatprep.subr.mxu0 0.0
    %689 = vmatpush1.msra.mxu0 0.0
    %690 = vmatprep.subr.mxu0 0.0
    %691 = vmatpush1.msra.mxu0 0.0
    %692 = vmatprep.subr.mxu0 0.0
    %693 = vmatpush1.msra.mxu0 0.0
    %694 = vmatprep.subr.mxu0 0.0
    %695 = vmatpush1.msra.mxu0 0.0
    %696 = vmatprep.subr.mxu0 0.0
    %697 = vmatpush1.msra.mxu0 0.0
    %698 = vmatprep.subr.mxu0 0.0
    %699 = vmatpush1.msra.mxu0 0.0
    %700 = vmatprep.subr.mxu0 0.0
    %701 = vmatpush1.msra.mxu0 0.0
    %702 = vmatprep.subr.mxu0 0.0
    %703 = vmatpush1.msra.mxu0 0.0
    %704 = vmatprep.subr.mxu0 0.0
    %705 = vmatpush1.msra.mxu0 0.0
    %706 = vmatprep.subr.mxu0 0.0
    %707 = vmatpush1.msra.mxu0 0.0
    %708 = vmatprep.subr.mxu0 0.0
    %709 = vmatpush1.msra.mxu0 0.0
    %710 = vmatprep.subr.mxu0 0.0
    %711 = vmatpush1.msra.mxu0 0.0
    %712 = vmatprep.subr.mxu0 0.0
    %713 = vmatpush1.msra.mxu0 0.0
    %714 = vmatprep.subr.mxu0 0.0
    %715 = vmatpush1.msra.mxu0 0.0
    %716 = vmatprep.subr.mxu0 0.0
    %717 = vmatpush1.msra.mxu0 0.0
    %718 = vmatprep.mubr.f32.mxu0 0.0
    %719 = vmatmul.mubr.f32.gmra.mrb[0].mxu0 %v637
    %v720 = vpop.f32.mrb[0].mxu0
    %v721 = vadd.f32 0.0, %v720
    %v722 = vpop.f32.mrb[0].mxu0
    %723 = vdwg.mxu0
    %v724 = vadd.f32 %v344, %v721
    %725 = vmatprep.subr.mxu0 0.0
    %726 = vmatpush1.msra.mxu0 %v272
    %727 = vmatprep.subr.mxu0 0.0
    %728 = vmatpush1.msra.mxu0 %v273
    %729 = vmatprep.subr.mxu0 0.0
    %730 = vmatpush1.msra.mxu0 %v274
    %731 = vmatprep.subr.mxu0 0.0
    %732 = vmatpush1.msra.mxu0 %v275
    %733 = vmatprep.subr.mxu0 0.0
    %734 = vmatpush1.msra.mxu0 %v276
    %735 = vmatprep.subr.mxu0 0.0
    %736 = vmatpush1.msra.mxu0 %v277
    %737 = vmatprep.subr.mxu0 0.0
    %738 = vmatpush1.msra.mxu0 %v278
    %739 = vmatprep.subr.mxu0 0.0
    %740 = vmatpush1.msra.mxu0 %v279
    %741 = vmatprep.subr.mxu0 0.0
    %742 = vmatpush1.msra.mxu0 %v280
    %743 = vmatprep.subr.mxu0 0.0
    %744 = vmatpush1.msra.mxu0 %v281
    %745 = vmatprep.subr.mxu0 0.0
    %746 = vmatpush1.msra.mxu0 %v282
    %747 = vmatprep.subr.mxu0 0.0
    %748 = vmatpush1.msra.mxu0 %v283
    %749 = vmatprep.subr.mxu0 0.0
    %750 = vmatpush1.msra.mxu0 %v284
    %751 = vmatprep.subr.mxu0 0.0
    %752 = vmatpush1.msra.mxu0 %v285
    %753 = vmatprep.subr.mxu0 0.0
    %754 = vmatpush1.msra.mxu0 %v286
    %755 = vmatprep.subr.mxu0 0.0
    %756 = vmatpush1.msra.mxu0 %v287
    %757 = vmatprep.subr.mxu0 0.0
    %758 = vmatpush1.msra.mxu0 0.0
    %759 = vmatprep.subr.mxu0 0.0
    %760 = vmatpush1.msra.mxu0 0.0
    %761 = vmatprep.subr.mxu0 0.0
    %762 = vmatpush1.msra.mxu0 0.0
    %763 = vmatprep.subr.mxu0 0.0
    %764 = vmatpush1.msra.mxu0 0.0
    %765 = vmatprep.subr.mxu0 0.0
    %766 = vmatpush1.msra.mxu0 0.0
    %767 = vmatprep.subr.mxu0 0.0
    %768 = vmatpush1.msra.mxu0 0.0
    %769 = vmatprep.subr.mxu0 0.0
    %770 = vmatpush1.msra.mxu0 0.0
    %771 = vmatprep.subr.mxu0 0.0
    %772 = vmatpush1.msra.mxu0 0.0
    %773 = vmatprep.subr.mxu0 0.0
    %774 = vmatpush1.msra.mxu0 0.0
    %775 = vmatprep.subr.mxu0 0.0
    %776 = vmatpush1.msra.mxu0 0.0
    %777 = vmatprep.subr.mxu0 0.0
    %778 = vmatpush1.msra.mxu0 0.0
    %779 = vmatprep.subr.mxu0 0.0
    %780 = vmatpush1.msra.mxu0 0.0
    %781 = vmatprep.subr.mxu0 0.0
    %782 = vmatpush1.msra.mxu0 0.0
    %783 = vmatprep.subr.mxu0 0.0
    %784 = vmatpush1.msra.mxu0 0.0
    %785 = vmatprep.subr.mxu0 0.0
    %786 = vmatpush1.msra.mxu0 0.0
    %787 = vmatprep.subr.mxu0 0.0
    %788 = vmatpush1.msra.mxu0 0.0
    %789 = vmatprep.mubr.f32.mxu0 0.0
    %790 = vmatmul.mubr.f32.gmra.mrb[0].mxu0 %v416
    %v791 = vpop.f32.mrb[0].mxu0
    %v792 = vadd.f32 0.0, %v791
    %v793 = vpop.f32.mrb[0].mxu0
    %794 = vdwg.mxu0
    %v795 = vadd.f32 %v244, %v792
    %v796 = vtanh.pop %v795
    %797 = vmatprep.subr.mxu0 0.0
    %798 = vmatpush1.msra.mxu0 %v288
    %799 = vmatprep.subr.mxu0 0.0
    %800 = vmatpush1.msra.mxu0 %v289
    %801 = vmatprep.subr.mxu0 0.0
    %802 = vmatpush1.msra.mxu0 %v290
    %803 = vmatprep.subr.mxu0 0.0
    %804 = vmatpush1.msra.mxu0 %v291
    %805 = vmatprep.subr.mxu0 0.0
    %806 = vmatpush1.msra.mxu0 %v292
    %807 = vmatprep.subr.mxu0 0.0
    %808 = vmatpush1.msra.mxu0 %v293
    %809 = vmatprep.subr.mxu0 0.0
    %810 = vmatpush1.msra.mxu0 %v294
    %811 = vmatprep.subr.mxu0 0.0
    %812 = vmatpush1.msra.mxu0 %v295
    %813 = vmatprep.subr.mxu0 0.0
    %814 = vmatpush1.msra.mxu0 %v296
    %815 = vmatprep.subr.mxu0 0.0
    %816 = vmatpush1.msra.mxu0 %v297
    %817 = vmatprep.subr.mxu0 0.0
    %818 = vmatpush1.msra.mxu0 %v298
    %819 = vmatprep.subr.mxu0 0.0
    %820 = vmatpush1.msra.mxu0 %v299
    %821 = vmatprep.subr.mxu0 0.0
    %822 = vmatpush1.msra.mxu0 %v300
    %823 = vmatprep.subr.mxu0 0.0
    %824 = vmatpush1.msra.mxu0 %v301
    %825 = vmatprep.subr.mxu0 0.0
    %826 = vmatpush1.msra.mxu0 %v302
    %827 = vmatprep.subr.mxu0 0.0
    %828 = vmatpush1.msra.mxu0 %v303
    %829 = vmatprep.subr.mxu0 0.0
    %830 = vmatpush1.msra.mxu0 0.0
    %831 = vmatprep.subr.mxu0 0.0
    %832 = vmatpush1.msra.mxu0 0.0
    %833 = vmatprep.subr.mxu0 0.0
    %834 = vmatpush1.msra.mxu0 0.0
    %835 = vmatprep.subr.mxu0 0.0
    %836 = vmatpush1.msra.mxu0 0.0
    %837 = vmatprep.subr.mxu0 0.0
    %838 = vmatpush1.msra.mxu0 0.0
    %839 = vmatprep.subr.mxu0 0.0
    %840 = vmatpush1.msra.mxu0 0.0
    %841 = vmatprep.subr.mxu0 0.0
    %842 = vmatpush1.msra.mxu0 0.0
    %843 = vmatprep.subr.mxu0 0.0
    %844 = vmatpush1.msra.mxu0 0.0
    %845 = vmatprep.subr.mxu0 0.0
    %846 = vmatpush1.msra.mxu0 0.0
    %847 = vmatprep.subr.mxu0 0.0
    %848 = vmatpush1.msra.mxu0 0.0
    %849 = vmatprep.subr.mxu0 0.0
    %850 = vmatpush1.msra.mxu0 0.0
    %851 = vmatprep.subr.mxu0 0.0
    %852 = vmatpush1.msra.mxu0 0.0
    %853 = vmatprep.subr.mxu0 0.0
    %854 = vmatpush1.msra.mxu0 0.0
    %855 = vmatprep.subr.mxu0 0.0
    %856 = vmatpush1.msra.mxu0 0.0
    %857 = vmatprep.subr.mxu0 0.0
    %858 = vmatpush1.msra.mxu0 0.0
    %859 = vmatprep.subr.mxu0 0.0
    %860 = vmatpush1.msra.mxu0 0.0
    %861 = vmatprep.mubr.f32.mxu0 0.0
    %862 = vmatmul.mubr.f32.gmra.mrb[0].mxu0 %v488
    %v863 = vpop.f32.mrb[0].mxu0
    %v864 = vadd.f32 0.0, %v863
    %v865 = vpop.f32.mrb[0].mxu0
    %866 = vdwg.mxu0
    %v867 = vadd.f32 %v246, %v864
    %v868 = vtanh.pop %v867
    %v869 = vsub.f32 %v868, %v796
    %870 = vmatprep.subr.mxu0 0.0
    %871 = vmatpush1.msra.mxu0 %v304
    %872 = vmatprep.subr.mxu0 0.0
    %873 = vmatpush1.msra.mxu0 %v305
    %874 = vmatprep.subr.mxu0 0.0
    %875 = vmatpush1.msra.mxu0 %v306
    %876 = vmatprep.subr.mxu0 0.0
    %877 = vmatpush1.msra.mxu0 %v307
    %878 = vmatprep.subr.mxu0 0.0
    %879 = vmatpush1.msra.mxu0 %v308
    %880 = vmatprep.subr.mxu0 0.0
    %881 = vmatpush1.msra.mxu0 %v309
    %882 = vmatprep.subr.mxu0 0.0
    %883 = vmatpush1.msra.mxu0 %v310
    %884 = vmatprep.subr.mxu0 0.0
    %885 = vmatpush1.msra.mxu0 %v311
    %886 = vmatprep.subr.mxu0 0.0
    %887 = vmatpush1.msra.mxu0 %v312
    %888 = vmatprep.subr.mxu0 0.0
    %889 = vmatpush1.msra.mxu0 %v313
    %890 = vmatprep.subr.mxu0 0.0
    %891 = vmatpush1.msra.mxu0 %v314
    %892 = vmatprep.subr.mxu0 0.0
    %893 = vmatpush1.msra.mxu0 %v315
    %894 = vmatprep.subr.mxu0 0.0
    %895 = vmatpush1.msra.mxu0 %v316
    %896 = vmatprep.subr.mxu0 0.0
    %897 = vmatpush1.msra.mxu0 %v317
    %898 = vmatprep.subr.mxu0 0.0
    %899 = vmatpush1.msra.mxu0 %v318
    %900 = vmatprep.subr.mxu0 0.0
    %901 = vmatpush1.msra.mxu0 %v319
    %902 = vmatprep.subr.mxu0 0.0
    %903 = vmatpush1.msra.mxu0 0.0
    %904 = vmatprep.subr.mxu0 0.0
    %905 = vmatpush1.msra.mxu0 0.0
    %906 = vmatprep.subr.mxu0 0.0
    %907 = vmatpush1.msra.mxu0 0.0
    %908 = vmatprep.subr.mxu0 0.0
    %909 = vmatpush1.msra.mxu0 0.0
    %910 = vmatprep.subr.mxu0 0.0
    %911 = vmatpush1.msra.mxu0 0.0
    %912 = vmatprep.subr.mxu0 0.0
    %913 = vmatpush1.msra.mxu0 0.0
    %914 = vmatprep.subr.mxu0 0.0
    %915 = vmatpush1.msra.mxu0 0.0
    %916 = vmatprep.subr.mxu0 0.0
    %917 = vmatpush1.msra.mxu0 0.0
    %918 = vmatprep.subr.mxu0 0.0
    %919 = vmatpush1.msra.mxu0 0.0
    %920 = vmatprep.subr.mxu0 0.0
    %921 = vmatpush1.msra.mxu0 0.0
    %922 = vmatprep.subr.mxu0 0.0
    %923 = vmatpush1.msra.mxu0 0.0
    %924 = vmatprep.subr.mxu0 0.0
    %925 = vmatpush1.msra.mxu0 0.0
    %926 = vmatprep.subr.mxu0 0.0
    %927 = vmatpush1.msra.mxu0 0.0
    %928 = vmatprep.subr.mxu0 0.0
    %929 = vmatpush1.msra.mxu0 0.0
    %930 = vmatprep.subr.mxu0 0.0
    %931 = vmatpush1.msra.mxu0 0.0
    %932 = vmatprep.subr.mxu0 0.0
    %933 = vmatpush1.msra.mxu0 0.0
    %934 = vmatprep.mubr.f32.mxu0 0.0
    %935 = vmatmul.mubr.f32.gmra.mrb[0].mxu0 %v869
    %v936 = vpop.f32.mrb[0].mxu0
    %v937 = vadd.f32 %v494, %v936
    %v938 = vpop.f32.mrb[0].mxu0
    %939 = vdwg.mxu0
    %940 = vmatprep.subr.mxu0 0.0
    %941 = vmatpush1.msra.mxu0 %v320
    %942 = vmatprep.subr.mxu0 0.0
    %943 = vmatpush1.msra.mxu0 %v321
    %944 = vmatprep.subr.mxu0 0.0
    %945 = vmatpush1.msra.mxu0 %v322
    %946 = vmatprep.subr.mxu0 0.0
    %947 = vmatpush1.msra.mxu0 %v323
    %948 = vmatprep.subr.mxu0 0.0
    %949 = vmatpush1.msra.mxu0 %v324
    %950 = vmatprep.subr.mxu0 0.0
    %951 = vmatpush1.msra.mxu0 %v325
    %952 = vmatprep.subr.mxu0 0.0
    %953 = vmatpush1.msra.mxu0 %v326
    %954 = vmatprep.subr.mxu0 0.0
    %955 = vmatpush1.msra.mxu0 %v327
    %956 = vmatprep.subr.mxu0 0.0
    %957 = vmatpush1.msra.mxu0 %v328
    %958 = vmatprep.subr.mxu0 0.0
    %959 = vmatpush1.msra.mxu0 %v329
    %960 = vmatprep.subr.mxu0 0.0
    %961 = vmatpush1.msra.mxu0 %v330
    %962 = vmatprep.subr.mxu0 0.0
    %963 = vmatpush1.msra.mxu0 %v331
    %964 = vmatprep.subr.mxu0 0.0
    %965 = vmatpush1.msra.mxu0 %v332
    %966 = vmatprep.subr.mxu0 0.0
    %967 = vmatpush1.msra.mxu0 %v333
    %968 = vmatprep.subr.mxu0 0.0
    %969 = vmatpush1.msra.mxu0 %v334
    %970 = vmatprep.subr.mxu0 0.0
    %971 = vmatpush1.msra.mxu0 %v335
    %972 = vmatprep.subr.mxu0 0.0
    %973 = vmatpush1.msra.mxu0 0.0
    %974 = vmatprep.subr.mxu0 0.0
    %975 = vmatpush1.msra.mxu0 0.0
    %976 = vmatprep.subr.mxu0 0.0
    %977 = vmatpush1.msra.mxu0 0.0
    %978 = vmatprep.subr.mxu0 0.0
    %979 = vmatpush1.msra.mxu0 0.0
    %980 = vmatprep.subr.mxu0 0.0
    %981 = vmatpush1.msra.mxu0 0.0
    %982 = vmatprep.subr.mxu0 0.0
    %983 = vmatpush1.msra.mxu0 0.0
    %984 = vmatprep.subr.mxu0 0.0
    %985 = vmatpush1.msra.mxu0 0.0
    %986 = vmatprep.subr.mxu0 0.0
    %987 = vmatpush1.msra.mxu0 0.0
    %988 = vmatprep.subr.mxu0 0.0
    %989 = vmatpush1.msra.mxu0 0.0
    %990 = vmatprep.subr.mxu0 0.0
    %991 = vmatpush1.msra.mxu0 0.0
    %992 = vmatprep.subr.mxu0 0.0
    %993 = vmatpush1.msra.mxu0 0.0
    %994 = vmatprep.subr.mxu0 0.0
    %995 = vmatpush1.msra.mxu0 0.0
    %996 = vmatprep.subr.mxu0 0.0
    %997 = vmatpush1.msra.mxu0 0.0
    %998 = vmatprep.subr.mxu0 0.0
    %999 = vmatpush1.msra.mxu0 0.0
    %1000 = vmatprep.subr.mxu0 0.0
    %1001 = vmatpush1.msra.mxu0 0.0
    %1002 = vmatprep.subr.mxu0 0.0
    %1003 = vmatpush1.msra.mxu0 0.0
    %1004 = vmatprep.mubr.f32.mxu0 0.0
    %1005 = vmatmul.mubr.f32.gmra.mrb[0].mxu0 %v637
    %v1006 = vpop.f32.mrb[0].mxu0
    %v1007 = vadd.f32 0.0, %v1006
    %v1008 = vpop.f32.mrb[0].mxu0
    %1009 = vdwg.mxu0
    %v1010 = vadd.f32 %v937, %v1007
    %v1011 = vtanh.pop %v1010
    %s1012 = scalar_lea.vmem %s10, 128
    %v1013 = vld [vmem:[%s1012] sm:$0xff]
    %v1014 = vld [vmem:[%s1012 + $0x8] sm:$0xff]
    %v1015 = vld [vmem:[%s1012 + $0x10] sm:$0xff]
    %v1016 = vld [vmem:[%s1012 + $0x18] sm:$0xff]
    %v1017 = vld [vmem:[%s1012 + $0x20] sm:$0xff]
    %v1018 = vld [vmem:[%s1012 + $0x28] sm:$0xff]
    %v1019 = vld [vmem:[%s1012 + $0x30] sm:$0xff]
    %v1020 = vld [vmem:[%s1012 + $0x38] sm:$0xff]
    %v1021 = vld [vmem:[%s1012 + $0x40] sm:$0xff]
    %v1022 = vld [vmem:[%s1012 + $0x48] sm:$0xff]
    %v1023 = vld [vmem:[%s1012 + $0x50] sm:$0xff]
    %v1024 = vld [vmem:[%s1012 + $0x58] sm:$0xff]
    %v1025 = vld [vmem:[%s1012 + $0x60] sm:$0xff]
    %v1026 = vld [vmem:[%s1012 + $0x68] sm:$0xff]
    %v1027 = vld [vmem:[%s1012 + $0x70] sm:$0xff]
    %v1028 = vld [vmem:[%s1012 + $0x78] sm:$0xff]
    %1029 = vmatprep.subr.mxu0 0.0
    %1030 = vmatpush1.msra.mxu0 %v1013
    %1031 = vmatprep.subr.mxu0 0.0
    %1032 = vmatpush1.msra.mxu0 %v1014
    %1033 = vmatprep.subr.mxu0 0.0
    %1034 = vmatpush1.msra.mxu0 %v1015
    %1035 = vmatprep.subr.mxu0 0.0
    %1036 = vmatpush1.msra.mxu0 %v1016
    %1037 = vmatprep.subr.mxu0 0.0
    %1038 = vmatpush1.msra.mxu0 %v1017
    %1039 = vmatprep.subr.mxu0 0.0
    %1040 = vmatpush1.msra.mxu0 %v1018
    %1041 = vmatprep.subr.mxu0 0.0
    %1042 = vmatpush1.msra.mxu0 %v1019
    %1043 = vmatprep.subr.mxu0 0.0
    %1044 = vmatpush1.msra.mxu0 %v1020
    %1045 = vmatprep.subr.mxu0 0.0
    %1046 = vmatpush1.msra.mxu0 %v1021
    %1047 = vmatprep.subr.mxu0 0.0
    %1048 = vmatpush1.msra.mxu0 %v1022
    %1049 = vmatprep.subr.mxu0 0.0
    %1050 = vmatpush1.msra.mxu0 %v1023
    %1051 = vmatprep.subr.mxu0 0.0
    %1052 = vmatpush1.msra.mxu0 %v1024
    %1053 = vmatprep.subr.mxu0 0.0
    %1054 = vmatpush1.msra.mxu0 %v1025
    %1055 = vmatprep.subr.mxu0 0.0
    %1056 = vmatpush1.msra.mxu0 %v1026
    %1057 = vmatprep.subr.mxu0 0.0
    %1058 = vmatpush1.msra.mxu0 %v1027
    %1059 = vmatprep.subr.mxu0 0.0
    %1060 = vmatpush1.msra.mxu0 %v1028
    %1061 = vmatprep.subr.mxu0 0.0
    %1062 = vmatpush1.msra.mxu0 0.0
    %1063 = vmatprep.subr.mxu0 0.0
    %1064 = vmatpush1.msra.mxu0 0.0
    %1065 = vmatprep.subr.mxu0 0.0
    %1066 = vmatpush1.msra.mxu0 0.0
    %1067 = vmatprep.subr.mxu0 0.0
    %1068 = vmatpush1.msra.mxu0 0.0
    %1069 = vmatprep.subr.mxu0 0.0
    %1070 = vmatpush1.msra.mxu0 0.0
    %1071 = vmatprep.subr.mxu0 0.0
    %1072 = vmatpush1.msra.mxu0 0.0
    %1073 = vmatprep.subr.mxu0 0.0
    %1074 = vmatpush1.msra.mxu0 0.0
    %1075 = vmatprep.subr.mxu0 0.0
    %1076 = vmatpush1.msra.mxu0 0.0
    %1077 = vmatprep.subr.mxu0 0.0
    %1078 = vmatpush1.msra.mxu0 0.0
    %1079 = vmatprep.subr.mxu0 0.0
    %1080 = vmatpush1.msra.mxu0 0.0
    %1081 = vmatprep.subr.mxu0 0.0
    %1082 = vmatpush1.msra.mxu0 0.0
    %1083 = vmatprep.subr.mxu0 0.0
    %1084 = vmatpush1.msra.mxu0 0.0
    %1085 = vmatprep.subr.mxu0 0.0
    %1086 = vmatpush1.msra.mxu0 0.0
    %1087 = vmatprep.subr.mxu0 0.0
    %1088 = vmatpush1.msra.mxu0 0.0
    %1089 = vmatprep.subr.mxu0 0.0
    %1090 = vmatpush1.msra.mxu0 0.0
    %1091 = vmatprep.subr.mxu0 0.0
    %1092 = vmatpush1.msra.mxu0 0.0
    %1093 = vmatprep.mubr.f32.mxu0 0.0
    %1094 = vmatmul.mubr.f32.gmra.mrb[0].mxu0 %v1011
    %v1095 = vpop.f32.mrb[0].mxu0
    %v1096 = vadd.f32 0.0, %v1095
    %v1097 = vpop.f32.mrb[0].mxu0
    %1098 = vdwg.mxu0
    %v1099 = vadd.f32 %v724, %v1096
    %1100 = vmatprep.subr.mxu0 0.0
    %1101 = vmatpush1.msra.mxu0 %v272
    %1102 = vmatprep.subr.mxu0 0.0
    %1103 = vmatpush1.msra.mxu0 %v273
    %1104 = vmatprep.subr.mxu0 0.0
    %1105 = vmatpush1.msra.mxu0 %v274
    %1106 = vmatprep.subr.mxu0 0.0
    %1107 = vmatpush1.msra.mxu0 %v275
    %1108 = vmatprep.subr.mxu0 0.0
    %1109 = vmatpush1.msra.mxu0 %v276
    %1110 = vmatprep.subr.mxu0 0.0
    %1111 = vmatpush1.msra.mxu0 %v277
    %1112 = vmatprep.subr.mxu0 0.0
    %1113 = vmatpush1.msra.mxu0 %v278
    %1114 = vmatprep.subr.mxu0 0.0
    %1115 = vmatpush1.msra.mxu0 %v279
    %1116 = vmatprep.subr.mxu0 0.0
    %1117 = vmatpush1.msra.mxu0 %v280
    %1118 = vmatprep.subr.mxu0 0.0
    %1119 = vmatpush1.msra.mxu0 %v281
    %1120 = vmatprep.subr.mxu0 0.0
    %1121 = vmatpush1.msra.mxu0 %v282
    %1122 = vmatprep.subr.mxu0 0.0
    %1123 = vmatpush1.msra.mxu0 %v283
    %1124 = vmatprep.subr.mxu0 0.0
    %1125 = vmatpush1.msra.mxu0 %v284
    %1126 = vmatprep.subr.mxu0 0.0
    %1127 = vmatpush1.msra.mxu0 %v285
    %1128 = vmatprep.subr.mxu0 0.0
    %1129 = vmatpush1.msra.mxu0 %v286
    %1130 = vmatprep.subr.mxu0 0.0
    %1131 = vmatpush1.msra.mxu0 %v287
    %1132 = vmatprep.subr.mxu0 0.0
    %1133 = vmatpush1.msra.mxu0 0.0
    %1134 = vmatprep.subr.mxu0 0.0
    %1135 = vmatpush1.msra.mxu0 0.0
    %1136 = vmatprep.subr.mxu0 0.0
    %1137 = vmatpush1.msra.mxu0 0.0
    %1138 = vmatprep.subr.mxu0 0.0
    %1139 = vmatpush1.msra.mxu0 0.0
    %1140 = vmatprep.subr.mxu0 0.0
    %1141 = vmatpush1.msra.mxu0 0.0
    %1142 = vmatprep.subr.mxu0 0.0
    %1143 = vmatpush1.msra.mxu0 0.0
    %1144 = vmatprep.subr.mxu0 0.0
    %1145 = vmatpush1.msra.mxu0 0.0
    %1146 = vmatprep.subr.mxu0 0.0
    %1147 = vmatpush1.msra.mxu0 0.0
    %1148 = vmatprep.subr.mxu0 0.0
    %1149 = vmatpush1.msra.mxu0 0.0
    %1150 = vmatprep.subr.mxu0 0.0
    %1151 = vmatpush1.msra.mxu0 0.0
    %1152 = vmatprep.subr.mxu0 0.0
    %1153 = vmatpush1.msra.mxu0 0.0
    %1154 = vmatprep.subr.mxu0 0.0
    %1155 = vmatpush1.msra.mxu0 0.0
    %1156 = vmatprep.subr.mxu0 0.0
    %1157 = vmatpush1.msra.mxu0 0.0
    %1158 = vmatprep.subr.mxu0 0.0
    %1159 = vmatpush1.msra.mxu0 0.0
    %1160 = vmatprep.subr.mxu0 0.0
    %1161 = vmatpush1.msra.mxu0 0.0
    %1162 = vmatprep.subr.mxu0 0.0
    %1163 = vmatpush1.msra.mxu0 0.0
    %1164 = vmatprep.mubr.f32.mxu0 0.0
    %1165 = vmatmul.mubr.f32.gmra.mrb[0].mxu0 %v796
    %v1166 = vpop.f32.mrb[0].mxu0
    %v1167 = vadd.f32 0.0, %v1166
    %v1168 = vpop.f32.mrb[0].mxu0
    %1169 = vdwg.mxu0
    %v1170 = vadd.f32 %v250, %v1167
    %v1171 = vtanh.pop %v1170
    %1172 = vmatprep.subr.mxu0 0.0
    %1173 = vmatpush1.msra.mxu0 %v288
    %1174 = vmatprep.subr.mxu0 0.0
    %1175 = vmatpush1.msra.mxu0 %v289
    %1176 = vmatprep.subr.mxu0 0.0
    %1177 = vmatpush1.msra.mxu0 %v290
    %1178 = vmatprep.subr.mxu0 0.0
    %1179 = vmatpush1.msra.mxu0 %v291
    %1180 = vmatprep.subr.mxu0 0.0
    %1181 = vmatpush1.msra.mxu0 %v292
    %1182 = vmatprep.subr.mxu0 0.0
    %1183 = vmatpush1.msra.mxu0 %v293
    %1184 = vmatprep.subr.mxu0 0.0
    %1185 = vmatpush1.msra.mxu0 %v294
    %1186 = vmatprep.subr.mxu0 0.0
    %1187 = vmatpush1.msra.mxu0 %v295
    %1188 = vmatprep.subr.mxu0 0.0
    %1189 = vmatpush1.msra.mxu0 %v296
    %1190 = vmatprep.subr.mxu0 0.0
    %1191 = vmatpush1.msra.mxu0 %v297
    %1192 = vmatprep.subr.mxu0 0.0
    %1193 = vmatpush1.msra.mxu0 %v298
    %1194 = vmatprep.subr.mxu0 0.0
    %1195 = vmatpush1.msra.mxu0 %v299
    %1196 = vmatprep.subr.mxu0 0.0
    %1197 = vmatpush1.msra.mxu0 %v300
    %1198 = vmatprep.subr.mxu0 0.0
    %1199 = vmatpush1.msra.mxu0 %v301
    %1200 = vmatprep.subr.mxu0 0.0
    %1201 = vmatpush1.msra.mxu0 %v302
    %1202 = vmatprep.subr.mxu0 0.0
    %1203 = vmatpush1.msra.mxu0 %v303
    %1204 = vmatprep.subr.mxu0 0.0
    %1205 = vmatpush1.msra.mxu0 0.0
    %1206 = vmatprep.subr.mxu0 0.0
    %1207 = vmatpush1.msra.mxu0 0.0
    %1208 = vmatprep.subr.mxu0 0.0
    %1209 = vmatpush1.msra.mxu0 0.0
    %1210 = vmatprep.subr.mxu0 0.0
    %1211 = vmatpush1.msra.mxu0 0.0
    %1212 = vmatprep.subr.mxu0 0.0
    %1213 = vmatpush1.msra.mxu0 0.0
    %1214 = vmatprep.subr.mxu0 0.0
    %1215 = vmatpush1.msra.mxu0 0.0
    %1216 = vmatprep.subr.mxu0 0.0
    %1217 = vmatpush1.msra.mxu0 0.0
    %1218 = vmatprep.subr.mxu0 0.0
    %1219 = vmatpush1.msra.mxu0 0.0
    %1220 = vmatprep.subr.mxu0 0.0
    %1221 = vmatpush1.msra.mxu0 0.0
    %1222 = vmatprep.subr.mxu0 0.0
    %1223 = vmatpush1.msra.mxu0 0.0
    %1224 = vmatprep.subr.mxu0 0.0
    %1225 = vmatpush1.msra.mxu0 0.0
    %1226 = vmatprep.subr.mxu0 0.0
    %1227 = vmatpush1.msra.mxu0 0.0
    %1228 = vmatprep.subr.mxu0 0.0
    %1229 = vmatpush1.msra.mxu0 0.0
    %1230 = vmatprep.subr.mxu0 0.0
    %1231 = vmatpush1.msra.mxu0 0.0
    %1232 = vmatprep.subr.mxu0 0.0
    %1233 = vmatpush1.msra.mxu0 0.0
    %1234 = vmatprep.subr.mxu0 0.0
    %1235 = vmatpush1.msra.mxu0 0.0
    %1236 = vmatprep.mubr.f32.mxu0 0.0
    %1237 = vmatmul.mubr.f32.gmra.mrb[0].mxu0 %v868
    %v1238 = vpop.f32.mrb[0].mxu0
    %v1239 = vadd.f32 0.0, %v1238
    %v1240 = vpop.f32.mrb[0].mxu0
    %1241 = vdwg.mxu0
    %v1242 = vadd.f32 %v252, %v1239
    %v1243 = vtanh.pop %v1242
    %v1244 = vsub.f32 %v1243, %v1171
    %1245 = vmatprep.subr.mxu0 0.0
    %1246 = vmatpush1.msra.mxu0 %v304
    %1247 = vmatprep.subr.mxu0 0.0
    %1248 = vmatpush1.msra.mxu0 %v305
    %1249 = vmatprep.subr.mxu0 0.0
    %1250 = vmatpush1.msra.mxu0 %v306
    %1251 = vmatprep.subr.mxu0 0.0
    %1252 = vmatpush1.msra.mxu0 %v307
    %1253 = vmatprep.subr.mxu0 0.0
    %1254 = vmatpush1.msra.mxu0 %v308
    %1255 = vmatprep.subr.mxu0 0.0
    %1256 = vmatpush1.msra.mxu0 %v309
    %1257 = vmatprep.subr.mxu0 0.0
    %1258 = vmatpush1.msra.mxu0 %v310
    %1259 = vmatprep.subr.mxu0 0.0
    %1260 = vmatpush1.msra.mxu0 %v311
    %1261 = vmatprep.subr.mxu0 0.0
    %1262 = vmatpush1.msra.mxu0 %v312
    %1263 = vmatprep.subr.mxu0 0.0
    %1264 = vmatpush1.msra.mxu0 %v313
    %1265 = vmatprep.subr.mxu0 0.0
    %1266 = vmatpush1.msra.mxu0 %v314
    %1267 = vmatprep.subr.mxu0 0.0
    %1268 = vmatpush1.msra.mxu0 %v315
    %1269 = vmatprep.subr.mxu0 0.0
    %1270 = vmatpush1.msra.mxu0 %v316
    %1271 = vmatprep.subr.mxu0 0.0
    %1272 = vmatpush1.msra.mxu0 %v317
    %1273 = vmatprep.subr.mxu0 0.0
    %1274 = vmatpush1.msra.mxu0 %v318
    %1275 = vmatprep.subr.mxu0 0.0
    %1276 = vmatpush1.msra.mxu0 %v319
    %1277 = vmatprep.subr.mxu0 0.0
    %1278 = vmatpush1.msra.mxu0 0.0
    %1279 = vmatprep.subr.mxu0 0.0
    %1280 = vmatpush1.msra.mxu0 0.0
    %1281 = vmatprep.subr.mxu0 0.0
    %1282 = vmatpush1.msra.mxu0 0.0
    %1283 = vmatprep.subr.mxu0 0.0
    %1284 = vmatpush1.msra.mxu0 0.0
    %1285 = vmatprep.subr.mxu0 0.0
    %1286 = vmatpush1.msra.mxu0 0.0
    %1287 = vmatprep.subr.mxu0 0.0
    %1288 = vmatpush1.msra.mxu0 0.0
    %1289 = vmatprep.subr.mxu0 0.0
    %1290 = vmatpush1.msra.mxu0 0.0
    %1291 = vmatprep.subr.mxu0 0.0
    %1292 = vmatpush1.msra.mxu0 0.0
    %1293 = vmatprep.subr.mxu0 0.0
    %1294 = vmatpush1.msra.mxu0 0.0
    %1295 = vmatprep.subr.mxu0 0.0
    %1296 = vmatpush1.msra.mxu0 0.0
    %1297 = vmatprep.subr.mxu0 0.0
    %1298 = vmatpush1.msra.mxu0 0.0
    %1299 = vmatprep.subr.mxu0 0.0
    %1300 = vmatpush1.msra.mxu0 0.0
    %1301 = vmatprep.subr.mxu0 0.0
    %1302 = vmatpush1.msra.mxu0 0.0
    %1303 = vmatprep.subr.mxu0 0.0
    %1304 = vmatpush1.msra.mxu0 0.0
    %1305 = vmatprep.subr.mxu0 0.0
    %1306 = vmatpush1.msra.mxu0 0.0
    %1307 = vmatprep.subr.mxu0 0.0
    %1308 = vmatpush1.msra.mxu0 0.0
    %1309 = vmatprep.mubr.f32.mxu0 0.0
    %1310 = vmatmul.mubr.f32.gmra.mrb[0].mxu0 %v1244
    %v1311 = vpop.f32.mrb[0].mxu0
    %v1312 = vadd.f32 %v494, %v1311
    %v1313 = vpop.f32.mrb[0].mxu0
    %1314 = vdwg.mxu0
    %1315 = vmatprep.subr.mxu0 0.0
    %1316 = vmatpush1.msra.mxu0 %v320
    %1317 = vmatprep.subr.mxu0 0.0
    %1318 = vmatpush1.msra.mxu0 %v321
    %1319 = vmatprep.subr.mxu0 0.0
    %1320 = vmatpush1.msra.mxu0 %v322
    %1321 = vmatprep.subr.mxu0 0.0
    %1322 = vmatpush1.msra.mxu0 %v323
    %1323 = vmatprep.subr.mxu0 0.0
    %1324 = vmatpush1.msra.mxu0 %v324
    %1325 = vmatprep.subr.mxu0 0.0
    %1326 = vmatpush1.msra.mxu0 %v325
    %1327 = vmatprep.subr.mxu0 0.0
    %1328 = vmatpush1.msra.mxu0 %v326
    %1329 = vmatprep.subr.mxu0 0.0
    %1330 = vmatpush1.msra.mxu0 %v327
    %1331 = vmatprep.subr.mxu0 0.0
    %1332 = vmatpush1.msra.mxu0 %v328
    %1333 = vmatprep.subr.mxu0 0.0
    %1334 = vmatpush1.msra.mxu0 %v329
    %1335 = vmatprep.subr.mxu0 0.0
    %1336 = vmatpush1.msra.mxu0 %v330
    %1337 = vmatprep.subr.mxu0 0.0
    %1338 = vmatpush1.msra.mxu0 %v331
    %1339 = vmatprep.subr.mxu0 0.0
    %1340 = vmatpush1.msra.mxu0 %v332
    %1341 = vmatprep.subr.mxu0 0.0
    %1342 = vmatpush1.msra.mxu0 %v333
    %1343 = vmatprep.subr.mxu0 0.0
    %1344 = vmatpush1.msra.mxu0 %v334
    %1345 = vmatprep.subr.mxu0 0.0
    %1346 = vmatpush1.msra.mxu0 %v335
    %1347 = vmatprep.subr.mxu0 0.0
    %1348 = vmatpush1.msra.mxu0 0.0
    %1349 = vmatprep.subr.mxu0 0.0
    %1350 = vmatpush1.msra.mxu0 0.0
    %1351 = vmatprep.subr.mxu0 0.0
    %1352 = vmatpush1.msra.mxu0 0.0
    %1353 = vmatprep.subr.mxu0 0.0
    %1354 = vmatpush1.msra.mxu0 0.0
    %1355 = vmatprep.subr.mxu0 0.0
    %1356 = vmatpush1.msra.mxu0 0.0
    %1357 = vmatprep.subr.mxu0 0.0
    %1358 = vmatpush1.msra.mxu0 0.0
    %1359 = vmatprep.subr.mxu0 0.0
    %1360 = vmatpush1.msra.mxu0 0.0
    %1361 = vmatprep.subr.mxu0 0.0
    %1362 = vmatpush1.msra.mxu0 0.0
    %1363 = vmatprep.subr.mxu0 0.0
    %1364 = vmatpush1.msra.mxu0 0.0
    %1365 = vmatprep.subr.mxu0 0.0
    %1366 = vmatpush1.msra.mxu0 0.0
    %1367 = vmatprep.subr.mxu0 0.0
    %1368 = vmatpush1.msra.mxu0 0.0
    %1369 = vmatprep.subr.mxu0 0.0
    %1370 = vmatpush1.msra.mxu0 0.0
    %1371 = vmatprep.subr.mxu0 0.0
    %1372 = vmatpush1.msra.mxu0 0.0
    %1373 = vmatprep.subr.mxu0 0.0
    %1374 = vmatpush1.msra.mxu0 0.0
    %1375 = vmatprep.subr.mxu0 0.0
    %1376 = vmatpush1.msra.mxu0 0.0
    %1377 = vmatprep.subr.mxu0 0.0
    %1378 = vmatpush1.msra.mxu0 0.0
    %1379 = vmatprep.mubr.f32.mxu0 0.0
    %1380 = vmatmul.mubr.f32.gmra.mrb[0].mxu0 %v1011
    %v1381 = vpop.f32.mrb[0].mxu0
    %v1382 = vadd.f32 0.0, %v1381
    %v1383 = vpop.f32.mrb[0].mxu0
    %1384 = vdwg.mxu0
    %v1385 = vadd.f32 %v1312, %v1382
    %v1386 = vtanh.pop %v1385
    %s1387 = scalar_lea.vmem %s10, 256
    %v1388 = vld [vmem:[%s1387] sm:$0xff]
    %v1389 = vld [vmem:[%s1387 + $0x8] sm:$0xff]
    %v1390 = vld [vmem:[%s1387 + $0x10] sm:$0xff]
    %v1391 = vld [vmem:[%s1387 + $0x18] sm:$0xff]
    %v1392 = vld [vmem:[%s1387 + $0x20] sm:$0xff]
    %v1393 = vld [vmem:[%s1387 + $0x28] sm:$0xff]
    %v1394 = vld [vmem:[%s1387 + $0x30] sm:$0xff]
    %v1395 = vld [vmem:[%s1387 + $0x38] sm:$0xff]
    %v1396 = vld [vmem:[%s1387 + $0x40] sm:$0xff]
    %v1397 = vld [vmem:[%s1387 + $0x48] sm:$0xff]
    %v1398 = vld [vmem:[%s1387 + $0x50] sm:$0xff]
    %v1399 = vld [vmem:[%s1387 + $0x58] sm:$0xff]
    %v1400 = vld [vmem:[%s1387 + $0x60] sm:$0xff]
    %v1401 = vld [vmem:[%s1387 + $0x68] sm:$0xff]
    %v1402 = vld [vmem:[%s1387 + $0x70] sm:$0xff]
    %v1403 = vld [vmem:[%s1387 + $0x78] sm:$0xff]
    %1404 = vmatprep.subr.mxu0 0.0
    %1405 = vmatpush1.msra.mxu0 %v1388
    %1406 = vmatprep.subr.mxu0 0.0
    %1407 = vmatpush1.msra.mxu0 %v1389
    %1408 = vmatprep.subr.mxu0 0.0
    %1409 = vmatpush1.msra.mxu0 %v1390
    %1410 = vmatprep.subr.mxu0 0.0
    %1411 = vmatpush1.msra.mxu0 %v1391
    %1412 = vmatprep.subr.mxu0 0.0
    %1413 = vmatpush1.msra.mxu0 %v1392
    %1414 = vmatprep.subr.mxu0 0.0
    %1415 = vmatpush1.msra.mxu0 %v1393
    %1416 = vmatprep.subr.mxu0 0.0
    %1417 = vmatpush1.msra.mxu0 %v1394
    %1418 = vmatprep.subr.mxu0 0.0
    %1419 = vmatpush1.msra.mxu0 %v1395
    %1420 = vmatprep.subr.mxu0 0.0
    %1421 = vmatpush1.msra.mxu0 %v1396
    %1422 = vmatprep.subr.mxu0 0.0
    %1423 = vmatpush1.msra.mxu0 %v1397
    %1424 = vmatprep.subr.mxu0 0.0
    %1425 = vmatpush1.msra.mxu0 %v1398
    %1426 = vmatprep.subr.mxu0 0.0
    %1427 = vmatpush1.msra.mxu0 %v1399
    %1428 = vmatprep.subr.mxu0 0.0
    %1429 = vmatpush1.msra.mxu0 %v1400
    %1430 = vmatprep.subr.mxu0 0.0
    %1431 = vmatpush1.msra.mxu0 %v1401
    %1432 = vmatprep.subr.mxu0 0.0
    %1433 = vmatpush1.msra.mxu0 %v1402
    %1434 = vmatprep.subr.mxu0 0.0
    %1435 = vmatpush1.msra.mxu0 %v1403
    %1436 = vmatprep.subr.mxu0 0.0
    %1437 = vmatpush1.msra.mxu0 0.0
    %1438 = vmatprep.subr.mxu0 0.0
    %1439 = vmatpush1.msra.mxu0 0.0
    %1440 = vmatprep.subr.mxu0 0.0
    %1441 = vmatpush1.msra.mxu0 0.0
    %1442 = vmatprep.subr.mxu0 0.0
    %1443 = vmatpush1.msra.mxu0 0.0
    %1444 = vmatprep.subr.mxu0 0.0
    %1445 = vmatpush1.msra.mxu0 0.0
    %1446 = vmatprep.subr.mxu0 0.0
    %1447 = vmatpush1.msra.mxu0 0.0
    %1448 = vmatprep.subr.mxu0 0.0
    %1449 = vmatpush1.msra.mxu0 0.0
    %1450 = vmatprep.subr.mxu0 0.0
    %1451 = vmatpush1.msra.mxu0 0.0
    %1452 = vmatprep.subr.mxu0 0.0
    %1453 = vmatpush1.msra.mxu0 0.0
    %1454 = vmatprep.subr.mxu0 0.0
    %1455 = vmatpush1.msra.mxu0 0.0
    %1456 = vmatprep.subr.mxu0 0.0
    %1457 = vmatpush1.msra.mxu0 0.0
    %1458 = vmatprep.subr.mxu0 0.0
    %1459 = vmatpush1.msra.mxu0 0.0
    %1460 = vmatprep.subr.mxu0 0.0
    %1461 = vmatpush1.msra.mxu0 0.0
    %1462 = vmatprep.subr.mxu0 0.0
    %1463 = vmatpush1.msra.mxu0 0.0
    %1464 = vmatprep.subr.mxu0 0.0
    %1465 = vmatpush1.msra.mxu0 0.0
    %1466 = vmatprep.subr.mxu0 0.0
    %1467 = vmatpush1.msra.mxu0 0.0
    %1468 = vmatprep.mubr.f32.mxu0 0.0
    %1469 = vmatmul.mubr.f32.gmra.mrb[0].mxu0 %v1386
    %v1470 = vpop.f32.mrb[0].mxu0
    %v1471 = vadd.f32 0.0, %v1470
    %v1472 = vpop.f32.mrb[0].mxu0
    %1473 = vdwg.mxu0
    %v1474 = vadd.f32 %v1099, %v1471
    %1475 = vmatprep.subr.mxu0 0.0
    %1476 = vmatpush1.msra.mxu0 %v272
    %1477 = vmatprep.subr.mxu0 0.0
    %1478 = vmatpush1.msra.mxu0 %v273
    %1479 = vmatprep.subr.mxu0 0.0
    %1480 = vmatpush1.msra.mxu0 %v274
    %1481 = vmatprep.subr.mxu0 0.0
    %1482 = vmatpush1.msra.mxu0 %v275
    %1483 = vmatprep.subr.mxu0 0.0
    %1484 = vmatpush1.msra.mxu0 %v276
    %1485 = vmatprep.subr.mxu0 0.0
    %1486 = vmatpush1.msra.mxu0 %v277
    %1487 = vmatprep.subr.mxu0 0.0
    %1488 = vmatpush1.msra.mxu0 %v278
    %1489 = vmatprep.subr.mxu0 0.0
    %1490 = vmatpush1.msra.mxu0 %v279
    %1491 = vmatprep.subr.mxu0 0.0
    %1492 = vmatpush1.msra.mxu0 %v280
    %1493 = vmatprep.subr.mxu0 0.0
    %1494 = vmatpush1.msra.mxu0 %v281
    %1495 = vmatprep.subr.mxu0 0.0
    %1496 = vmatpush1.msra.mxu0 %v282
    %1497 = vmatprep.subr.mxu0 0.0
    %1498 = vmatpush1.msra.mxu0 %v283
    %1499 = vmatprep.subr.mxu0 0.0
    %1500 = vmatpush1.msra.mxu0 %v284
    %1501 = vmatprep.subr.mxu0 0.0
    %1502 = vmatpush1.msra.mxu0 %v285
    %1503 = vmatprep.subr.mxu0 0.0
    %1504 = vmatpush1.msra.mxu0 %v286
    %1505 = vmatprep.subr.mxu0 0.0
    %1506 = vmatpush1.msra.mxu0 %v287
    %1507 = vmatprep.subr.mxu0 0.0
    %1508 = vmatpush1.msra.mxu0 0.0
    %1509 = vmatprep.subr.mxu0 0.0
    %1510 = vmatpush1.msra.mxu0 0.0
    %1511 = vmatprep.subr.mxu0 0.0
    %1512 = vmatpush1.msra.mxu0 0.0
    %1513 = vmatprep.subr.mxu0 0.0
    %1514 = vmatpush1.msra.mxu0 0.0
    %1515 = vmatprep.subr.mxu0 0.0
    %1516 = vmatpush1.msra.mxu0 0.0
    %1517 = vmatprep.subr.mxu0 0.0
    %1518 = vmatpush1.msra.mxu0 0.0
    %1519 = vmatprep.subr.mxu0 0.0
    %1520 = vmatpush1.msra.mxu0 0.0
    %1521 = vmatprep.subr.mxu0 0.0
    %1522 = vmatpush1.msra.mxu0 0.0
    %1523 = vmatprep.subr.mxu0 0.0
    %1524 = vmatpush1.msra.mxu0 0.0
    %1525 = vmatprep.subr.mxu0 0.0
    %1526 = vmatpush1.msra.mxu0 0.0
    %1527 = vmatprep.subr.mxu0 0.0
    %1528 = vmatpush1.msra.mxu0 0.0
    %1529 = vmatprep.subr.mxu0 0.0
    %1530 = vmatpush1.msra.mxu0 0.0
    %1531 = vmatprep.subr.mxu0 0.0
    %1532 = vmatpush1.msra.mxu0 0.0
    %1533 = vmatprep.subr.mxu0 0.0
    %1534 = vmatpush1.msra.mxu0 0.0
    %1535 = vmatprep.subr.mxu0 0.0
    %1536 = vmatpush1.msra.mxu0 0.0
    %1537 = vmatprep.subr.mxu0 0.0
    %1538 = vmatpush1.msra.mxu0 0.0
    %1539 = vmatprep.mubr.f32.mxu0 0.0
    %1540 = vmatmul.mubr.f32.gmra.mrb[0].mxu0 %v1171
    %v1541 = vpop.f32.mrb[0].mxu0
    %v1542 = vadd.f32 0.0, %v1541
    %v1543 = vpop.f32.mrb[0].mxu0
    %1544 = vdwg.mxu0
    %v1545 = vadd.f32 %v256, %v1542
    %v1546 = vtanh.pop %v1545
    %1547 = vmatprep.subr.mxu0 0.0
    %1548 = vmatpush1.msra.mxu0 %v288
    %1549 = vmatprep.subr.mxu0 0.0
    %1550 = vmatpush1.msra.mxu0 %v289
    %1551 = vmatprep.subr.mxu0 0.0
    %1552 = vmatpush1.msra.mxu0 %v290
    %1553 = vmatprep.subr.mxu0 0.0
    %1554 = vmatpush1.msra.mxu0 %v291
    %1555 = vmatprep.subr.mxu0 0.0
    %1556 = vmatpush1.msra.mxu0 %v292
    %1557 = vmatprep.subr.mxu0 0.0
    %1558 = vmatpush1.msra.mxu0 %v293
    %1559 = vmatprep.subr.mxu0 0.0
    %1560 = vmatpush1.msra.mxu0 %v294
    %1561 = vmatprep.subr.mxu0 0.0
    %1562 = vmatpush1.msra.mxu0 %v295
    %1563 = vmatprep.subr.mxu0 0.0
    %1564 = vmatpush1.msra.mxu0 %v296
    %1565 = vmatprep.subr.mxu0 0.0
    %1566 = vmatpush1.msra.mxu0 %v297
    %1567 = vmatprep.subr.mxu0 0.0
    %1568 = vmatpush1.msra.mxu0 %v298
    %1569 = vmatprep.subr.mxu0 0.0
    %1570 = vmatpush1.msra.mxu0 %v299
    %1571 = vmatprep.subr.mxu0 0.0
    %1572 = vmatpush1.msra.mxu0 %v300
    %1573 = vmatprep.subr.mxu0 0.0
    %1574 = vmatpush1.msra.mxu0 %v301
    %1575 = vmatprep.subr.mxu0 0.0
    %1576 = vmatpush1.msra.mxu0 %v302
    %1577 = vmatprep.subr.mxu0 0.0
    %1578 = vmatpush1.msra.mxu0 %v303
    %1579 = vmatprep.subr.mxu0 0.0
    %1580 = vmatpush1.msra.mxu0 0.0
    %1581 = vmatprep.subr.mxu0 0.0
    %1582 = vmatpush1.msra.mxu0 0.0
    %1583 = vmatprep.subr.mxu0 0.0
    %1584 = vmatpush1.msra.mxu0 0.0
    %1585 = vmatprep.subr.mxu0 0.0
    %1586 = vmatpush1.msra.mxu0 0.0
    %1587 = vmatprep.subr.mxu0 0.0
    %1588 = vmatpush1.msra.mxu0 0.0
    %1589 = vmatprep.subr.mxu0 0.0
    %1590 = vmatpush1.msra.mxu0 0.0
    %1591 = vmatprep.subr.mxu0 0.0
    %1592 = vmatpush1.msra.mxu0 0.0
    %1593 = vmatprep.subr.mxu0 0.0
    %1594 = vmatpush1.msra.mxu0 0.0
    %1595 = vmatprep.subr.mxu0 0.0
    %1596 = vmatpush1.msra.mxu0 0.0
    %1597 = vmatprep.subr.mxu0 0.0
    %1598 = vmatpush1.msra.mxu0 0.0
    %1599 = vmatprep.subr.mxu0 0.0
    %1600 = vmatpush1.msra.mxu0 0.0
    %1601 = vmatprep.subr.mxu0 0.0
    %1602 = vmatpush1.msra.mxu0 0.0
    %1603 = vmatprep.subr.mxu0 0.0
    %1604 = vmatpush1.msra.mxu0 0.0
    %1605 = vmatprep.subr.mxu0 0.0
    %1606 = vmatpush1.msra.mxu0 0.0
    %1607 = vmatprep.subr.mxu0 0.0
    %1608 = vmatpush1.msra.mxu0 0.0
    %1609 = vmatprep.subr.mxu0 0.0
    %1610 = vmatpush1.msra.mxu0 0.0
    %1611 = vmatprep.mubr.f32.mxu0 0.0
    %1612 = vmatmul.mubr.f32.gmra.mrb[0].mxu0 %v1243
    %v1613 = vpop.f32.mrb[0].mxu0
    %v1614 = vadd.f32 0.0, %v1613
    %v1615 = vpop.f32.mrb[0].mxu0
    %1616 = vdwg.mxu0
    %v1617 = vadd.f32 %v258, %v1614
    %v1618 = vtanh.pop %v1617
    %v1619 = vsub.f32 %v1618, %v1546
    %1620 = vmatprep.subr.mxu0 0.0
    %1621 = vmatpush1.msra.mxu0 %v304
    %1622 = vmatprep.subr.mxu0 0.0
    %1623 = vmatpush1.msra.mxu0 %v305
    %1624 = vmatprep.subr.mxu0 0.0
    %1625 = vmatpush1.msra.mxu0 %v306
    %1626 = vmatprep.subr.mxu0 0.0
    %1627 = vmatpush1.msra.mxu0 %v307
    %1628 = vmatprep.subr.mxu0 0.0
    %1629 = vmatpush1.msra.mxu0 %v308
    %1630 = vmatprep.subr.mxu0 0.0
    %1631 = vmatpush1.msra.mxu0 %v309
    %1632 = vmatprep.subr.mxu0 0.0
    %1633 = vmatpush1.msra.mxu0 %v310
    %1634 = vmatprep.subr.mxu0 0.0
    %1635 = vmatpush1.msra.mxu0 %v311
    %1636 = vmatprep.subr.mxu0 0.0
    %1637 = vmatpush1.msra.mxu0 %v312
    %1638 = vmatprep.subr.mxu0 0.0
    %1639 = vmatpush1.msra.mxu0 %v313
    %1640 = vmatprep.subr.mxu0 0.0
    %1641 = vmatpush1.msra.mxu0 %v314
    %1642 = vmatprep.subr.mxu0 0.0
    %1643 = vmatpush1.msra.mxu0 %v315
    %1644 = vmatprep.subr.mxu0 0.0
    %1645 = vmatpush1.msra.mxu0 %v316
    %1646 = vmatprep.subr.mxu0 0.0
    %1647 = vmatpush1.msra.mxu0 %v317
    %1648 = vmatprep.subr.mxu0 0.0
    %1649 = vmatpush1.msra.mxu0 %v318
    %1650 = vmatprep.subr.mxu0 0.0
    %1651 = vmatpush1.msra.mxu0 %v319
    %1652 = vmatprep.subr.mxu0 0.0
    %1653 = vmatpush1.msra.mxu0 0.0
    %1654 = vmatprep.subr.mxu0 0.0
    %1655 = vmatpush1.msra.mxu0 0.0
    %1656 = vmatprep.subr.mxu0 0.0
    %1657 = vmatpush1.msra.mxu0 0.0
    %1658 = vmatprep.subr.mxu0 0.0
    %1659 = vmatpush1.msra.mxu0 0.0
    %1660 = vmatprep.subr.mxu0 0.0
    %1661 = vmatpush1.msra.mxu0 0.0
    %1662 = vmatprep.subr.mxu0 0.0
    %1663 = vmatpush1.msra.mxu0 0.0
    %1664 = vmatprep.subr.mxu0 0.0
    %1665 = vmatpush1.msra.mxu0 0.0
    %1666 = vmatprep.subr.mxu0 0.0
    %1667 = vmatpush1.msra.mxu0 0.0
    %1668 = vmatprep.subr.mxu0 0.0
    %1669 = vmatpush1.msra.mxu0 0.0
    %1670 = vmatprep.subr.mxu0 0.0
    %1671 = vmatpush1.msra.mxu0 0.0
    %1672 = vmatprep.subr.mxu0 0.0
    %1673 = vmatpush1.msra.mxu0 0.0
    %1674 = vmatprep.subr.mxu0 0.0
    %1675 = vmatpush1.msra.mxu0 0.0
    %1676 = vmatprep.subr.mxu0 0.0
    %1677 = vmatpush1.msra.mxu0 0.0
    %1678 = vmatprep.subr.mxu0 0.0
    %1679 = vmatpush1.msra.mxu0 0.0
    %1680 = vmatprep.subr.mxu0 0.0
    %1681 = vmatpush1.msra.mxu0 0.0
    %1682 = vmatprep.subr.mxu0 0.0
    %1683 = vmatpush1.msra.mxu0 0.0
    %1684 = vmatprep.mubr.f32.mxu0 0.0
    %1685 = vmatmul.mubr.f32.gmra.mrb[0].mxu0 %v1619
    %v1686 = vpop.f32.mrb[0].mxu0
    %v1687 = vadd.f32 %v494, %v1686
    %v1688 = vpop.f32.mrb[0].mxu0
    %1689 = vdwg.mxu0
    %1690 = vmatprep.subr.mxu0 0.0
    %1691 = vmatpush1.msra.mxu0 %v320
    %1692 = vmatprep.subr.mxu0 0.0
    %1693 = vmatpush1.msra.mxu0 %v321
    %1694 = vmatprep.subr.mxu0 0.0
    %1695 = vmatpush1.msra.mxu0 %v322
    %1696 = vmatprep.subr.mxu0 0.0
    %1697 = vmatpush1.msra.mxu0 %v323
    %1698 = vmatprep.subr.mxu0 0.0
    %1699 = vmatpush1.msra.mxu0 %v324
    %1700 = vmatprep.subr.mxu0 0.0
    %1701 = vmatpush1.msra.mxu0 %v325
    %1702 = vmatprep.subr.mxu0 0.0
    %1703 = vmatpush1.msra.mxu0 %v326
    %1704 = vmatprep.subr.mxu0 0.0
    %1705 = vmatpush1.msra.mxu0 %v327
    %1706 = vmatprep.subr.mxu0 0.0
    %1707 = vmatpush1.msra.mxu0 %v328
    %1708 = vmatprep.subr.mxu0 0.0
    %1709 = vmatpush1.msra.mxu0 %v329
    %1710 = vmatprep.subr.mxu0 0.0
    %1711 = vmatpush1.msra.mxu0 %v330
    %1712 = vmatprep.subr.mxu0 0.0
    %1713 = vmatpush1.msra.mxu0 %v331
    %1714 = vmatprep.subr.mxu0 0.0
    %1715 = vmatpush1.msra.mxu0 %v332
    %1716 = vmatprep.subr.mxu0 0.0
    %1717 = vmatpush1.msra.mxu0 %v333
    %1718 = vmatprep.subr.mxu0 0.0
    %1719 = vmatpush1.msra.mxu0 %v334
    %1720 = vmatprep.subr.mxu0 0.0
    %1721 = vmatpush1.msra.mxu0 %v335
    %1722 = vmatprep.subr.mxu0 0.0
    %1723 = vmatpush1.msra.mxu0 0.0
    %1724 = vmatprep.subr.mxu0 0.0
    %1725 = vmatpush1.msra.mxu0 0.0
    %1726 = vmatprep.subr.mxu0 0.0
    %1727 = vmatpush1.msra.mxu0 0.0
    %1728 = vmatprep.subr.mxu0 0.0
    %1729 = vmatpush1.msra.mxu0 0.0
    %1730 = vmatprep.subr.mxu0 0.0
    %1731 = vmatpush1.msra.mxu0 0.0
    %1732 = vmatprep.subr.mxu0 0.0
    %1733 = vmatpush1.msra.mxu0 0.0
    %1734 = vmatprep.subr.mxu0 0.0
    %1735 = vmatpush1.msra.mxu0 0.0
    %1736 = vmatprep.subr.mxu0 0.0
    %1737 = vmatpush1.msra.mxu0 0.0
    %1738 = vmatprep.subr.mxu0 0.0
    %1739 = vmatpush1.msra.mxu0 0.0
    %1740 = vmatprep.subr.mxu0 0.0
    %1741 = vmatpush1.msra.mxu0 0.0
    %1742 = vmatprep.subr.mxu0 0.0
    %1743 = vmatpush1.msra.mxu0 0.0
    %1744 = vmatprep.subr.mxu0 0.0
    %1745 = vmatpush1.msra.mxu0 0.0
    %1746 = vmatprep.subr.mxu0 0.0
    %1747 = vmatpush1.msra.mxu0 0.0
    %1748 = vmatprep.subr.mxu0 0.0
    %1749 = vmatpush1.msra.mxu0 0.0
    %1750 = vmatprep.subr.mxu0 0.0
    %1751 = vmatpush1.msra.mxu0 0.0
    %1752 = vmatprep.subr.mxu0 0.0
    %1753 = vmatpush1.msra.mxu0 0.0
    %1754 = vmatprep.mubr.f32.mxu0 0.0
    %1755 = vmatmul.mubr.f32.gmra.mrb[0].mxu0 %v1386
    %v1756 = vpop.f32.mrb[0].mxu0
    %v1757 = vadd.f32 0.0, %v1756
    %v1758 = vpop.f32.mrb[0].mxu0
    %1759 = vdwg.mxu0
    %v1760 = vadd.f32 %v1687, %v1757
    %v1761 = vtanh.pop %v1760
    %s1762 = scalar_lea.vmem %s10, 384
    %v1763 = vld [vmem:[%s1762] sm:$0xff]
    %v1764 = vld [vmem:[%s1762 + $0x8] sm:$0xff]
    %v1765 = vld [vmem:[%s1762 + $0x10] sm:$0xff]
    %v1766 = vld [vmem:[%s1762 + $0x18] sm:$0xff]
    %v1767 = vld [vmem:[%s1762 + $0x20] sm:$0xff]
    %v1768 = vld [vmem:[%s1762 + $0x28] sm:$0xff]
    %v1769 = vld [vmem:[%s1762 + $0x30] sm:$0xff]
    %v1770 = vld [vmem:[%s1762 + $0x38] sm:$0xff]
    %v1771 = vld [vmem:[%s1762 + $0x40] sm:$0xff]
    %v1772 = vld [vmem:[%s1762 + $0x48] sm:$0xff]
    %v1773 = vld [vmem:[%s1762 + $0x50] sm:$0xff]
    %v1774 = vld [vmem:[%s1762 + $0x58] sm:$0xff]
    %v1775 = vld [vmem:[%s1762 + $0x60] sm:$0xff]
    %v1776 = vld [vmem:[%s1762 + $0x68] sm:$0xff]
    %v1777 = vld [vmem:[%s1762 + $0x70] sm:$0xff]
    %v1778 = vld [vmem:[%s1762 + $0x78] sm:$0xff]
    %1779 = vmatprep.subr.mxu0 0.0
    %1780 = vmatpush1.msra.mxu0 %v1763
    %1781 = vmatprep.subr.mxu0 0.0
    %1782 = vmatpush1.msra.mxu0 %v1764
    %1783 = vmatprep.subr.mxu0 0.0
    %1784 = vmatpush1.msra.mxu0 %v1765
    %1785 = vmatprep.subr.mxu0 0.0
    %1786 = vmatpush1.msra.mxu0 %v1766
    %1787 = vmatprep.subr.mxu0 0.0
    %1788 = vmatpush1.msra.mxu0 %v1767
    %1789 = vmatprep.subr.mxu0 0.0
    %1790 = vmatpush1.msra.mxu0 %v1768
    %1791 = vmatprep.subr.mxu0 0.0
    %1792 = vmatpush1.msra.mxu0 %v1769
    %1793 = vmatprep.subr.mxu0 0.0
    %1794 = vmatpush1.msra.mxu0 %v1770
    %1795 = vmatprep.subr.mxu0 0.0
    %1796 = vmatpush1.msra.mxu0 %v1771
    %1797 = vmatprep.subr.mxu0 0.0
    %1798 = vmatpush1.msra.mxu0 %v1772
    %1799 = vmatprep.subr.mxu0 0.0
    %1800 = vmatpush1.msra.mxu0 %v1773
    %1801 = vmatprep.subr.mxu0 0.0
    %1802 = vmatpush1.msra.mxu0 %v1774
    %1803 = vmatprep.subr.mxu0 0.0
    %1804 = vmatpush1.msra.mxu0 %v1775
    %1805 = vmatprep.subr.mxu0 0.0
    %1806 = vmatpush1.msra.mxu0 %v1776
    %1807 = vmatprep.subr.mxu0 0.0
    %1808 = vmatpush1.msra.mxu0 %v1777
    %1809 = vmatprep.subr.mxu0 0.0
    %1810 = vmatpush1.msra.mxu0 %v1778
    %1811 = vmatprep.subr.mxu0 0.0
    %1812 = vmatpush1.msra.mxu0 0.0
    %1813 = vmatprep.subr.mxu0 0.0
    %1814 = vmatpush1.msra.mxu0 0.0
    %1815 = vmatprep.subr.mxu0 0.0
    %1816 = vmatpush1.msra.mxu0 0.0
    %1817 = vmatprep.subr.mxu0 0.0
    %1818 = vmatpush1.msra.mxu0 0.0
    %1819 = vmatprep.subr.mxu0 0.0
    %1820 = vmatpush1.msra.mxu0 0.0
    %1821 = vmatprep.subr.mxu0 0.0
    %1822 = vmatpush1.msra.mxu0 0.0
    %1823 = vmatprep.subr.mxu0 0.0
    %1824 = vmatpush1.msra.mxu0 0.0
    %1825 = vmatprep.subr.mxu0 0.0
    %1826 = vmatpush1.msra.mxu0 0.0
    %1827 = vmatprep.subr.mxu0 0.0
    %1828 = vmatpush1.msra.mxu0 0.0
    %1829 = vmatprep.subr.mxu0 0.0
    %1830 = vmatpush1.msra.mxu0 0.0
    %1831 = vmatprep.subr.mxu0 0.0
    %1832 = vmatpush1.msra.mxu0 0.0
    %1833 = vmatprep.subr.mxu0 0.0
    %1834 = vmatpush1.msra.mxu0 0.0
    %1835 = vmatprep.subr.mxu0 0.0
    %1836 = vmatpush1.msra.mxu0 0.0
    %1837 = vmatprep.subr.mxu0 0.0
    %1838 = vmatpush1.msra.mxu0 0.0
    %1839 = vmatprep.subr.mxu0 0.0
    %1840 = vmatpush1.msra.mxu0 0.0
    %1841 = vmatprep.subr.mxu0 0.0
    %1842 = vmatpush1.msra.mxu0 0.0
    %1843 = vmatprep.mubr.f32.mxu0 0.0
    %1844 = vmatmul.mubr.f32.gmra.mrb[0].mxu0 %v1761
    %v1845 = vpop.f32.mrb[0].mxu0
    %v1846 = vadd.f32 0.0, %v1845
    %v1847 = vpop.f32.mrb[0].mxu0
    %1848 = vdwg.mxu0
    %v1849 = vadd.f32 %v1474, %v1846
    %1850 = vmatprep.subr.mxu0 0.0
    %1851 = vmatpush1.msra.mxu0 %v272
    %1852 = vmatprep.subr.mxu0 0.0
    %1853 = vmatpush1.msra.mxu0 %v273
    %1854 = vmatprep.subr.mxu0 0.0
    %1855 = vmatpush1.msra.mxu0 %v274
    %1856 = vmatprep.subr.mxu0 0.0
    %1857 = vmatpush1.msra.mxu0 %v275
    %1858 = vmatprep.subr.mxu0 0.0
    %1859 = vmatpush1.msra.mxu0 %v276
    %1860 = vmatprep.subr.mxu0 0.0
    %1861 = vmatpush1.msra.mxu0 %v277
    %1862 = vmatprep.subr.mxu0 0.0
    %1863 = vmatpush1.msra.mxu0 %v278
    %1864 = vmatprep.subr.mxu0 0.0
    %1865 = vmatpush1.msra.mxu0 %v279
    %1866 = vmatprep.subr.mxu0 0.0
    %1867 = vmatpush1.msra.mxu0 %v280
    %1868 = vmatprep.subr.mxu0 0.0
    %1869 = vmatpush1.msra.mxu0 %v281
    %1870 = vmatprep.subr.mxu0 0.0
    %1871 = vmatpush1.msra.mxu0 %v282
    %1872 = vmatprep.subr.mxu0 0.0
    %1873 = vmatpush1.msra.mxu0 %v283
    %1874 = vmatprep.subr.mxu0 0.0
    %1875 = vmatpush1.msra.mxu0 %v284
    %1876 = vmatprep.subr.mxu0 0.0
    %1877 = vmatpush1.msra.mxu0 %v285
    %1878 = vmatprep.subr.mxu0 0.0
    %1879 = vmatpush1.msra.mxu0 %v286
    %1880 = vmatprep.subr.mxu0 0.0
    %1881 = vmatpush1.msra.mxu0 %v287
    %1882 = vmatprep.subr.mxu0 0.0
    %1883 = vmatpush1.msra.mxu0 0.0
    %1884 = vmatprep.subr.mxu0 0.0
    %1885 = vmatpush1.msra.mxu0 0.0
    %1886 = vmatprep.subr.mxu0 0.0
    %1887 = vmatpush1.msra.mxu0 0.0
    %1888 = vmatprep.subr.mxu0 0.0
    %1889 = vmatpush1.msra.mxu0 0.0
    %1890 = vmatprep.subr.mxu0 0.0
    %1891 = vmatpush1.msra.mxu0 0.0
    %1892 = vmatprep.subr.mxu0 0.0
    %1893 = vmatpush1.msra.mxu0 0.0
    %1894 = vmatprep.subr.mxu0 0.0
    %1895 = vmatpush1.msra.mxu0 0.0
    %1896 = vmatprep.subr.mxu0 0.0
    %1897 = vmatpush1.msra.mxu0 0.0
    %1898 = vmatprep.subr.mxu0 0.0
    %1899 = vmatpush1.msra.mxu0 0.0
    %1900 = vmatprep.subr.mxu0 0.0
    %1901 = vmatpush1.msra.mxu0 0.0
    %1902 = vmatprep.subr.mxu0 0.0
    %1903 = vmatpush1.msra.mxu0 0.0
    %1904 = vmatprep.subr.mxu0 0.0
    %1905 = vmatpush1.msra.mxu0 0.0
    %1906 = vmatprep.subr.mxu0 0.0
    %1907 = vmatpush1.msra.mxu0 0.0
    %1908 = vmatprep.subr.mxu0 0.0
    %1909 = vmatpush1.msra.mxu0 0.0
    %1910 = vmatprep.subr.mxu0 0.0
    %1911 = vmatpush1.msra.mxu0 0.0
    %1912 = vmatprep.subr.mxu0 0.0
    %1913 = vmatpush1.msra.mxu0 0.0
    %1914 = vmatprep.mubr.f32.mxu0 0.0
    %1915 = vmatmul.mubr.f32.gmra.mrb[0].mxu0 %v1546
    %v1916 = vpop.f32.mrb[0].mxu0
    %v1917 = vadd.f32 0.0, %v1916
    %v1918 = vpop.f32.mrb[0].mxu0
    %1919 = vdwg.mxu0
    %v1920 = vadd.f32 %v262, %v1917
    %v1921 = vtanh.pop %v1920
    %1922 = vmatprep.subr.mxu0 0.0
    %1923 = vmatpush1.msra.mxu0 %v288
    %1924 = vmatprep.subr.mxu0 0.0
    %1925 = vmatpush1.msra.mxu0 %v289
    %1926 = vmatprep.subr.mxu0 0.0
    %1927 = vmatpush1.msra.mxu0 %v290
    %1928 = vmatprep.subr.mxu0 0.0
    %1929 = vmatpush1.msra.mxu0 %v291
    %1930 = vmatprep.subr.mxu0 0.0
    %1931 = vmatpush1.msra.mxu0 %v292
    %1932 = vmatprep.subr.mxu0 0.0
    %1933 = vmatpush1.msra.mxu0 %v293
    %1934 = vmatprep.subr.mxu0 0.0
    %1935 = vmatpush1.msra.mxu0 %v294
    %1936 = vmatprep.subr.mxu0 0.0
    %1937 = vmatpush1.msra.mxu0 %v295
    %1938 = vmatprep.subr.mxu0 0.0
    %1939 = vmatpush1.msra.mxu0 %v296
    %1940 = vmatprep.subr.mxu0 0.0
    %1941 = vmatpush1.msra.mxu0 %v297
    %1942 = vmatprep.subr.mxu0 0.0
    %1943 = vmatpush1.msra.mxu0 %v298
    %1944 = vmatprep.subr.mxu0 0.0
    %1945 = vmatpush1.msra.mxu0 %v299
    %1946 = vmatprep.subr.mxu0 0.0
    %1947 = vmatpush1.msra.mxu0 %v300
    %1948 = vmatprep.subr.mxu0 0.0
    %1949 = vmatpush1.msra.mxu0 %v301
    %1950 = vmatprep.subr.mxu0 0.0
    %1951 = vmatpush1.msra.mxu0 %v302
    %1952 = vmatprep.subr.mxu0 0.0
    %1953 = vmatpush1.msra.mxu0 %v303
    %1954 = vmatprep.subr.mxu0 0.0
    %1955 = vmatpush1.msra.mxu0 0.0
    %1956 = vmatprep.subr.mxu0 0.0
    %1957 = vmatpush1.msra.mxu0 0.0
    %1958 = vmatprep.subr.mxu0 0.0
    %1959 = vmatpush1.msra.mxu0 0.0
    %1960 = vmatprep.subr.mxu0 0.0
    %1961 = vmatpush1.msra.mxu0 0.0
    %1962 = vmatprep.subr.mxu0 0.0
    %1963 = vmatpush1.msra.mxu0 0.0
    %1964 = vmatprep.subr.mxu0 0.0
    %1965 = vmatpush1.msra.mxu0 0.0
    %1966 = vmatprep.subr.mxu0 0.0
    %1967 = vmatpush1.msra.mxu0 0.0
    %1968 = vmatprep.subr.mxu0 0.0
    %1969 = vmatpush1.msra.mxu0 0.0
    %1970 = vmatprep.subr.mxu0 0.0
    %1971 = vmatpush1.msra.mxu0 0.0
    %1972 = vmatprep.subr.mxu0 0.0
    %1973 = vmatpush1.msra.mxu0 0.0
    %1974 = vmatprep.subr.mxu0 0.0
    %1975 = vmatpush1.msra.mxu0 0.0
    %1976 = vmatprep.subr.mxu0 0.0
    %1977 = vmatpush1.msra.mxu0 0.0
    %1978 = vmatprep.subr.mxu0 0.0
    %1979 = vmatpush1.msra.mxu0 0.0
    %1980 = vmatprep.subr.mxu0 0.0
    %1981 = vmatpush1.msra.mxu0 0.0
    %1982 = vmatprep.subr.mxu0 0.0
    %1983 = vmatpush1.msra.mxu0 0.0
    %1984 = vmatprep.subr.mxu0 0.0
    %1985 = vmatpush1.msra.mxu0 0.0
    %1986 = vmatprep.mubr.f32.mxu0 0.0
    %1987 = vmatmul.mubr.f32.gmra.mrb[0].mxu0 %v1618
    %v1988 = vpop.f32.mrb[0].mxu0
    %v1989 = vadd.f32 0.0, %v1988
    %v1990 = vpop.f32.mrb[0].mxu0
    %1991 = vdwg.mxu0
    %v1992 = vadd.f32 %v264, %v1989
    %v1993 = vtanh.pop %v1992
    %v1994 = vsub.f32 %v1993, %v1921
    %1995 = vmatprep.subr.mxu0 0.0
    %1996 = vmatpush1.msra.mxu0 %v304
    %1997 = vmatprep.subr.mxu0 0.0
    %1998 = vmatpush1.msra.mxu0 %v305
    %1999 = vmatprep.subr.mxu0 0.0
    %2000 = vmatpush1.msra.mxu0 %v306
    %2001 = vmatprep.subr.mxu0 0.0
    %2002 = vmatpush1.msra.mxu0 %v307
    %2003 = vmatprep.subr.mxu0 0.0
    %2004 = vmatpush1.msra.mxu0 %v308
    %2005 = vmatprep.subr.mxu0 0.0
    %2006 = vmatpush1.msra.mxu0 %v309
    %2007 = vmatprep.subr.mxu0 0.0
    %2008 = vmatpush1.msra.mxu0 %v310
    %2009 = vmatprep.subr.mxu0 0.0
    %2010 = vmatpush1.msra.mxu0 %v311
    %2011 = vmatprep.subr.mxu0 0.0
    %2012 = vmatpush1.msra.mxu0 %v312
    %2013 = vmatprep.subr.mxu0 0.0
    %2014 = vmatpush1.msra.mxu0 %v313
    %2015 = vmatprep.subr.mxu0 0.0
    %2016 = vmatpush1.msra.mxu0 %v314
    %2017 = vmatprep.subr.mxu0 0.0
    %2018 = vmatpush1.msra.mxu0 %v315
    %2019 = vmatprep.subr.mxu0 0.0
    %2020 = vmatpush1.msra.mxu0 %v316
    %2021 = vmatprep.subr.mxu0 0.0
    %2022 = vmatpush1.msra.mxu0 %v317
    %2023 = vmatprep.subr.mxu0 0.0
    %2024 = vmatpush1.msra.mxu0 %v318
    %2025 = vmatprep.subr.mxu0 0.0
    %2026 = vmatpush1.msra.mxu0 %v319
    %2027 = vmatprep.subr.mxu0 0.0
    %2028 = vmatpush1.msra.mxu0 0.0
    %2029 = vmatprep.subr.mxu0 0.0
    %2030 = vmatpush1.msra.mxu0 0.0
    %2031 = vmatprep.subr.mxu0 0.0
    %2032 = vmatpush1.msra.mxu0 0.0
    %2033 = vmatprep.subr.mxu0 0.0
    %2034 = vmatpush1.msra.mxu0 0.0
    %2035 = vmatprep.subr.mxu0 0.0
    %2036 = vmatpush1.msra.mxu0 0.0
    %2037 = vmatprep.subr.mxu0 0.0
    %2038 = vmatpush1.msra.mxu0 0.0
    %2039 = vmatprep.subr.mxu0 0.0
    %2040 = vmatpush1.msra.mxu0 0.0
    %2041 = vmatprep.subr.mxu0 0.0
    %2042 = vmatpush1.msra.mxu0 0.0
    %2043 = vmatprep.subr.mxu0 0.0
    %2044 = vmatpush1.msra.mxu0 0.0
    %2045 = vmatprep.subr.mxu0 0.0
    %2046 = vmatpush1.msra.mxu0 0.0
    %2047 = vmatprep.subr.mxu0 0.0
    %2048 = vmatpush1.msra.mxu0 0.0
    %2049 = vmatprep.subr.mxu0 0.0
    %2050 = vmatpush1.msra.mxu0 0.0
    %2051 = vmatprep.subr.mxu0 0.0
    %2052 = vmatpush1.msra.mxu0 0.0
    %2053 = vmatprep.subr.mxu0 0.0
    %2054 = vmatpush1.msra.mxu0 0.0
    %2055 = vmatprep.subr.mxu0 0.0
    %2056 = vmatpush1.msra.mxu0 0.0
    %2057 = vmatprep.subr.mxu0 0.0
    %2058 = vmatpush1.msra.mxu0 0.0
    %2059 = vmatprep.mubr.f32.mxu0 0.0
    %2060 = vmatmul.mubr.f32.gmra.mrb[0].mxu0 %v1994
    %v2061 = vpop.f32.mrb[0].mxu0
    %v2062 = vadd.f32 %v494, %v2061
    %v2063 = vpop.f32.mrb[0].mxu0
    %2064 = vdwg.mxu0
    %2065 = vmatprep.subr.mxu0 0.0
    %2066 = vmatpush1.msra.mxu0 %v320
    %2067 = vmatprep.subr.mxu0 0.0
    %2068 = vmatpush1.msra.mxu0 %v321
    %2069 = vmatprep.subr.mxu0 0.0
    %2070 = vmatpush1.msra.mxu0 %v322
    %2071 = vmatprep.subr.mxu0 0.0
    %2072 = vmatpush1.msra.mxu0 %v323
    %2073 = vmatprep.subr.mxu0 0.0
    %2074 = vmatpush1.msra.mxu0 %v324
    %2075 = vmatprep.subr.mxu0 0.0
    %2076 = vmatpush1.msra.mxu0 %v325
    %2077 = vmatprep.subr.mxu0 0.0
    %2078 = vmatpush1.msra.mxu0 %v326
    %2079 = vmatprep.subr.mxu0 0.0
    %2080 = vmatpush1.msra.mxu0 %v327
    %2081 = vmatprep.subr.mxu0 0.0
    %2082 = vmatpush1.msra.mxu0 %v328
    %2083 = vmatprep.subr.mxu0 0.0
    %2084 = vmatpush1.msra.mxu0 %v329
    %2085 = vmatprep.subr.mxu0 0.0
    %2086 = vmatpush1.msra.mxu0 %v330
    %2087 = vmatprep.subr.mxu0 0.0
    %2088 = vmatpush1.msra.mxu0 %v331
    %2089 = vmatprep.subr.mxu0 0.0
    %2090 = vmatpush1.msra.mxu0 %v332
    %2091 = vmatprep.subr.mxu0 0.0
    %2092 = vmatpush1.msra.mxu0 %v333
    %2093 = vmatprep.subr.mxu0 0.0
    %2094 = vmatpush1.msra.mxu0 %v334
    %2095 = vmatprep.subr.mxu0 0.0
    %2096 = vmatpush1.msra.mxu0 %v335
    %2097 = vmatprep.subr.mxu0 0.0
    %2098 = vmatpush1.msra.mxu0 0.0
    %2099 = vmatprep.subr.mxu0 0.0
    %2100 = vmatpush1.msra.mxu0 0.0
    %2101 = vmatprep.subr.mxu0 0.0
    %2102 = vmatpush1.msra.mxu0 0.0
    %2103 = vmatprep.subr.mxu0 0.0
    %2104 = vmatpush1.msra.mxu0 0.0
    %2105 = vmatprep.subr.mxu0 0.0
    %2106 = vmatpush1.msra.mxu0 0.0
    %2107 = vmatprep.subr.mxu0 0.0
    %2108 = vmatpush1.msra.mxu0 0.0
    %2109 = vmatprep.subr.mxu0 0.0
    %2110 = vmatpush1.msra.mxu0 0.0
    %2111 = vmatprep.subr.mxu0 0.0
    %2112 = vmatpush1.msra.mxu0 0.0
    %2113 = vmatprep.subr.mxu0 0.0
    %2114 = vmatpush1.msra.mxu0 0.0
    %2115 = vmatprep.subr.mxu0 0.0
    %2116 = vmatpush1.msra.mxu0 0.0
    %2117 = vmatprep.subr.mxu0 0.0
    %2118 = vmatpush1.msra.mxu0 0.0
    %2119 = vmatprep.subr.mxu0 0.0
    %2120 = vmatpush1.msra.mxu0 0.0
    %2121 = vmatprep.subr.mxu0 0.0
    %2122 = vmatpush1.msra.mxu0 0.0
    %2123 = vmatprep.subr.mxu0 0.0
    %2124 = vmatpush1.msra.mxu0 0.0
    %2125 = vmatprep.subr.mxu0 0.0
    %2126 = vmatpush1.msra.mxu0 0.0
    %2127 = vmatprep.subr.mxu0 0.0
    %2128 = vmatpush1.msra.mxu0 0.0
    %2129 = vmatprep.mubr.f32.mxu0 0.0
    %2130 = vmatmul.mubr.f32.gmra.mrb[0].mxu0 %v1761
    %v2131 = vpop.f32.mrb[0].mxu0
    %v2132 = vadd.f32 0.0, %v2131
    %v2133 = vpop.f32.mrb[0].mxu0
    %2134 = vdwg.mxu0
    %v2135 = vadd.f32 %v2062, %v2132
    %v2136 = vtanh.pop %v2135
    %s2137 = scalar_lea.vmem %s10, 512
    %v2138 = vld [vmem:[%s2137] sm:$0xff]
    %v2139 = vld [vmem:[%s2137 + $0x8] sm:$0xff]
    %v2140 = vld [vmem:[%s2137 + $0x10] sm:$0xff]
    %v2141 = vld [vmem:[%s2137 + $0x18] sm:$0xff]
    %v2142 = vld [vmem:[%s2137 + $0x20] sm:$0xff]
    %v2143 = vld [vmem:[%s2137 + $0x28] sm:$0xff]
    %v2144 = vld [vmem:[%s2137 + $0x30] sm:$0xff]
    %v2145 = vld [vmem:[%s2137 + $0x38] sm:$0xff]
    %v2146 = vld [vmem:[%s2137 + $0x40] sm:$0xff]
    %v2147 = vld [vmem:[%s2137 + $0x48] sm:$0xff]
    %v2148 = vld [vmem:[%s2137 + $0x50] sm:$0xff]
    %v2149 = vld [vmem:[%s2137 + $0x58] sm:$0xff]
    %v2150 = vld [vmem:[%s2137 + $0x60] sm:$0xff]
    %v2151 = vld [vmem:[%s2137 + $0x68] sm:$0xff]
    %v2152 = vld [vmem:[%s2137 + $0x70] sm:$0xff]
    %v2153 = vld [vmem:[%s2137 + $0x78] sm:$0xff]
    %2154 = vmatprep.subr.mxu0 0.0
    %2155 = vmatpush1.msra.mxu0 %v2138
    %2156 = vmatprep.subr.mxu0 0.0
    %2157 = vmatpush1.msra.mxu0 %v2139
    %2158 = vmatprep.subr.mxu0 0.0
    %2159 = vmatpush1.msra.mxu0 %v2140
    %2160 = vmatprep.subr.mxu0 0.0
    %2161 = vmatpush1.msra.mxu0 %v2141
    %2162 = vmatprep.subr.mxu0 0.0
    %2163 = vmatpush1.msra.mxu0 %v2142
    %2164 = vmatprep.subr.mxu0 0.0
    %2165 = vmatpush1.msra.mxu0 %v2143
    %2166 = vmatprep.subr.mxu0 0.0
    %2167 = vmatpush1.msra.mxu0 %v2144
    %2168 = vmatprep.subr.mxu0 0.0
    %2169 = vmatpush1.msra.mxu0 %v2145
    %2170 = vmatprep.subr.mxu0 0.0
    %2171 = vmatpush1.msra.mxu0 %v2146
    %2172 = vmatprep.subr.mxu0 0.0
    %2173 = vmatpush1.msra.mxu0 %v2147
    %2174 = vmatprep.subr.mxu0 0.0
    %2175 = vmatpush1.msra.mxu0 %v2148
    %2176 = vmatprep.subr.mxu0 0.0
    %2177 = vmatpush1.msra.mxu0 %v2149
    %2178 = vmatprep.subr.mxu0 0.0
    %2179 = vmatpush1.msra.mxu0 %v2150
    %2180 = vmatprep.subr.mxu0 0.0
    %2181 = vmatpush1.msra.mxu0 %v2151
    %2182 = vmatprep.subr.mxu0 0.0
    %2183 = vmatpush1.msra.mxu0 %v2152
    %2184 = vmatprep.subr.mxu0 0.0
    %2185 = vmatpush1.msra.mxu0 %v2153
    %2186 = vmatprep.subr.mxu0 0.0
    %2187 = vmatpush1.msra.mxu0 0.0
    %2188 = vmatprep.subr.mxu0 0.0
    %2189 = vmatpush1.msra.mxu0 0.0
    %2190 = vmatprep.subr.mxu0 0.0
    %2191 = vmatpush1.msra.mxu0 0.0
    %2192 = vmatprep.subr.mxu0 0.0
    %2193 = vmatpush1.msra.mxu0 0.0
    %2194 = vmatprep.subr.mxu0 0.0
    %2195 = vmatpush1.msra.mxu0 0.0
    %2196 = vmatprep.subr.mxu0 0.0
    %2197 = vmatpush1.msra.mxu0 0.0
    %2198 = vmatprep.subr.mxu0 0.0
    %2199 = vmatpush1.msra.mxu0 0.0
    %2200 = vmatprep.subr.mxu0 0.0
    %2201 = vmatpush1.msra.mxu0 0.0
    %2202 = vmatprep.subr.mxu0 0.0
    %2203 = vmatpush1.msra.mxu0 0.0
    %2204 = vmatprep.subr.mxu0 0.0
    %2205 = vmatpush1.msra.mxu0 0.0
    %2206 = vmatprep.subr.mxu0 0.0
    %2207 = vmatpush1.msra.mxu0 0.0
    %2208 = vmatprep.subr.mxu0 0.0
    %2209 = vmatpush1.msra.mxu0 0.0
    %2210 = vmatprep.subr.mxu0 0.0
    %2211 = vmatpush1.msra.mxu0 0.0
    %2212 = vmatprep.subr.mxu0 0.0
    %2213 = vmatpush1.msra.mxu0 0.0
    %2214 = vmatprep.subr.mxu0 0.0
    %2215 = vmatpush1.msra.mxu0 0.0
    %2216 = vmatprep.subr.mxu0 0.0
    %2217 = vmatpush1.msra.mxu0 0.0
    %2218 = vmatprep.mubr.f32.mxu0 0.0
    %2219 = vmatmul.mubr.f32.gmra.mrb[0].mxu0 %v2136
    %v2220 = vpop.f32.mrb[0].mxu0
    %v2221 = vadd.f32 0.0, %v2220
    %v2222 = vpop.f32.mrb[0].mxu0
    %2223 = vdwg.mxu0
    %v2224 = vadd.f32 %v1849, %v2221
    %2225 = vmatprep.subr.mxu0 0.0
    %2226 = vmatpush1.msra.mxu0 %v272
    %2227 = vmatprep.subr.mxu0 0.0
    %2228 = vmatpush1.msra.mxu0 %v273
    %2229 = vmatprep.subr.mxu0 0.0
    %2230 = vmatpush1.msra.mxu0 %v274
    %2231 = vmatprep.subr.mxu0 0.0
    %2232 = vmatpush1.msra.mxu0 %v275
    %2233 = vmatprep.subr.mxu0 0.0
    %2234 = vmatpush1.msra.mxu0 %v276
    %2235 = vmatprep.subr.mxu0 0.0
    %2236 = vmatpush1.msra.mxu0 %v277
    %2237 = vmatprep.subr.mxu0 0.0
    %2238 = vmatpush1.msra.mxu0 %v278
    %2239 = vmatprep.subr.mxu0 0.0
    %2240 = vmatpush1.msra.mxu0 %v279
    %2241 = vmatprep.subr.mxu0 0.0
    %2242 = vmatpush1.msra.mxu0 %v280
    %2243 = vmatprep.subr.mxu0 0.0
    %2244 = vmatpush1.msra.mxu0 %v281
    %2245 = vmatprep.subr.mxu0 0.0
    %2246 = vmatpush1.msra.mxu0 %v282
    %2247 = vmatprep.subr.mxu0 0.0
    %2248 = vmatpush1.msra.mxu0 %v283
    %2249 = vmatprep.subr.mxu0 0.0
    %2250 = vmatpush1.msra.mxu0 %v284
    %2251 = vmatprep.subr.mxu0 0.0
    %2252 = vmatpush1.msra.mxu0 %v285
    %2253 = vmatprep.subr.mxu0 0.0
    %2254 = vmatpush1.msra.mxu0 %v286
    %2255 = vmatprep.subr.mxu0 0.0
    %2256 = vmatpush1.msra.mxu0 %v287
    %2257 = vmatprep.subr.mxu0 0.0
    %2258 = vmatpush1.msra.mxu0 0.0
    %2259 = vmatprep.subr.mxu0 0.0
    %2260 = vmatpush1.msra.mxu0 0.0
    %2261 = vmatprep.subr.mxu0 0.0
    %2262 = vmatpush1.msra.mxu0 0.0
    %2263 = vmatprep.subr.mxu0 0.0
    %2264 = vmatpush1.msra.mxu0 0.0
    %2265 = vmatprep.subr.mxu0 0.0
    %2266 = vmatpush1.msra.mxu0 0.0
    %2267 = vmatprep.subr.mxu0 0.0
    %2268 = vmatpush1.msra.mxu0 0.0
    %2269 = vmatprep.subr.mxu0 0.0
    %2270 = vmatpush1.msra.mxu0 0.0
    %2271 = vmatprep.subr.mxu0 0.0
    %2272 = vmatpush1.msra.mxu0 0.0
    %2273 = vmatprep.subr.mxu0 0.0
    %2274 = vmatpush1.msra.mxu0 0.0
    %2275 = vmatprep.subr.mxu0 0.0
    %2276 = vmatpush1.msra.mxu0 0.0
    %2277 = vmatprep.subr.mxu0 0.0
    %2278 = vmatpush1.msra.mxu0 0.0
    %2279 = vmatprep.subr.mxu0 0.0
    %2280 = vmatpush1.msra.mxu0 0.0
    %2281 = vmatprep.subr.mxu0 0.0
    %2282 = vmatpush1.msra.mxu0 0.0
    %2283 = vmatprep.subr.mxu0 0.0
    %2284 = vmatpush1.msra.mxu0 0.0
    %2285 = vmatprep.subr.mxu0 0.0
    %2286 = vmatpush1.msra.mxu0 0.0
    %2287 = vmatprep.subr.mxu0 0.0
    %2288 = vmatpush1.msra.mxu0 0.0
    %2289 = vmatprep.mubr.f32.mxu0 0.0
    %2290 = vmatmul.mubr.f32.gmra.mrb[0].mxu0 %v1921
    %v2291 = vpop.f32.mrb[0].mxu0
    %v2292 = vadd.f32 0.0, %v2291
    %v2293 = vpop.f32.mrb[0].mxu0
    %2294 = vdwg.mxu0
    %v2295 = vadd.f32 %v268, %v2292
    %v2296 = vtanh.pop %v2295
    %2297 = vmatprep.subr.mxu0 0.0
    %2298 = vmatpush1.msra.mxu0 %v288
    %2299 = vmatprep.subr.mxu0 0.0
    %2300 = vmatpush1.msra.mxu0 %v289
    %2301 = vmatprep.subr.mxu0 0.0
    %2302 = vmatpush1.msra.mxu0 %v290
    %2303 = vmatprep.subr.mxu0 0.0
    %2304 = vmatpush1.msra.mxu0 %v291
    %2305 = vmatprep.subr.mxu0 0.0
    %2306 = vmatpush1.msra.mxu0 %v292
    %2307 = vmatprep.subr.mxu0 0.0
    %2308 = vmatpush1.msra.mxu0 %v293
    %2309 = vmatprep.subr.mxu0 0.0
    %2310 = vmatpush1.msra.mxu0 %v294
    %2311 = vmatprep.subr.mxu0 0.0
    %2312 = vmatpush1.msra.mxu0 %v295
    %2313 = vmatprep.subr.mxu0 0.0
    %2314 = vmatpush1.msra.mxu0 %v296
    %2315 = vmatprep.subr.mxu0 0.0
    %2316 = vmatpush1.msra.mxu0 %v297
    %2317 = vmatprep.subr.mxu0 0.0
    %2318 = vmatpush1.msra.mxu0 %v298
    %2319 = vmatprep.subr.mxu0 0.0
    %2320 = vmatpush1.msra.mxu0 %v299
    %2321 = vmatprep.subr.mxu0 0.0
    %2322 = vmatpush1.msra.mxu0 %v300
    %2323 = vmatprep.subr.mxu0 0.0
    %2324 = vmatpush1.msra.mxu0 %v301
    %2325 = vmatprep.subr.mxu0 0.0
    %2326 = vmatpush1.msra.mxu0 %v302
    %2327 = vmatprep.subr.mxu0 0.0
    %2328 = vmatpush1.msra.mxu0 %v303
    %2329 = vmatprep.subr.mxu0 0.0
    %2330 = vmatpush1.msra.mxu0 0.0
    %2331 = vmatprep.subr.mxu0 0.0
    %2332 = vmatpush1.msra.mxu0 0.0
    %2333 = vmatprep.subr.mxu0 0.0
    %2334 = vmatpush1.msra.mxu0 0.0
    %2335 = vmatprep.subr.mxu0 0.0
    %2336 = vmatpush1.msra.mxu0 0.0
    %2337 = vmatprep.subr.mxu0 0.0
    %2338 = vmatpush1.msra.mxu0 0.0
    %2339 = vmatprep.subr.mxu0 0.0
    %2340 = vmatpush1.msra.mxu0 0.0
    %2341 = vmatprep.subr.mxu0 0.0
    %2342 = vmatpush1.msra.mxu0 0.0
    %2343 = vmatprep.subr.mxu0 0.0
    %2344 = vmatpush1.msra.mxu0 0.0
    %2345 = vmatprep.subr.mxu0 0.0
    %2346 = vmatpush1.msra.mxu0 0.0
    %2347 = vmatprep.subr.mxu0 0.0
    %2348 = vmatpush1.msra.mxu0 0.0
    %2349 = vmatprep.subr.mxu0 0.0
    %2350 = vmatpush1.msra.mxu0 0.0
    %2351 = vmatprep.subr.mxu0 0.0
    %2352 = vmatpush1.msra.mxu0 0.0
    %2353 = vmatprep.subr.mxu0 0.0
    %2354 = vmatpush1.msra.mxu0 0.0
    %2355 = vmatprep.subr.mxu0 0.0
    %2356 = vmatpush1.msra.mxu0 0.0
    %2357 = vmatprep.subr.mxu0 0.0
    %2358 = vmatpush1.msra.mxu0 0.0
    %2359 = vmatprep.subr.mxu0 0.0
    %2360 = vmatpush1.msra.mxu0 0.0
    %2361 = vmatprep.mubr.f32.mxu0 0.0
    %2362 = vmatmul.mubr.f32.gmra.mrb[0].mxu0 %v1993
    %v2363 = vpop.f32.mrb[0].mxu0
    %v2364 = vadd.f32 0.0, %v2363
    %v2365 = vpop.f32.mrb[0].mxu0
    %2366 = vdwg.mxu0
    %v2367 = vadd.f32 %v270, %v2364
    %v2368 = vtanh.pop %v2367
    %v2369 = vsub.f32 %v2368, %v2296
    %2370 = vmatprep.subr.mxu0 0.0
    %2371 = vmatpush1.msra.mxu0 %v304
    %2372 = vmatprep.subr.mxu0 0.0
    %2373 = vmatpush1.msra.mxu0 %v305
    %2374 = vmatprep.subr.mxu0 0.0
    %2375 = vmatpush1.msra.mxu0 %v306
    %2376 = vmatprep.subr.mxu0 0.0
    %2377 = vmatpush1.msra.mxu0 %v307
    %2378 = vmatprep.subr.mxu0 0.0
    %2379 = vmatpush1.msra.mxu0 %v308
    %2380 = vmatprep.subr.mxu0 0.0
    %2381 = vmatpush1.msra.mxu0 %v309
    %2382 = vmatprep.subr.mxu0 0.0
    %2383 = vmatpush1.msra.mxu0 %v310
    %2384 = vmatprep.subr.mxu0 0.0
    %2385 = vmatpush1.msra.mxu0 %v311
    %2386 = vmatprep.subr.mxu0 0.0
    %2387 = vmatpush1.msra.mxu0 %v312
    %2388 = vmatprep.subr.mxu0 0.0
    %2389 = vmatpush1.msra.mxu0 %v313
    %2390 = vmatprep.subr.mxu0 0.0
    %2391 = vmatpush1.msra.mxu0 %v314
    %2392 = vmatprep.subr.mxu0 0.0
    %2393 = vmatpush1.msra.mxu0 %v315
    %2394 = vmatprep.subr.mxu0 0.0
    %2395 = vmatpush1.msra.mxu0 %v316
    %2396 = vmatprep.subr.mxu0 0.0
    %2397 = vmatpush1.msra.mxu0 %v317
    %2398 = vmatprep.subr.mxu0 0.0
    %2399 = vmatpush1.msra.mxu0 %v318
    %2400 = vmatprep.subr.mxu0 0.0
    %2401 = vmatpush1.msra.mxu0 %v319
    %2402 = vmatprep.subr.mxu0 0.0
    %2403 = vmatpush1.msra.mxu0 0.0
    %2404 = vmatprep.subr.mxu0 0.0
    %2405 = vmatpush1.msra.mxu0 0.0
    %2406 = vmatprep.subr.mxu0 0.0
    %2407 = vmatpush1.msra.mxu0 0.0
    %2408 = vmatprep.subr.mxu0 0.0
    %2409 = vmatpush1.msra.mxu0 0.0
    %2410 = vmatprep.subr.mxu0 0.0
    %2411 = vmatpush1.msra.mxu0 0.0
    %2412 = vmatprep.subr.mxu0 0.0
    %2413 = vmatpush1.msra.mxu0 0.0
    %2414 = vmatprep.subr.mxu0 0.0
    %2415 = vmatpush1.msra.mxu0 0.0
    %2416 = vmatprep.subr.mxu0 0.0
    %2417 = vmatpush1.msra.mxu0 0.0
    %2418 = vmatprep.subr.mxu0 0.0
    %2419 = vmatpush1.msra.mxu0 0.0
    %2420 = vmatprep.subr.mxu0 0.0
    %2421 = vmatpush1.msra.mxu0 0.0
    %2422 = vmatprep.subr.mxu0 0.0
    %2423 = vmatpush1.msra.mxu0 0.0
    %2424 = vmatprep.subr.mxu0 0.0
    %2425 = vmatpush1.msra.mxu0 0.0
    %2426 = vmatprep.subr.mxu0 0.0
    %2427 = vmatpush1.msra.mxu0 0.0
    %2428 = vmatprep.subr.mxu0 0.0
    %2429 = vmatpush1.msra.mxu0 0.0
    %2430 = vmatprep.subr.mxu0 0.0
    %2431 = vmatpush1.msra.mxu0 0.0
    %2432 = vmatprep.subr.mxu0 0.0
    %2433 = vmatpush1.msra.mxu0 0.0
    %2434 = vmatprep.mubr.f32.mxu0 0.0
    %2435 = vmatmul.mubr.f32.gmra.mrb[0].mxu0 %v2369
    %v2436 = vpop.f32.mrb[0].mxu0
    %v2437 = vadd.f32 %v494, %v2436
    %v2438 = vpop.f32.mrb[0].mxu0
    %2439 = vdwg.mxu0
    %2440 = vmatprep.subr.mxu0 0.0
    %2441 = vmatpush1.msra.mxu0 %v320
    %2442 = vmatprep.subr.mxu0 0.0
    %2443 = vmatpush1.msra.mxu0 %v321
    %2444 = vmatprep.subr.mxu0 0.0
    %2445 = vmatpush1.msra.mxu0 %v322
    %2446 = vmatprep.subr.mxu0 0.0
    %2447 = vmatpush1.msra.mxu0 %v323
    %2448 = vmatprep.subr.mxu0 0.0
    %2449 = vmatpush1.msra.mxu0 %v324
    %2450 = vmatprep.subr.mxu0 0.0
    %2451 = vmatpush1.msra.mxu0 %v325
    %2452 = vmatprep.subr.mxu0 0.0
    %2453 = vmatpush1.msra.mxu0 %v326
    %2454 = vmatprep.subr.mxu0 0.0
    %2455 = vmatpush1.msra.mxu0 %v327
    %2456 = vmatprep.subr.mxu0 0.0
    %2457 = vmatpush1.msra.mxu0 %v328
    %2458 = vmatprep.subr.mxu0 0.0
    %2459 = vmatpush1.msra.mxu0 %v329
    %2460 = vmatprep.subr.mxu0 0.0
    %2461 = vmatpush1.msra.mxu0 %v330
    %2462 = vmatprep.subr.mxu0 0.0
    %2463 = vmatpush1.msra.mxu0 %v331
    %2464 = vmatprep.subr.mxu0 0.0
    %2465 = vmatpush1.msra.mxu0 %v332
    %2466 = vmatprep.subr.mxu0 0.0
    %2467 = vmatpush1.msra.mxu0 %v333
    %2468 = vmatprep.subr.mxu0 0.0
    %2469 = vmatpush1.msra.mxu0 %v334
    %2470 = vmatprep.subr.mxu0 0.0
    %2471 = vmatpush1.msra.mxu0 %v335
    %2472 = vmatprep.subr.mxu0 0.0
    %2473 = vmatpush1.msra.mxu0 0.0
    %2474 = vmatprep.subr.mxu0 0.0
    %2475 = vmatpush1.msra.mxu0 0.0
    %2476 = vmatprep.subr.mxu0 0.0
    %2477 = vmatpush1.msra.mxu0 0.0
    %2478 = vmatprep.subr.mxu0 0.0
    %2479 = vmatpush1.msra.mxu0 0.0
    %2480 = vmatprep.subr.mxu0 0.0
    %2481 = vmatpush1.msra.mxu0 0.0
    %2482 = vmatprep.subr.mxu0 0.0
    %2483 = vmatpush1.msra.mxu0 0.0
    %2484 = vmatprep.subr.mxu0 0.0
    %2485 = vmatpush1.msra.mxu0 0.0
    %2486 = vmatprep.subr.mxu0 0.0
    %2487 = vmatpush1.msra.mxu0 0.0
    %2488 = vmatprep.subr.mxu0 0.0
    %2489 = vmatpush1.msra.mxu0 0.0
    %2490 = vmatprep.subr.mxu0 0.0
    %2491 = vmatpush1.msra.mxu0 0.0
    %2492 = vmatprep.subr.mxu0 0.0
    %2493 = vmatpush1.msra.mxu0 0.0
    %2494 = vmatprep.subr.mxu0 0.0
    %2495 = vmatpush1.msra.mxu0 0.0
    %2496 = vmatprep.subr.mxu0 0.0
    %2497 = vmatpush1.msra.mxu0 0.0
    %2498 = vmatprep.subr.mxu0 0.0
    %2499 = vmatpush1.msra.mxu0 0.0
    %2500 = vmatprep.subr.mxu0 0.0
    %2501 = vmatpush1.msra.mxu0 0.0
    %2502 = vmatprep.subr.mxu0 0.0
    %2503 = vmatpush1.msra.mxu0 0.0
    %2504 = vmatprep.mubr.f32.mxu0 0.0
    %2505 = vmatmul.mubr.f32.gmra.mrb[0].mxu0 %v2136
    %v2506 = vpop.f32.mrb[0].mxu0
    %v2507 = vadd.f32 0.0, %v2506
    %v2508 = vpop.f32.mrb[0].mxu0
    %2509 = vdwg.mxu0
    %v2510 = vadd.f32 %v2437, %v2507
    %v2511 = vtanh.pop %v2510
    %s2512 = scalar_lea.vmem %s10, 640
    %v2513 = vld [vmem:[%s2512] sm:$0xff]
    %v2514 = vld [vmem:[%s2512 + $0x8] sm:$0xff]
    %v2515 = vld [vmem:[%s2512 + $0x10] sm:$0xff]
    %v2516 = vld [vmem:[%s2512 + $0x18] sm:$0xff]
    %v2517 = vld [vmem:[%s2512 + $0x20] sm:$0xff]
    %v2518 = vld [vmem:[%s2512 + $0x28] sm:$0xff]
    %v2519 = vld [vmem:[%s2512 + $0x30] sm:$0xff]
    %v2520 = vld [vmem:[%s2512 + $0x38] sm:$0xff]
    %v2521 = vld [vmem:[%s2512 + $0x40] sm:$0xff]
    %v2522 = vld [vmem:[%s2512 + $0x48] sm:$0xff]
    %v2523 = vld [vmem:[%s2512 + $0x50] sm:$0xff]
    %v2524 = vld [vmem:[%s2512 + $0x58] sm:$0xff]
    %v2525 = vld [vmem:[%s2512 + $0x60] sm:$0xff]
    %v2526 = vld [vmem:[%s2512 + $0x68] sm:$0xff]
    %v2527 = vld [vmem:[%s2512 + $0x70] sm:$0xff]
    %v2528 = vld [vmem:[%s2512 + $0x78] sm:$0xff]
    %2529 = vmatprep.subr.mxu0 0.0
    %2530 = vmatpush1.msra.mxu0 %v2513
    %2531 = vmatprep.subr.mxu0 0.0
    %2532 = vmatpush1.msra.mxu0 %v2514
    %2533 = vmatprep.subr.mxu0 0.0
    %2534 = vmatpush1.msra.mxu0 %v2515
    %2535 = vmatprep.subr.mxu0 0.0
    %2536 = vmatpush1.msra.mxu0 %v2516
    %2537 = vmatprep.subr.mxu0 0.0
    %2538 = vmatpush1.msra.mxu0 %v2517
    %2539 = vmatprep.subr.mxu0 0.0
    %2540 = vmatpush1.msra.mxu0 %v2518
    %2541 = vmatprep.subr.mxu0 0.0
    %2542 = vmatpush1.msra.mxu0 %v2519
    %2543 = vmatprep.subr.mxu0 0.0
    %2544 = vmatpush1.msra.mxu0 %v2520
    %2545 = vmatprep.subr.mxu0 0.0
    %2546 = vmatpush1.msra.mxu0 %v2521
    %2547 = vmatprep.subr.mxu0 0.0
    %2548 = vmatpush1.msra.mxu0 %v2522
    %2549 = vmatprep.subr.mxu0 0.0
    %2550 = vmatpush1.msra.mxu0 %v2523
    %2551 = vmatprep.subr.mxu0 0.0
    %2552 = vmatpush1.msra.mxu0 %v2524
    %2553 = vmatprep.subr.mxu0 0.0
    %2554 = vmatpush1.msra.mxu0 %v2525
    %2555 = vmatprep.subr.mxu0 0.0
    %2556 = vmatpush1.msra.mxu0 %v2526
    %2557 = vmatprep.subr.mxu0 0.0
    %2558 = vmatpush1.msra.mxu0 %v2527
    %2559 = vmatprep.subr.mxu0 0.0
    %2560 = vmatpush1.msra.mxu0 %v2528
    %2561 = vmatprep.subr.mxu0 0.0
    %2562 = vmatpush1.msra.mxu0 0.0
    %2563 = vmatprep.subr.mxu0 0.0
    %2564 = vmatpush1.msra.mxu0 0.0
    %2565 = vmatprep.subr.mxu0 0.0
    %2566 = vmatpush1.msra.mxu0 0.0
    %2567 = vmatprep.subr.mxu0 0.0
    %2568 = vmatpush1.msra.mxu0 0.0
    %2569 = vmatprep.subr.mxu0 0.0
    %2570 = vmatpush1.msra.mxu0 0.0
    %2571 = vmatprep.subr.mxu0 0.0
    %2572 = vmatpush1.msra.mxu0 0.0
    %2573 = vmatprep.subr.mxu0 0.0
    %2574 = vmatpush1.msra.mxu0 0.0
    %2575 = vmatprep.subr.mxu0 0.0
    %2576 = vmatpush1.msra.mxu0 0.0
    %2577 = vmatprep.subr.mxu0 0.0
    %2578 = vmatpush1.msra.mxu0 0.0
    %2579 = vmatprep.subr.mxu0 0.0
    %2580 = vmatpush1.msra.mxu0 0.0
    %2581 = vmatprep.subr.mxu0 0.0
    %2582 = vmatpush1.msra.mxu0 0.0
    %2583 = vmatprep.subr.mxu0 0.0
    %2584 = vmatpush1.msra.mxu0 0.0
    %2585 = vmatprep.subr.mxu0 0.0
    %2586 = vmatpush1.msra.mxu0 0.0
    %2587 = vmatprep.subr.mxu0 0.0
    %2588 = vmatpush1.msra.mxu0 0.0
    %2589 = vmatprep.subr.mxu0 0.0
    %2590 = vmatpush1.msra.mxu0 0.0
    %2591 = vmatprep.subr.mxu0 0.0
    %2592 = vmatpush1.msra.mxu0 0.0
    %2593 = vmatprep.mubr.f32.mxu0 0.0
    %2594 = vmatmul.mubr.f32.gmra.mrb[0].mxu0 %v2511
    %v2595 = vpop.f32.mrb[0].mxu0
    %v2596 = vadd.f32 0.0, %v2595
    %v2597 = vpop.f32.mrb[0].mxu0
    %2598 = vdwg.mxu0
    %v2599 = vadd.f32 %v2224, %v2596
    %v2600 = vmax.f32 %v2599, 0.0
    %vm2601 = vcmask 519168
    %v2602 = vsel %vm2601, %v2600, 0.0
    %v2603 = vrot.slane %v2602, 4
    %v2604 = vadd.f32 %v2602, %v2603
    %v2605 = vrot.slane %v2604, 2
    %v2606 = vadd.f32 %v2604, %v2605
    %v2607 = vrot.slane %v2606, 1
    %v2608 = vadd.f32 %v2606, %v2607
    %v2609 = vrcp.pop 4.0
    %v2610 = vmul.f32 %v2608, %v2609
    %v2611 = vsub.f32 %v2600, %v2610
    %v2612 = vmul.f32 %v2611, %v2611
    %v2613 = vsel %vm2601, %v2612, 0.0
    %v2614 = vrot.slane %v2613, 4
    %v2615 = vadd.f32 %v2613, %v2614
    %v2616 = vrot.slane %v2615, 2
    %v2617 = vadd.f32 %v2615, %v2616
    %v2618 = vrot.slane %v2617, 1
    %v2619 = vadd.f32 %v2617, %v2618
    %v2620 = vmul.f32 %v2619, %v2609
    %v2621 = vadd.f32 %v2620, 1e-05
    %v2622 = vrsqrt.pop %v2621
    %v2623 = vmul.f32 %v2611, %v2622
    %v2624 = vld [vmem:[%s14] sm:$0x1]
    %v2626 = vlaneseq
    %v2627 = vshrl.u32 %v2626, 7
    %v2628 = vsub.s32 0, %v2627
    %v2629 = vrot.slane %v2624, %v2628
    %v2631 = vmul.f32 %v2623, %v2629
    %v2632 = vld [vmem:[%s15] sm:$0x1]
    %v2634 = vlaneseq
    %v2635 = vshrl.u32 %v2634, 7
    %v2636 = vsub.s32 0, %v2635
    %v2637 = vrot.slane %v2632, %v2636
    %v2639 = vadd.f32 %v2631, %v2637
    %2640 = vst.msk [vmem:[#allocation2] sm:$0xf] %vm2601, %v2639
    // Predicated region
    $region66: #{frontal_rnn_forward.1} parent=1 // pred_check
      _
    $region67: #{frontal_rnn_forward.1} parent=1 // pred_check_branch
      %2642 = sbr.rel (0) target = $region69
    $region68: #{frontal_rnn_forward.1} parent=1 // pred_region
      %s2644 = ssub.s32 64, 64
      %2645 = vsyncadd [#allocation3], %s2644
      %s2647 = sshll.u32 [#allocation2], 4
      %s2648 = int_to_ptr.vmem [resolvable:$true] %s2647
      %2650 = dma.vmem_to_hbm [thread:$0]  %s2648, 64, %s16, [#allocation3]
    $region69: #{frontal_rnn_forward.1} parent=1 // pred_fallthru
      _
    // Predicated region
    $region70: #{frontal_rnn_forward.1} parent=1 // pred_check
      _
    $region71: #{frontal_rnn_forward.1} parent=1 // pred_check_branch
      %2652 = sbr.rel (0) target = $region73
    $region72: #{frontal_rnn_forward.1} parent=1 // pred_region
      %2653 = dma.done [#allocation3], 64
    $region73: #{frontal_rnn_forward.1} parent=1 // pred_fallthru
      _
    %2654 = vsyncpa [#allocation3], 1

</llo_original>
